<compile_context>
chip_gen: v7x
topology: tpu7x:2x2x1
jax: 0.10.0
libtpu: 0.0.40
codegen_flags: <defaults>
</compile_context>

<pallas_src>
import jax
import jax.numpy as jnp
from jax.experimental import pallas as pl
from jax.experimental.pallas import tpu as pltpu


def basic_block_kernel(x_ref, w1_ref, b1_ref, w2_ref, b2_ref, out_ref):
    # x_ref : (H+4, W+2, Cp) bf16 — padded image (2 zero rows top/bottom for the
    #         conv1+conv2 halo, 1 zero col left/right), channel-padded; resident
    #         per batch element (index map constant over the row-tile axis).
    # w*_ref: (9*Cp, Cp) bf16 — 3x3 taps packed on K, BN scale pre-folded.
    # b*_ref: (1, Cp)    f32  — folded BatchNorm bias.
    # out_ref: (TH, W, Cp) bf16 — one row tile of the output.
    TH, W, Cp = out_ref.shape
    H = x_ref.shape[0] - 4
    TH2 = TH + 2                      # conv1 rows needed for this tile (+1 halo each side)

    t = pl.program_id(1)
    row0 = pl.multiple_of(t * TH, TH)

    # Input slab: padded rows [row0, row0+TH+4) == x rows [row0-2, row0+TH+2).
    xs = x_ref[pl.ds(row0, TH + 4)]                        # (TH+4, W+2, Cp) bf16

    # ---- conv1 (+ folded bn1 scale): ONE MXU contraction, K = 9*Cp ----
    p1 = jnp.concatenate(
        [xs[dh:dh + TH2, dw:dw + W, :] for dh in range(3) for dw in range(3)],
        axis=-1).reshape(TH2 * W, 9 * Cp)                  # im2col patch, built once
    a1 = jnp.dot(p1, w1_ref[...], preferred_element_type=jnp.float32)
    h1 = jnp.maximum(a1 + b1_ref[...], 0.0).reshape(TH2, W, Cp)   # bias + relu1 (f32)

    # Intermediate rows outside [0, H) are conv2's zero padding, not bn1(conv1(pad)).
    m = row0 - 1 + jax.lax.broadcasted_iota(jnp.int32, (TH2, 1, 1), 0)
    h1 = jnp.where((m >= 0) & (m < H), h1, 0.0).astype(jnp.bfloat16)

    # Left/right zero columns so conv2 sees pad=1 on W.
    zc = jnp.zeros((TH2, 1, Cp), jnp.bfloat16)
    mid = jnp.concatenate([zc, h1, zc], axis=1)            # (TH2, W+2, Cp) bf16

    # ---- conv2 (+ folded bn2 scale): ONE MXU contraction, K = 9*Cp ----
    p2 = jnp.concatenate(
        [mid[dh:dh + TH, dw:dw + W, :] for dh in range(3) for dw in range(3)],
        axis=-1).reshape(TH * W, 9 * Cp)
    a2 = jnp.dot(p2, w2_ref[...], preferred_element_type=jnp.float32)

    # bias + residual (read from the resident input slab, no extra HBM DMA) + relu2.
    ident = xs[2:2 + TH, 1:1 + W, :].astype(jnp.float32).reshape(TH * W, Cp)
    out = jnp.maximum(a2 + b2_ref[...] + ident, 0.0)
    out_ref[...] = out.reshape(TH, W, Cp).astype(out_ref.dtype)


def _pick_row_tile(h, target=8):
    for th in range(min(target, h), 0, -1):
        if h % th == 0:
            return th
    return h


def _vmem_limit_bytes():
    # Larger scoped VMEM on v5e/v6e (128 MiB physical); headroom on v7x (64 MiB).
    try:
        kind = jax.devices()[0].device_kind.lower()
    except Exception:
        kind = ""
    if "v5" in kind or "v6" in kind:
        return 96 * 1024 * 1024
    return 48 * 1024 * 1024


def basic_block_pallas(x_nchw, w1_oihw, g1, be1, rm1, rv1,
                       w2_oihw, g2, be2, rm2, rv2, eps=1e-5):
    """x_nchw: (N, C, H, W) float32. Returns (N, C, H, W) float32."""
    N, C, H, W = x_nchw.shape
    Cout = w1_oihw.shape[0]
    assert Cout == C and w2_oihw.shape[0] == Cout, \
        "BasicBlock kernel assumes stride=1, downsample=None (inplanes == planes)"

    LANE = 128
    Cp = ((C + LANE - 1) // LANE) * LANE   # channel pad to lane width
    TH = _pick_row_tile(H)                 # output rows per grid step
    n_tiles = H // TH

    # Layout glue: NCHW (PyTorch) -> NHWC, spatial pad (2 rows / 1 col), bf16.
    x_nhwc = jnp.transpose(x_nchw, (0, 2, 3, 1)).astype(jnp.float32)
    x_pad = jnp.pad(x_nhwc, ((0, 0), (2, 2), (1, 1), (0, Cp - C))).astype(jnp.bfloat16)

    def fold_bn(g, be, rm, rv):
        s = (g / jnp.sqrt(rv + eps)).astype(jnp.float32)
        b = (be - rm * s).astype(jnp.float32)
        return s, jnp.pad(b, (0, Cp - Cout)).reshape(1, Cp)

    s1, b1 = fold_bn(g1, be1, rm1, rv1)
    s2, b2 = fold_bn(g2, be2, rm2, rv2)

    def prep_w(w_oihw, scale):
        # OIHW -> HWIO, fold the BN scale into the output channels, pad channels,
        # pack the 3x3 taps onto the contraction axis: (9*Cp, Cp) bf16.
        w = jnp.transpose(w_oihw, (2, 3, 1, 0)).astype(jnp.float32)
        w = w * scale[None, None, None, :]
        w = jnp.pad(w, ((0, 0), (0, 0), (0, Cp - C), (0, Cp - Cout)))
        return w.reshape(9 * Cp, Cp).astype(jnp.bfloat16)

    w1 = prep_w(w1_oihw, s1)
    w2 = prep_w(w2_oihw, s2)

    def run(single_buffer_consts):
        def const_spec(shape):
            idx = lambda n, t: (0,) * len(shape)
            if single_buffer_consts:
                # Grid-invariant operands: no double buffering needed.
                return pl.BlockSpec(shape, idx, pipeline_mode=pl.Buffered(1))
            return pl.BlockSpec(shape, idx)

        return pl.pallas_call(
            basic_block_kernel,
            out_shape=jax.ShapeDtypeStruct((N, H, W, Cp), jnp.bfloat16),
            grid=(N, n_tiles),
            in_specs=[
                pl.BlockSpec((None, H + 4, W + 2, Cp), lambda n, t: (n, 0, 0, 0)),
                const_spec((9 * Cp, Cp)),   # w1 (BN1 scale folded)
                const_spec((1, Cp)),        # b1
                const_spec((9 * Cp, Cp)),   # w2 (BN2 scale folded)
                const_spec((1, Cp)),        # b2
            ],
            out_specs=pl.BlockSpec((None, TH, W, Cp), lambda n, t: (n, t, 0, 0)),
            compiler_params=pltpu.CompilerParams(
                dimension_semantics=("parallel", "parallel"),
                vmem_limit_bytes=_vmem_limit_bytes(),
            ),
        )(x_pad, w1, b1, w2, b2)

    try:
        out_nhwc = jax.block_until_ready(run(True))
    except Exception:
        # Fallback for JAX versions without BlockSpec.pipeline_mode / pl.Buffered.
        out_nhwc = run(False)

    # NHWC(+channel pad, bf16) -> NCHW f32, drop padded channels.
    return jnp.transpose(out_nhwc[..., :C].astype(jnp.float32), (0, 3, 1, 2))


def basic_block_reference(x, w1, g1, be1, rm1, rv1, w2, g2, be2, rm2, rv2, eps=1e-5):
    """Plain-JAX f32 reference (NCHW), same semantics as the PyTorch module in eval mode."""
    def conv(inp, w):
        return jax.lax.conv_general_dilated(
            inp, w, window_strides=(1, 1), padding=((1, 1), (1, 1)),
            dimension_numbers=('NCHW', 'OIHW', 'NCHW'))

    def bn(inp, g, be, rm, rv):
        s = g / jnp.sqrt(rv + eps)
        return inp * s[None, :, None, None] + (be - rm * s)[None, :, None, None]

    out = jnp.maximum(bn(conv(x, w1), g1, be1, rm1, rv1), 0.0)
    out = bn(conv(out, w2), g2, be2, rm2, rv2)
    return jnp.maximum(out + x, 0.0)


if __name__ == "__main__":
    # Small shapes: batch=2, inplanes=planes=4, spatial=16x16
    N, C, H, W = 2, 4, 16, 16
    key = jax.random.PRNGKey(0)
    ks = jax.random.split(key, 12)

    x = jax.random.normal(ks[0], (N, C, H, W), jnp.float32)

    # conv weights (PyTorch OIHW), deterministic init
    w1 = jax.random.normal(ks[1], (C, C, 3, 3), jnp.float32) * 0.2
    w2 = jax.random.normal(ks[2], (C, C, 3, 3), jnp.float32) * 0.2

    # BatchNorm params + running stats (eval-mode semantics)
    g1 = 1.0 + 0.1 * jax.random.normal(ks[3], (C,), jnp.float32)
    be1 = 0.1 * jax.random.normal(ks[4], (C,), jnp.float32)
    rm1 = 0.1 * jax.random.normal(ks[5], (C,), jnp.float32)
    rv1 = 1.0 + 0.1 * jnp.abs(jax.random.normal(ks[6], (C,), jnp.float32))
    g2 = 1.0 + 0.1 * jax.random.normal(ks[7], (C,), jnp.float32)
    be2 = 0.1 * jax.random.normal(ks[8], (C,), jnp.float32)
    rm2 = 0.1 * jax.random.normal(ks[9], (C,), jnp.float32)
    rv2 = 1.0 + 0.1 * jnp.abs(jax.random.normal(ks[10], (C,), jnp.float32))

    out = basic_block_pallas(x, w1, g1, be1, rm1, rv1, w2, g2, be2, rm2, rv2)
    out = jax.block_until_ready(out)

    ref = basic_block_reference(x, w1, g1, be1, rm1, rv1, w2, g2, be2, rm2, rv2)
    assert out.shape == (N, C, H, W)
    # bf16 activations/weights/output + bf16 residual -> mixed-precision tolerance
    max_err = float(jnp.max(jnp.abs(out - ref)))
    assert jnp.allclose(out, ref, atol=1e-1, rtol=1e-1), \
        "mismatch vs reference: max abs err = %.4e" % max_err

    print("KERNEL_OK")
</pallas_src>

<mosaic_0001>
module attributes {stable_mosaic.version = 11 : i64} {
  func.func @basic_block_kernel(%arg0: i32, %arg1: i32, %arg2: memref<1x20x18x128xbf16, #tpu.memory_space<vmem>>, %arg3: memref<1152x128xbf16, #tpu.memory_space<vmem>>, %arg4: memref<1x128xf32, #tpu.memory_space<vmem>>, %arg5: memref<1152x128xbf16, #tpu.memory_space<vmem>>, %arg6: memref<1x128xf32, #tpu.memory_space<vmem>>, %arg7: memref<1x8x16x128xbf16, #tpu.memory_space<vmem>>) attributes {dimension_semantics = [#tpu.dimension_semantics<parallel>, #tpu.dimension_semantics<parallel>], iteration_bounds = array<i64: 2, 2>, scalar_prefetch = 0 : i64, scratch_operands = 0 : i64, tpu.core_type = #tpu.core_type<tc>, window_params = [{transform_indices = @transform_0, window_bounds = array<i64: 1, 20, 18, 128>}, {pipeline_mode = #tpu.pipeline_mode<synchronous>, transform_indices = @transform_1, window_bounds = array<i64: 1152, 128>}, {pipeline_mode = #tpu.pipeline_mode<synchronous>, transform_indices = @transform_2, window_bounds = array<i64: 1, 128>}, {pipeline_mode = #tpu.pipeline_mode<synchronous>, transform_indices = @transform_3, window_bounds = array<i64: 1152, 128>}, {pipeline_mode = #tpu.pipeline_mode<synchronous>, transform_indices = @transform_4, window_bounds = array<i64: 1, 128>}, {transform_indices = @transform_5, window_bounds = array<i64: 1, 8, 16, 128>}]} {
    %c8_i32 = arith.constant 8 : i32
    %0 = arith.muli %arg1, %c8_i32 : i32
    %1 = tpu.assume_multiple %0, 8 : i32
    %c0 = arith.constant 0 : index
    %2 = arith.index_cast %1 : i32 to index
    %c0_0 = arith.constant 0 : index
    %c0_1 = arith.constant 0 : index
    %3 = vector.load %arg2[%c0, %2, %c0_0, %c0_1] : memref<1x20x18x128xbf16, #tpu.memory_space<vmem>>, vector<1x12x18x128xbf16>
    %4 = vector.shape_cast %3 : vector<1x12x18x128xbf16> to vector<12x18x128xbf16>
    %5 = vector.extract_strided_slice %4 {offsets = [0, 0, 0], sizes = [10, 16, 128], strides = [1, 1, 1]} : vector<12x18x128xbf16> to vector<10x16x128xbf16>
    %6 = vector.extract_strided_slice %4 {offsets = [0, 1, 0], sizes = [10, 16, 128], strides = [1, 1, 1]} : vector<12x18x128xbf16> to vector<10x16x128xbf16>
    %7 = vector.extract_strided_slice %4 {offsets = [0, 2, 0], sizes = [10, 16, 128], strides = [1, 1, 1]} : vector<12x18x128xbf16> to vector<10x16x128xbf16>
    %8 = vector.extract_strided_slice %4 {offsets = [1, 0, 0], sizes = [10, 16, 128], strides = [1, 1, 1]} : vector<12x18x128xbf16> to vector<10x16x128xbf16>
    %9 = vector.extract_strided_slice %4 {offsets = [1, 1, 0], sizes = [10, 16, 128], strides = [1, 1, 1]} : vector<12x18x128xbf16> to vector<10x16x128xbf16>
    %10 = vector.extract_strided_slice %4 {offsets = [1, 2, 0], sizes = [10, 16, 128], strides = [1, 1, 1]} : vector<12x18x128xbf16> to vector<10x16x128xbf16>
    %11 = vector.extract_strided_slice %4 {offsets = [2, 0, 0], sizes = [10, 16, 128], strides = [1, 1, 1]} : vector<12x18x128xbf16> to vector<10x16x128xbf16>
    %12 = vector.extract_strided_slice %4 {offsets = [2, 1, 0], sizes = [10, 16, 128], strides = [1, 1, 1]} : vector<12x18x128xbf16> to vector<10x16x128xbf16>
    %13 = vector.extract_strided_slice %4 {offsets = [2, 2, 0], sizes = [10, 16, 128], strides = [1, 1, 1]} : vector<12x18x128xbf16> to vector<10x16x128xbf16>
    %14 = tpu.concatenate %5, %6, %7, %8, %9, %10, %11, %12, %13 in 2 : vector<10x16x128xbf16>, vector<10x16x128xbf16>, vector<10x16x128xbf16>, vector<10x16x128xbf16>, vector<10x16x128xbf16>, vector<10x16x128xbf16>, vector<10x16x128xbf16>, vector<10x16x128xbf16>, vector<10x16x128xbf16> -> vector<10x16x1152xbf16>
    %15 = vector.shape_cast %14 : vector<10x16x1152xbf16> to vector<160x1152xbf16>
    %c0_2 = arith.constant 0 : index
    %c0_3 = arith.constant 0 : index
    %16 = vector.load %arg3[%c0_2, %c0_3] : memref<1152x128xbf16, #tpu.memory_space<vmem>>, vector<1152x128xbf16>
    %cst = arith.constant dense<0.000000e+00> : vector<160x128xf32>
    %17 = tpu.matmul %15, %16, %cst {dimension_numbers = #tpu.dot_dimension_numbers<[1], [0], [0], [1], [0, 0, 1, 1], [], []>} : vector<160x1152xbf16>, vector<1152x128xbf16>, vector<160x128xf32> -> vector<160x128xf32>
    %c0_4 = arith.constant 0 : index
    %c0_5 = arith.constant 0 : index
    %18 = vector.load %arg4[%c0_4, %c0_5] : memref<1x128xf32, #tpu.memory_space<vmem>>, vector<1x128xf32>
    %19 = vector.broadcast %18 : vector<1x128xf32> to vector<160x128xf32>
    %20 = arith.addf %17, %19 : vector<160x128xf32>
    %cst_6 = arith.constant 0.000000e+00 : f32
    %21 = vector.broadcast %cst_6 : f32 to vector<160x128xf32>
    %22 = arith.maximumf %20, %21 : vector<160x128xf32>
    %23 = vector.shape_cast %22 : vector<160x128xf32> to vector<10x16x128xf32>
    %c1_i32 = arith.constant 1 : i32
    %24 = arith.subi %1, %c1_i32 : i32
    %25 = tpu.iota {dimensions = array<i32: 0>} : vector<10x1x1xi32>
    %26 = vector.broadcast %24 : i32 to vector<10x1x1xi32>
    %27 = arith.addi %26, %25 : vector<10x1x1xi32>
    %c0_i32 = arith.constant 0 : i32
    %28 = vector.broadcast %c0_i32 : i32 to vector<10x1x1xi32>
    %29 = arith.cmpi sge, %27, %28 : vector<10x1x1xi32>
    %c16_i32 = arith.constant 16 : i32
    %30 = vector.broadcast %c16_i32 : i32 to vector<10x1x1xi32>
    %31 = arith.cmpi slt, %27, %30 : vector<10x1x1xi32>
    %32 = arith.andi %29, %31 : vector<10x1x1xi1>
    %cst_7 = arith.constant 0.000000e+00 : f32
    %33 = vector.shape_cast %32 : vector<10x1x1xi1> to vector<10x1x1xi1>
    %34 = vector.broadcast %33 : vector<10x1x1xi1> to vector<10x16x128xi1>
    %35 = vector.broadcast %cst_7 : f32 to vector<10x16x128xf32>
    %36 = arith.select %34, %23, %35 : vector<10x16x128xi1>, vector<10x16x128xf32>
    %37 = arith.truncf %36 : vector<10x16x128xf32> to vector<10x16x128xbf16>
    %cst_8 = arith.constant 0.000000e+00 : bf16
    %38 = vector.broadcast %cst_8 : bf16 to vector<10x1x128xbf16>
    %39 = tpu.concatenate %38, %37, %38 in 1 : vector<10x1x128xbf16>, vector<10x16x128xbf16>, vector<10x1x128xbf16> -> vector<10x18x128xbf16>
    %40 = vector.extract_strided_slice %39 {offsets = [0, 0, 0], sizes = [8, 16, 128], strides = [1, 1, 1]} : vector<10x18x128xbf16> to vector<8x16x128xbf16>
    %41 = vector.extract_strided_slice %39 {offsets = [0, 1, 0], sizes = [8, 16, 128], strides = [1, 1, 1]} : vector<10x18x128xbf16> to vector<8x16x128xbf16>
    %42 = vector.extract_strided_slice %39 {offsets = [0, 2, 0], sizes = [8, 16, 128], strides = [1, 1, 1]} : vector<10x18x128xbf16> to vector<8x16x128xbf16>
    %43 = vector.extract_strided_slice %39 {offsets = [1, 0, 0], sizes = [8, 16, 128], strides = [1, 1, 1]} : vector<10x18x128xbf16> to vector<8x16x128xbf16>
    %44 = vector.extract_strided_slice %39 {offsets = [1, 1, 0], sizes = [8, 16, 128], strides = [1, 1, 1]} : vector<10x18x128xbf16> to vector<8x16x128xbf16>
    %45 = vector.extract_strided_slice %39 {offsets = [1, 2, 0], sizes = [8, 16, 128], strides = [1, 1, 1]} : vector<10x18x128xbf16> to vector<8x16x128xbf16>
    %46 = vector.extract_strided_slice %39 {offsets = [2, 0, 0], sizes = [8, 16, 128], strides = [1, 1, 1]} : vector<10x18x128xbf16> to vector<8x16x128xbf16>
    %47 = vector.extract_strided_slice %39 {offsets = [2, 1, 0], sizes = [8, 16, 128], strides = [1, 1, 1]} : vector<10x18x128xbf16> to vector<8x16x128xbf16>
    %48 = vector.extract_strided_slice %39 {offsets = [2, 2, 0], sizes = [8, 16, 128], strides = [1, 1, 1]} : vector<10x18x128xbf16> to vector<8x16x128xbf16>
    %49 = tpu.concatenate %40, %41, %42, %43, %44, %45, %46, %47, %48 in 2 : vector<8x16x128xbf16>, vector<8x16x128xbf16>, vector<8x16x128xbf16>, vector<8x16x128xbf16>, vector<8x16x128xbf16>, vector<8x16x128xbf16>, vector<8x16x128xbf16>, vector<8x16x128xbf16>, vector<8x16x128xbf16> -> vector<8x16x1152xbf16>
    %50 = vector.shape_cast %49 : vector<8x16x1152xbf16> to vector<128x1152xbf16>
    %c0_9 = arith.constant 0 : index
    %c0_10 = arith.constant 0 : index
    %51 = vector.load %arg5[%c0_9, %c0_10] : memref<1152x128xbf16, #tpu.memory_space<vmem>>, vector<1152x128xbf16>
    %cst_11 = arith.constant dense<0.000000e+00> : vector<128x128xf32>
    %52 = tpu.matmul %50, %51, %cst_11 {dimension_numbers = #tpu.dot_dimension_numbers<[1], [0], [0], [1], [0, 0, 1, 1], [], []>} : vector<128x1152xbf16>, vector<1152x128xbf16>, vector<128x128xf32> -> vector<128x128xf32>
    %53 = vector.extract_strided_slice %4 {offsets = [2, 1, 0], sizes = [8, 16, 128], strides = [1, 1, 1]} : vector<12x18x128xbf16> to vector<8x16x128xbf16>
    %54 = arith.extf %53 : vector<8x16x128xbf16> to vector<8x16x128xf32>
    %55 = vector.shape_cast %54 : vector<8x16x128xf32> to vector<128x128xf32>
    %c0_12 = arith.constant 0 : index
    %c0_13 = arith.constant 0 : index
    %56 = vector.load %arg6[%c0_12, %c0_13] : memref<1x128xf32, #tpu.memory_space<vmem>>, vector<1x128xf32>
    %57 = vector.broadcast %56 : vector<1x128xf32> to vector<128x128xf32>
    %58 = arith.addf %52, %57 : vector<128x128xf32>
    %59 = arith.addf %58, %55 : vector<128x128xf32>
    %cst_14 = arith.constant 0.000000e+00 : f32
    %60 = vector.broadcast %cst_14 : f32 to vector<128x128xf32>
    %61 = arith.maximumf %59, %60 : vector<128x128xf32>
    %62 = vector.shape_cast %61 : vector<128x128xf32> to vector<8x16x128xf32>
    %63 = arith.truncf %62 : vector<8x16x128xf32> to vector<8x16x128xbf16>
    %c0_15 = arith.constant 0 : index
    %c0_16 = arith.constant 0 : index
    %c0_17 = arith.constant 0 : index
    %c0_18 = arith.constant 0 : index
    %64 = vector.load %arg7[%c0_15, %c0_16, %c0_17, %c0_18] : memref<1x8x16x128xbf16, #tpu.memory_space<vmem>>, vector<1x8x16x128xbf16>
    %65 = vector.shape_cast %64 : vector<1x8x16x128xbf16> to vector<8x16x128xbf16>
    %66 = vector.shape_cast %63 : vector<8x16x128xbf16> to vector<1x8x16x128xbf16>
    tpu.vector_store %arg7[%c0_15, %c0_16, %c0_17, %c0_18], %66 {strides = array<i32>} : memref<1x8x16x128xbf16, #tpu.memory_space<vmem>>, vector<1x8x16x128xbf16>,
    return
  }
  func.func @transform_0(%arg0: i32, %arg1: i32) -> (i32, i32, i32, i32) {
    %c0_i32 = arith.constant 0 : i32
    %c0_i32_0 = arith.constant 0 : i32
    %c0_i32_1 = arith.constant 0 : i32
    %c0_i32_2 = arith.constant 0 : i32
    return %arg0, %c0_i32, %c0_i32_0, %c0_i32_1 : i32, i32, i32, i32
  }
  func.func @transform_1(%arg0: i32, %arg1: i32) -> (i32, i32) {
    %c0_i32 = arith.constant 0 : i32
    %c0_i32_0 = arith.constant 0 : i32
    %c0_i32_1 = arith.constant 0 : i32
    return %c0_i32, %c0_i32_0 : i32, i32
  }
  func.func @transform_2(%arg0: i32, %arg1: i32) -> (i32, i32) {
    %c0_i32 = arith.constant 0 : i32
    %c0_i32_0 = arith.constant 0 : i32
    %c0_i32_1 = arith.constant 0 : i32
    return %c0_i32, %c0_i32_0 : i32, i32
  }
  func.func @transform_3(%arg0: i32, %arg1: i32) -> (i32, i32) {
    %c0_i32 = arith.constant 0 : i32
    %c0_i32_0 = arith.constant 0 : i32
    %c0_i32_1 = arith.constant 0 : i32
    return %c0_i32, %c0_i32_0 : i32, i32
  }
  func.func @transform_4(%arg0: i32, %arg1: i32) -> (i32, i32) {
    %c0_i32 = arith.constant 0 : i32
    %c0_i32_0 = arith.constant 0 : i32
    %c0_i32_1 = arith.constant 0 : i32
    return %c0_i32, %c0_i32_0 : i32, i32
  }
  func.func @transform_5(%arg0: i32, %arg1: i32) -> (i32, i32, i32, i32) {
    %c0_i32 = arith.constant 0 : i32
    %c0_i32_0 = arith.constant 0 : i32
    %c0_i32_1 = arith.constant 0 : i32
    return %arg0, %arg1, %c0_i32, %c0_i32_0 : i32, i32, i32, i32
  }
}

module attributes {stable_mosaic.version = 11 : i64} {
  func.func @basic_block_kernel(%arg0: i32, %arg1: i32, %arg2: memref<1x20x18x128xbf16, #tpu.memory_space<vmem>>, %arg3: memref<1152x128xbf16, #tpu.memory_space<vmem>>, %arg4: memref<1x128xf32, #tpu.memory_space<vmem>>, %arg5: memref<1152x128xbf16, #tpu.memory_space<vmem>>, %arg6: memref<1x128xf32, #tpu.memory_space<vmem>>, %arg7: memref<1x8x16x128xbf16, #tpu.memory_space<vmem>>) attributes {dimension_semantics = [#tpu.dimension_semantics<parallel>, #tpu.dimension_semantics<parallel>], iteration_bounds = array<i64: 2, 2>, scalar_prefetch = 0 : i64, scratch_operands = 0 : i64, tpu.core_type = #tpu.core_type<tc>, window_params = [{transform_indices = @transform_0, window_bounds = array<i64: 1, 20, 18, 128>}, {pipeline_mode = #tpu.pipeline_mode<synchronous>, transform_indices = @transform_1, window_bounds = array<i64: 1152, 128>}, {pipeline_mode = #tpu.pipeline_mode<synchronous>, transform_indices = @transform_2, window_bounds = array<i64: 1, 128>}, {pipeline_mode = #tpu.pipeline_mode<synchronous>, transform_indices = @transform_3, window_bounds = array<i64: 1152, 128>}, {pipeline_mode = #tpu.pipeline_mode<synchronous>, transform_indices = @transform_4, window_bounds = array<i64: 1, 128>}, {transform_indices = @transform_5, window_bounds = array<i64: 1, 8, 16, 128>}]} {
    %c8_i32 = arith.constant 8 : i32
    %0 = arith.muli %arg1, %c8_i32 : i32
    %1 = tpu.assume_multiple %0, 8 : i32
    %c0 = arith.constant 0 : index
    %2 = arith.index_cast %1 : i32 to index
    %c0_0 = arith.constant 0 : index
    %c0_1 = arith.constant 0 : index
    %3 = vector.load %arg2[%c0, %2, %c0_0, %c0_1] : memref<1x20x18x128xbf16, #tpu.memory_space<vmem>>, vector<1x12x18x128xbf16>
    %4 = vector.shape_cast %3 : vector<1x12x18x128xbf16> to vector<12x18x128xbf16>
    %5 = vector.extract_strided_slice %4 {offsets = [0, 0, 0], sizes = [10, 16, 128], strides = [1, 1, 1]} : vector<12x18x128xbf16> to vector<10x16x128xbf16>
    %6 = vector.extract_strided_slice %4 {offsets = [0, 1, 0], sizes = [10, 16, 128], strides = [1, 1, 1]} : vector<12x18x128xbf16> to vector<10x16x128xbf16>
    %7 = vector.extract_strided_slice %4 {offsets = [0, 2, 0], sizes = [10, 16, 128], strides = [1, 1, 1]} : vector<12x18x128xbf16> to vector<10x16x128xbf16>
    %8 = vector.extract_strided_slice %4 {offsets = [1, 0, 0], sizes = [10, 16, 128], strides = [1, 1, 1]} : vector<12x18x128xbf16> to vector<10x16x128xbf16>
    %9 = vector.extract_strided_slice %4 {offsets = [1, 1, 0], sizes = [10, 16, 128], strides = [1, 1, 1]} : vector<12x18x128xbf16> to vector<10x16x128xbf16>
    %10 = vector.extract_strided_slice %4 {offsets = [1, 2, 0], sizes = [10, 16, 128], strides = [1, 1, 1]} : vector<12x18x128xbf16> to vector<10x16x128xbf16>
    %11 = vector.extract_strided_slice %4 {offsets = [2, 0, 0], sizes = [10, 16, 128], strides = [1, 1, 1]} : vector<12x18x128xbf16> to vector<10x16x128xbf16>
    %12 = vector.extract_strided_slice %4 {offsets = [2, 1, 0], sizes = [10, 16, 128], strides = [1, 1, 1]} : vector<12x18x128xbf16> to vector<10x16x128xbf16>
    %13 = vector.extract_strided_slice %4 {offsets = [2, 2, 0], sizes = [10, 16, 128], strides = [1, 1, 1]} : vector<12x18x128xbf16> to vector<10x16x128xbf16>
    %14 = tpu.concatenate %5, %6, %7, %8, %9, %10, %11, %12, %13 in 2 : vector<10x16x128xbf16>, vector<10x16x128xbf16>, vector<10x16x128xbf16>, vector<10x16x128xbf16>, vector<10x16x128xbf16>, vector<10x16x128xbf16>, vector<10x16x128xbf16>, vector<10x16x128xbf16>, vector<10x16x128xbf16> -> vector<10x16x1152xbf16>
    %15 = vector.shape_cast %14 : vector<10x16x1152xbf16> to vector<160x1152xbf16>
    %c0_2 = arith.constant 0 : index
    %c0_3 = arith.constant 0 : index
    %16 = vector.load %arg3[%c0_2, %c0_3] : memref<1152x128xbf16, #tpu.memory_space<vmem>>, vector<1152x128xbf16>
    %cst = arith.constant dense<0.000000e+00> : vector<160x128xf32>
    %17 = tpu.matmul %15, %16, %cst {dimension_numbers = #tpu.dot_dimension_numbers<[1], [0], [0], [1], [0, 0, 1, 1], [], []>} : vector<160x1152xbf16>, vector<1152x128xbf16>, vector<160x128xf32> -> vector<160x128xf32>
    %c0_4 = arith.constant 0 : index
    %c0_5 = arith.constant 0 : index
    %18 = vector.load %arg4[%c0_4, %c0_5] : memref<1x128xf32, #tpu.memory_space<vmem>>, vector<1x128xf32>
    %19 = vector.broadcast %18 : vector<1x128xf32> to vector<160x128xf32>
    %20 = arith.addf %17, %19 : vector<160x128xf32>
    %cst_6 = arith.constant 0.000000e+00 : f32
    %21 = vector.broadcast %cst_6 : f32 to vector<160x128xf32>
    %22 = arith.maximumf %20, %21 : vector<160x128xf32>
    %23 = vector.shape_cast %22 : vector<160x128xf32> to vector<10x16x128xf32>
    %c1_i32 = arith.constant 1 : i32
    %24 = arith.subi %1, %c1_i32 : i32
    %25 = tpu.iota {dimensions = array<i32: 0>} : vector<10x1x1xi32>
    %26 = vector.broadcast %24 : i32 to vector<10x1x1xi32>
    %27 = arith.addi %26, %25 : vector<10x1x1xi32>
    %c0_i32 = arith.constant 0 : i32
    %28 = vector.broadcast %c0_i32 : i32 to vector<10x1x1xi32>
    %29 = arith.cmpi sge, %27, %28 : vector<10x1x1xi32>
    %c16_i32 = arith.constant 16 : i32
    %30 = vector.broadcast %c16_i32 : i32 to vector<10x1x1xi32>
    %31 = arith.cmpi slt, %27, %30 : vector<10x1x1xi32>
    %32 = arith.andi %29, %31 : vector<10x1x1xi1>
    %cst_7 = arith.constant 0.000000e+00 : f32
    %33 = vector.shape_cast %32 : vector<10x1x1xi1> to vector<10x1x1xi1>
    %34 = vector.broadcast %33 : vector<10x1x1xi1> to vector<10x16x128xi1>
    %35 = vector.broadcast %cst_7 : f32 to vector<10x16x128xf32>
    %36 = arith.select %34, %23, %35 : vector<10x16x128xi1>, vector<10x16x128xf32>
    %37 = arith.truncf %36 : vector<10x16x128xf32> to vector<10x16x128xbf16>
    %cst_8 = arith.constant 0.000000e+00 : bf16
    %38 = vector.broadcast %cst_8 : bf16 to vector<10x1x128xbf16>
    %39 = tpu.concatenate %38, %37, %38 in 1 : vector<10x1x128xbf16>, vector<10x16x128xbf16>, vector<10x1x128xbf16> -> vector<10x18x128xbf16>
    %40 = vector.extract_strided_slice %39 {offsets = [0, 0, 0], sizes = [8, 16, 128], strides = [1, 1, 1]} : vector<10x18x128xbf16> to vector<8x16x128xbf16>
    %41 = vector.extract_strided_slice %39 {offsets = [0, 1, 0], sizes = [8, 16, 128], strides = [1, 1, 1]} : vector<10x18x128xbf16> to vector<8x16x128xbf16>
    %42 = vector.extract_strided_slice %39 {offsets = [0, 2, 0], sizes = [8, 16, 128], strides = [1, 1, 1]} : vector<10x18x128xbf16> to vector<8x16x128xbf16>
    %43 = vector.extract_strided_slice %39 {offsets = [1, 0, 0], sizes = [8, 16, 128], strides = [1, 1, 1]} : vector<10x18x128xbf16> to vector<8x16x128xbf16>
    %44 = vector.extract_strided_slice %39 {offsets = [1, 1, 0], sizes = [8, 16, 128], strides = [1, 1, 1]} : vector<10x18x128xbf16> to vector<8x16x128xbf16>
    %45 = vector.extract_strided_slice %39 {offsets = [1, 2, 0], sizes = [8, 16, 128], strides = [1, 1, 1]} : vector<10x18x128xbf16> to vector<8x16x128xbf16>
    %46 = vector.extract_strided_slice %39 {offsets = [2, 0, 0], sizes = [8, 16, 128], strides = [1, 1, 1]} : vector<10x18x128xbf16> to vector<8x16x128xbf16>
    %47 = vector.extract_strided_slice %39 {offsets = [2, 1, 0], sizes = [8, 16, 128], strides = [1, 1, 1]} : vector<10x18x128xbf16> to vector<8x16x128xbf16>
    %48 = vector.extract_strided_slice %39 {offsets = [2, 2, 0], sizes = [8, 16, 128], strides = [1, 1, 1]} : vector<10x18x128xbf16> to vector<8x16x128xbf16>
    %49 = tpu.concatenate %40, %41, %42, %43, %44, %45, %46, %47, %48 in 2 : vector<8x16x128xbf16>, vector<8x16x128xbf16>, vector<8x16x128xbf16>, vector<8x16x128xbf16>, vector<8x16x128xbf16>, vector<8x16x128xbf16>, vector<8x16x128xbf16>, vector<8x16x128xbf16>, vector<8x16x128xbf16> -> vector<8x16x1152xbf16>
    %50 = vector.shape_cast %49 : vector<8x16x1152xbf16> to vector<128x1152xbf16>
    %c0_9 = arith.constant 0 : index
    %c0_10 = arith.constant 0 : index
    %51 = vector.load %arg5[%c0_9, %c0_10] : memref<1152x128xbf16, #tpu.memory_space<vmem>>, vector<1152x128xbf16>
    %cst_11 = arith.constant dense<0.000000e+00> : vector<128x128xf32>
    %52 = tpu.matmul %50, %51, %cst_11 {dimension_numbers = #tpu.dot_dimension_numbers<[1], [0], [0], [1], [0, 0, 1, 1], [], []>} : vector<128x1152xbf16>, vector<1152x128xbf16>, vector<128x128xf32> -> vector<128x128xf32>
    %53 = vector.extract_strided_slice %4 {offsets = [2, 1, 0], sizes = [8, 16, 128], strides = [1, 1, 1]} : vector<12x18x128xbf16> to vector<8x16x128xbf16>
    %54 = arith.extf %53 : vector<8x16x128xbf16> to vector<8x16x128xf32>
    %55 = vector.shape_cast %54 : vector<8x16x128xf32> to vector<128x128xf32>
    %c0_12 = arith.constant 0 : index
    %c0_13 = arith.constant 0 : index
    %56 = vector.load %arg6[%c0_12, %c0_13] : memref<1x128xf32, #tpu.memory_space<vmem>>, vector<1x128xf32>
    %57 = vector.broadcast %56 : vector<1x128xf32> to vector<128x128xf32>
    %58 = arith.addf %52, %57 : vector<128x128xf32>
    %59 = arith.addf %58, %55 : vector<128x128xf32>
    %cst_14 = arith.constant 0.000000e+00 : f32
    %60 = vector.broadcast %cst_14 : f32 to vector<128x128xf32>
    %61 = arith.maximumf %59, %60 : vector<128x128xf32>
    %62 = vector.shape_cast %61 : vector<128x128xf32> to vector<8x16x128xf32>
    %63 = arith.truncf %62 : vector<8x16x128xf32> to vector<8x16x128xbf16>
    %c0_15 = arith.constant 0 : index
    %c0_16 = arith.constant 0 : index
    %c0_17 = arith.constant 0 : index
    %c0_18 = arith.constant 0 : index
    %64 = vector.load %arg7[%c0_15, %c0_16, %c0_17, %c0_18] : memref<1x8x16x128xbf16, #tpu.memory_space<vmem>>, vector<1x8x16x128xbf16>
    %65 = vector.shape_cast %64 : vector<1x8x16x128xbf16> to vector<8x16x128xbf16>
    %66 = vector.shape_cast %63 : vector<8x16x128xbf16> to vector<1x8x16x128xbf16>
    tpu.vector_store %arg7[%c0_15, %c0_16, %c0_17, %c0_18], %66 {strides = array<i32>} : memref<1x8x16x128xbf16, #tpu.memory_space<vmem>>, vector<1x8x16x128xbf16>,
    return
  }
  func.func @transform_0(%arg0: i32, %arg1: i32) -> (i32, i32, i32, i32) {
    %c0_i32 = arith.constant 0 : i32
    %c0_i32_0 = arith.constant 0 : i32
    %c0_i32_1 = arith.constant 0 : i32
    %c0_i32_2 = arith.constant 0 : i32
    return %arg0, %c0_i32, %c0_i32_0, %c0_i32_1 : i32, i32, i32, i32
  }
  func.func @transform_1(%arg0: i32, %arg1: i32) -> (i32, i32) {
    %c0_i32 = arith.constant 0 : i32
    %c0_i32_0 = arith.constant 0 : i32
    %c0_i32_1 = arith.constant 0 : i32
    return %c0_i32, %c0_i32_0 : i32, i32
  }
  func.func @transform_2(%arg0: i32, %arg1: i32) -> (i32, i32) {
    %c0_i32 = arith.constant 0 : i32
    %c0_i32_0 = arith.constant 0 : i32
    %c0_i32_1 = arith.constant 0 : i32
    return %c0_i32, %c0_i32_0 : i32, i32
  }
  func.func @transform_3(%arg0: i32, %arg1: i32) -> (i32, i32) {
    %c0_i32 = arith.constant 0 : i32
    %c0_i32_0 = arith.constant 0 : i32
    %c0_i32_1 = arith.constant 0 : i32
    return %c0_i32, %c0_i32_0 : i32, i32
  }
  func.func @transform_4(%arg0: i32, %arg1: i32) -> (i32, i32) {
    %c0_i32 = arith.constant 0 : i32
    %c0_i32_0 = arith.constant 0 : i32
    %c0_i32_1 = arith.constant 0 : i32
    return %c0_i32, %c0_i32_0 : i32, i32
  }
  func.func @transform_5(%arg0: i32, %arg1: i32) -> (i32, i32, i32, i32) {
    %c0_i32 = arith.constant 0 : i32
    %c0_i32_0 = arith.constant 0 : i32
    %c0_i32_1 = arith.constant 0 : i32
    return %arg0, %arg1, %c0_i32, %c0_i32_0 : i32, i32, i32, i32
  }
}

</mosaic_0001>

<llo_original>
// kernel: tpu_custom_call.1
$region0: #{tpu_custom_call.1}
  #allocation0 [shape = 'u32[]', space=smem, size = 0x4, offset = 0x4, fixed_abs, tag = 'smem constant byte address 0x4 - core index']
  #allocation1 [shape = 'u32[144,128]{1,0:T(1,128)}', space=vmem, size = 0x12000, scoped, tag = 'internal scratch']
  %s0 = inlined_call_operand.vmem [shape: bf16[2,20,18,128], index: 0, kind: input, shape index: {}]
  %s1 = inlined_call_operand.vmem [shape: bf16[1152,128], index: 1, kind: input, shape index: {}]
  %s2 = inlined_call_operand.vmem [shape: f32[1,128], index: 2, kind: input, shape index: {}]
  %s3 = inlined_call_operand.hbm [shape: bf16[1152,128], index: 3, kind: input, shape index: {}]
  %s4 = inlined_call_operand.vmem [shape: f32[1,128], index: 4, kind: input, shape index: {}]
  %s5 = inlined_call_operand.hbm [shape: bf16[2,16,16,128], index: 5, kind: output, shape index: {}]
  %s6 = sld [smem:[#allocation0]]
  $region57: #{tpu_custom_call.1} parent=0
    _
  %s8 = ssub.s32 1, %s6
  %s9 = scalar_select 0, %s8, %s6
  $region1: #{tpu_custom_call.1} parent=0
    #allocation2 [shape = 'u8[294912]{0}', space=vmem, size = 0x48000, scoped, tag = 'input window, operand 3, single buffered']
    #allocation3 [shape = 's32[2]{0}', space=sflag, size = 0x8, scoped, tag = 'scoped memory for tpu_custom_call.1']
    #allocation4 [shape = 's32[2]{0}', space=sflag, size = 0x8, scoped, tag = 'scoped memory for tpu_custom_call.1']
    #allocation5 [shape = 'u8[65536]{0}', space=vmem, size = 0x10000, scoped, tag = 'output window, operand 0']
    %10 = vsyncpa [#allocation3], 0
    %11 = vsyncpa [#allocation4], 0
    %s12 = scalar_lea.sflag [#allocation4], 1
    %13 = vsyncpa %s12, 0
    loop: start=0, step=1, limit=6
    $region2: #{tpu_custom_call.1} parent=1 // loop_pre_header
      _
    $region3: #{tpu_custom_call.1} parent=1 // loop_header
      %s15 = sphi 0, %s19
      %p16 = scmp.ge.s32.totalorder %s15, 6
      %s22 = sphi 0, %s34
      %s23 = sphi 0, %s30
      %s24 = sphi 0, %s22
      %s25 = sphi 0, %s23
      %s26 = sphi 0, %s24
      %s27 = sphi 0, %s25
      %s37 = sphi 0, %s39
      %s40 = sphi 0, %s37
      %s41 = sphi 0, %s40
      %s57 = sphi 0, %s41
      %s61 = sphi 0, %s61
      %s63 = sphi 0, %s61
      %s64 = sphi 0, %s63
      %s78 = sphi 0, %s64
      %s82 = sphi 0, %s82
      %s84 = sphi 0, %s82
      %s85 = sphi 0, %s84
      %s99 = sphi 0, %s85
      %s103 = sphi 0, %s103
      %s105 = sphi 0, %s103
      %s106 = sphi 0, %s105
      %s120 = sphi 0, %s106
      %s124 = sphi 0, %s124
      %s126 = sphi 0, %s124
      %s127 = sphi 0, %s126
      %s141 = sphi 0, %s127
      %s149 = sphi 0, %s151
      %s152 = sphi 0, %s149
      %s153 = sphi 0, %s152
      %s169 = sphi 0, %s153
    $region4: #{tpu_custom_call.1} parent=1 // loop_header_branch
      %18 = sbr.rel (%p16) target = $region8
    $region5: #{tpu_custom_call.1} parent=1 // loop_body
      %s20 = ssub.s32 %s15, 1
      %s21 = ssub.s32 %s15, 2
      %s28 = sadd.s32 1, %s23
      %p29 = scmp.ge.s32.totalorder %s28, 2
      %s30 = scalar_select %p29, 0, %s28
      %s31 = sadd.s32 1, %s22
      %s32 = scalar_select %p29, %s31, %s22
      %p33 = scmp.ge.s32.totalorder %s32, 2
      %s34 = scalar_select %p33, 0, %s32
      %s35 = ssub.s32 %s22, %s34
      %p36 = scmp.eq.s32.totalorder %s35, 0
      %s38 = sadd.s32 %s37, 1
      %s39 = scalar_select %p36, %s37, %s38
      %p42 = pneg %p36
      %p43 = scmp.eq.s32.totalorder %s15, 3
      %p44 = por %p42, %p43
      %p45 = scmp.ne.s32.totalorder %s37, %s40
      %p46 = scmp.eq.s32.totalorder %s15, 0
      %p47 = por %p45, %p46
      %p48 = scmp.ne.s32.totalorder %s37, %s40
      %p49 = scmp.eq.s32.totalorder %s20, 3
      %p50 = por %p48, %p49
      %p51 = scmp.ne.s32.totalorder %s40, %s41
      %p52 = scmp.eq.s32.totalorder %s20, 0
      %p53 = por %p51, %p52
      %p54 = scmp.ne.s32.totalorder %s40, %s41
      %p55 = scmp.eq.s32.totalorder %s21, 3
      %p56 = por %p54, %p55
      %p58 = scmp.ne.s32.totalorder %s41, %s57
      %p59 = scmp.eq.s32.totalorder %s21, 0
      %p60 = por %p58, %p59
      %s62 = sadd.s32 %s61, 1
      %p65 = scmp.eq.s32.totalorder %s15, 3
      %p66 = scmp.ne.s32.totalorder %s61, %s63
      %p67 = scmp.eq.s32.totalorder %s15, 0
      %p68 = por %p66, %p67
      %p69 = scmp.ne.s32.totalorder %s61, %s63
      %p70 = scmp.eq.s32.totalorder %s20, 3
      %p71 = por %p69, %p70
      %p72 = scmp.ne.s32.totalorder %s63, %s64
      %p73 = scmp.eq.s32.totalorder %s20, 0
      %p74 = por %p72, %p73
      %p75 = scmp.ne.s32.totalorder %s63, %s64
      %p76 = scmp.eq.s32.totalorder %s21, 3
      %p77 = por %p75, %p76
      %p79 = scmp.ne.s32.totalorder %s64, %s78
      %p80 = scmp.eq.s32.totalorder %s21, 0
      %p81 = por %p79, %p80
      %s83 = sadd.s32 %s82, 1
      %p86 = scmp.eq.s32.totalorder %s15, 3
      %p87 = scmp.ne.s32.totalorder %s82, %s84
      %p88 = scmp.eq.s32.totalorder %s15, 0
      %p89 = por %p87, %p88
      %p90 = scmp.ne.s32.totalorder %s82, %s84
      %p91 = scmp.eq.s32.totalorder %s20, 3
      %p92 = por %p90, %p91
      %p93 = scmp.ne.s32.totalorder %s84, %s85
      %p94 = scmp.eq.s32.totalorder %s20, 0
      %p95 = por %p93, %p94
      %p96 = scmp.ne.s32.totalorder %s84, %s85
      %p97 = scmp.eq.s32.totalorder %s21, 3
      %p98 = por %p96, %p97
      %p100 = scmp.ne.s32.totalorder %s85, %s99
      %p101 = scmp.eq.s32.totalorder %s21, 0
      %p102 = por %p100, %p101
      %s104 = sadd.s32 %s103, 1
      %p107 = scmp.eq.s32.totalorder %s15, 3
      %p108 = scmp.ne.s32.totalorder %s103, %s105
      %p109 = scmp.eq.s32.totalorder %s15, 0
      %p110 = por %p108, %p109
      %p111 = scmp.ne.s32.totalorder %s103, %s105
      %p112 = scmp.eq.s32.totalorder %s20, 3
      %p113 = por %p111, %p112
      %p114 = scmp.ne.s32.totalorder %s105, %s106
      %p115 = scmp.eq.s32.totalorder %s20, 0
      %p116 = por %p114, %p115
      %p117 = scmp.ne.s32.totalorder %s105, %s106
      %p118 = scmp.eq.s32.totalorder %s21, 3
      %p119 = por %p117, %p118
      %p121 = scmp.ne.s32.totalorder %s106, %s120
      %p122 = scmp.eq.s32.totalorder %s21, 0
      %p123 = por %p121, %p122
      %s125 = sadd.s32 %s124, 1
      %p128 = scmp.eq.s32.totalorder %s15, 3
      %p129 = scmp.ne.s32.totalorder %s124, %s126
      %p130 = scmp.eq.s32.totalorder %s15, 0
      %p131 = por %p129, %p130
      %p132 = scmp.ne.s32.totalorder %s124, %s126
      %p133 = scmp.eq.s32.totalorder %s20, 3
      %p134 = por %p132, %p133
      %p135 = scmp.ne.s32.totalorder %s126, %s127
      %p136 = scmp.eq.s32.totalorder %s20, 0
      %p137 = por %p135, %p136
      %p138 = scmp.ne.s32.totalorder %s126, %s127
      %p139 = scmp.eq.s32.totalorder %s21, 3
      %p140 = por %p138, %p139
      %p142 = scmp.ne.s32.totalorder %s127, %s141
      %p143 = scmp.eq.s32.totalorder %s21, 0
      %p144 = por %p142, %p143
      %s145 = ssub.s32 %s22, %s34
      %s146 = ssub.s32 %s23, %s30
      %s147 = sor.u32 %s145, %s146
      %p148 = scmp.eq.s32.totalorder %s147, 0
      %s150 = sadd.s32 %s149, 1
      %s151 = scalar_select %p148, %s149, %s150
      %p154 = pneg %p148
      %p155 = scmp.eq.s32.totalorder %s15, 3
      %p156 = por %p154, %p155
      %p157 = scmp.ne.s32.totalorder %s149, %s152
      %p158 = scmp.eq.s32.totalorder %s15, 0
      %p159 = por %p157, %p158
      %p160 = scmp.ne.s32.totalorder %s149, %s152
      %p161 = scmp.eq.s32.totalorder %s20, 3
      %p162 = por %p160, %p161
      %p163 = scmp.ne.s32.totalorder %s152, %s153
      %p164 = scmp.eq.s32.totalorder %s20, 0
      %p165 = por %p163, %p164
      %p166 = scmp.ne.s32.totalorder %s152, %s153
      %p167 = scmp.eq.s32.totalorder %s21, 3
      %p168 = por %p166, %p167
      %p170 = scmp.ne.s32.totalorder %s153, %s169
      %p171 = scmp.eq.s32.totalorder %s21, 0
      %p172 = por %p170, %p171
      %p173 = scmp.le.s32.totalorder 1, %s15
      %p174 = scmp.lt.s32.totalorder %s15, 5
      %p175 = pnand %p173, %p174
      %p176 = pneg %p175
      // Predicated region
      $region9: #{tpu_custom_call.1} parent=5 // pred_check
        _
      $region10: #{tpu_custom_call.1} parent=5 // pred_check_branch
        %178 = sbr.rel (%p175) target = $region12
      $region11: #{tpu_custom_call.1} parent=5 // pred_region
        %s179 = ssub.s32 %s15, 1
        // Predicated region
        $region13: #{tpu_custom_call.1} parent=11 // pred_check
          %p180 = pneg %p74
        $region14: #{tpu_custom_call.1} parent=11 // pred_check_branch
          %182 = sbr.rel (%p180) target = $region16
        $region15: #{tpu_custom_call.1} parent=11 // pred_region
          _
        $region16: #{tpu_custom_call.1} parent=11 // pred_fallthru
          _
        // Predicated region
        $region17: #{tpu_custom_call.1} parent=11 // pred_check
          %p183 = pneg %p95
        $region18: #{tpu_custom_call.1} parent=11 // pred_check_branch
          %185 = sbr.rel (%p183) target = $region20
        $region19: #{tpu_custom_call.1} parent=11 // pred_region
          _
        $region20: #{tpu_custom_call.1} parent=11 // pred_fallthru
          _
        // Predicated region
        $region21: #{tpu_custom_call.1} parent=11 // pred_check
          %p186 = pneg %p116
        $region22: #{tpu_custom_call.1} parent=11 // pred_check_branch
          %188 = sbr.rel (%p186) target = $region24
        $region23: #{tpu_custom_call.1} parent=11 // pred_region
          %s190 = ssub.s32 9216, 9216
          %191 = vsyncadd [#allocation3], %s190
          %s192 = sshll.u32 [#allocation2], 4
          %s193 = int_to_ptr.vmem [resolvable:$true] %s192
          %198 = dma.hbm_to_vmem [thread:$0]  %s3, 9216, %s193, [#allocation3], 64, 64, 4
        $region24: #{tpu_custom_call.1} parent=11 // pred_fallthru
          _
        // Predicated region
        $region25: #{tpu_custom_call.1} parent=11 // pred_check
          %p199 = pneg %p137
        $region26: #{tpu_custom_call.1} parent=11 // pred_check_branch
          %201 = sbr.rel (%p199) target = $region28
        $region27: #{tpu_custom_call.1} parent=11 // pred_region
          _
        $region28: #{tpu_custom_call.1} parent=11 // pred_fallthru
          _
      $region12: #{tpu_custom_call.1} parent=5 // pred_fallthru
        _
      %p202 = scmp.lt.s32.totalorder %s15, 4
      // Predicated region
      $region29: #{tpu_custom_call.1} parent=5 // pred_check
        %p203 = pneg %p202
      $region30: #{tpu_custom_call.1} parent=5 // pred_check_branch
        %205 = sbr.rel (%p203) target = $region32
      $region31: #{tpu_custom_call.1} parent=5 // pred_region
        // Predicated region
        $region33: #{tpu_custom_call.1} parent=31 // pred_check
          %p206 = pneg %p47
        $region34: #{tpu_custom_call.1} parent=31 // pred_check_branch
          %208 = sbr.rel (%p206) target = $region36
        $region35: #{tpu_custom_call.1} parent=31 // pred_region
          %p209 = scmp.lt.s32.totalorder %s22, 1
          %s210 = scalar_select %p209, %s22, 1
          %s211 = smul.addr %s210, 60
          %s212 = smul.addr %s211, 4
          %s213 = scalar_lea.vmem %s0, %s212
        $region36: #{tpu_custom_call.1} parent=31 // pred_fallthru
          _
      $region32: #{tpu_custom_call.1} parent=5 // pred_fallthru
        _
      %p214 = scmp.le.s32.totalorder 1, %s15
      %p215 = scmp.lt.s32.totalorder %s15, 5
      %p216 = pnand %p214, %p215
      %p217 = pneg %p216
      // Predicated region
      $region37: #{tpu_custom_call.1} parent=5 // pred_check
        _
      $region38: #{tpu_custom_call.1} parent=5 // pred_check_branch
        %219 = sbr.rel (%p216) target = $region40
      $region39: #{tpu_custom_call.1} parent=5 // pred_region
        %s220 = ssub.s32 %s15, 1
        // Predicated region
        $region41: #{tpu_custom_call.1} parent=39 // pred_check
          %p221 = pneg %p116
        $region42: #{tpu_custom_call.1} parent=39 // pred_check_branch
          %223 = sbr.rel (%p221) target = $region44
        $region43: #{tpu_custom_call.1} parent=39 // pred_region
          %224 = dma.done [#allocation3], 9216
        $region44: #{tpu_custom_call.1} parent=39 // pred_fallthru
          _
        %p225 = scmp.lt.s32.totalorder %s24, 1
        %s226 = scalar_select %p225, %s24, 1
        %s227 = smul.addr %s226, 60
        %s228 = smul.addr %s227, 4
        %s229 = scalar_lea.vmem %s0, %s228
        %p230 = pneg %p53
        %p231 = pneg %p50
        %p232 = pneg %p74
        %p233 = pneg %p71
        %p234 = pneg %p95
        %p235 = pneg %p92
        %p236 = pneg %p116
        %p237 = pneg %p113
        %p238 = pneg %p137
        %p239 = pneg %p134
        %p240 = pneg %p165
        %p241 = pneg %p162
        %s242 = sand.u32 %s152, 1
        %s243 = scalar_lea.sflag [#allocation4], %s242
        %s244 = sand.u32 %s152, 1
        %s245 = smul.addr %s244, 64
        %s246 = scalar_lea.vmem [#allocation5], %s245
        %p247 = scmp.lt.s32.totalorder %s24, 1
        %s248 = scalar_select %p247, %s24, 1
        %s249 = smul.addr %s248, 60
        %s250 = smul.addr %s249, 4
        %s251 = scalar_lea.vmem %s0, %s250
        %s252 = smul.u32 8, %s25
        %s254 = smul.u32 %s25, 8
        %s255 = smul.u32 %s254, 3
        %s256 = smul.addr %s255, 4
        %s257 = scalar_lea.vmem %s251, %s256
        %v258 = vld [vmem:[%s257] sm:$0xf]
        %v259 = vld [vmem:[%s257 + $0x4] sm:$0xf]
        %v260 = vld [vmem:[%s257 + $0x8] sm:$0x1]
        %v261 = vld [vmem:[%s257 + $0xc] sm:$0xf]
        %v262 = vld [vmem:[%s257 + $0x10] sm:$0xf]
        %v263 = vld [vmem:[%s257 + $0x14] sm:$0x1]
        %v264 = vld [vmem:[%s257 + $0x18] sm:$0xf]
        %v265 = vld [vmem:[%s257 + $0x1c] sm:$0xf]
        %v266 = vld [vmem:[%s257 + $0x20] sm:$0x1]
        %v267 = vld [vmem:[%s257 + $0x24] sm:$0xf]
        %v268 = vld [vmem:[%s257 + $0x28] sm:$0xf]
        %v269 = vld [vmem:[%s257 + $0x2c] sm:$0x1]
        %v270 = vld [vmem:[%s257 + $0x30] sm:$0xf]
        %v271 = vld [vmem:[%s257 + $0x34] sm:$0xf]
        %v272 = vld [vmem:[%s257 + $0x38] sm:$0x1]
        %v273 = vld [vmem:[%s257 + $0x3c] sm:$0xf]
        %v274 = vld [vmem:[%s257 + $0x40] sm:$0xf]
        %v275 = vld [vmem:[%s257 + $0x44] sm:$0x1]
        %v276 = vld [vmem:[%s257 + $0x48] sm:$0xf]
        %v277 = vld [vmem:[%s257 + $0x4c] sm:$0xf]
        %v278 = vld [vmem:[%s257 + $0x50] sm:$0x1]
        %v279 = vld [vmem:[%s257 + $0x54] sm:$0xf]
        %v280 = vld [vmem:[%s257 + $0x58] sm:$0xf]
        %v281 = vld [vmem:[%s257 + $0x5c] sm:$0x1]
        %v282 = vld [vmem:[%s257 + $0x60] sm:$0xf]
        %v283 = vld [vmem:[%s257 + $0x64] sm:$0xf]
        %v284 = vld [vmem:[%s257 + $0x68] sm:$0x1]
        %v285 = vld [vmem:[%s257 + $0x6c] sm:$0xf]
        %v286 = vld [vmem:[%s257 + $0x70] sm:$0xf]
        %v287 = vld [vmem:[%s257 + $0x74] sm:$0x1]
        %v288 = vld [vmem:[%s257 + $0x78] sm:$0xf]
        %v289 = vld [vmem:[%s257 + $0x7c] sm:$0xf]
        %v290 = vld [vmem:[%s257 + $0x80] sm:$0x1]
        %v291 = vld [vmem:[%s257 + $0x84] sm:$0xf]
        %v292 = vld [vmem:[%s257 + $0x88] sm:$0xf]
        %v293 = vld [vmem:[%s257 + $0x8c] sm:$0x1]
        %v314 = vunpack.c.l.b16 %v258
        %v315 = vunpack.c.l.b16 %v259
        %v316 = vunpack.c.l.b16 %v261
        %v317 = vunpack.c.l.b16 %v262
        %v318 = vunpack.c.l.b16 %v264
        %v319 = vunpack.c.l.b16 %v265
        %v320 = vunpack.c.l.b16 %v267
        %v321 = vunpack.c.l.b16 %v268
        %v322 = vunpack.c.l.b16 %v270
        %v323 = vunpack.c.l.b16 %v271
        %v324 = vunpack.c.l.b16 %v273
        %v325 = vunpack.c.l.b16 %v274
        %v326 = vunpack.c.l.b16 %v276
        %v327 = vunpack.c.l.b16 %v277
        %v328 = vunpack.c.l.b16 %v279
        %v329 = vunpack.c.l.b16 %v280
        %v330 = vunpack.c.l.b16 %v282
        %v331 = vunpack.c.l.b16 %v283
        %v332 = vunpack.c.l.b16 %v285
        %v333 = vunpack.c.l.b16 %v286
        %v334 = vpack.c.b16 %v315, %v314
        %v335 = vpack.c.b16 %v317, %v316
        %v336 = vpack.c.b16 %v319, %v318
        %v337 = vpack.c.b16 %v321, %v320
        %v338 = vpack.c.b16 %v323, %v322
        %v339 = vpack.c.b16 %v325, %v324
        %v340 = vpack.c.b16 %v327, %v326
        %v341 = vpack.c.b16 %v329, %v328
        %v342 = vpack.c.b16 %v331, %v330
        %v343 = vpack.c.b16 %v333, %v332
        %v364 = vunpack.c.l.b16 %v260
        %v365 = vunpack.c.l.b16 %v263
        %v366 = vunpack.c.l.b16 %v266
        %v367 = vunpack.c.l.b16 %v269
        %v368 = vunpack.c.l.b16 %v272
        %v369 = vunpack.c.l.b16 %v275
        %v370 = vunpack.c.l.b16 %v278
        %v371 = vunpack.c.l.b16 %v281
        %v372 = vunpack.c.l.b16 %v284
        %v373 = vunpack.c.l.b16 %v287
        %v374 = vpack.c.b16 %v364, %v364
        %v375 = vpack.c.b16 %v365, %v365
        %v376 = vpack.c.b16 %v366, %v366
        %v377 = vpack.c.b16 %v367, %v367
        %v378 = vpack.c.b16 %v368, %v368
        %v379 = vpack.c.b16 %v369, %v369
        %v380 = vpack.c.b16 %v370, %v370
        %v381 = vpack.c.b16 %v371, %v371
        %v382 = vpack.c.b16 %v372, %v372
        %v383 = vpack.c.b16 %v373, %v373
        %vm384 = vsmask.f32 7424
        %v386 = vshrl.u32 %v334, 16
        %v388 = vshll.u32 %v334, 16
        %v390 = vrot.slane %v388, 1
        %v391 = vor.u32 %v386, %v390
        %v393 = vshll.u32 %v374, 16
        %v395 = vrot.slane %v393, 1
        %v396 = vsel %vm384, %v391, %v395
        %v398 = vshrl.u32 %v335, 16
        %v400 = vshll.u32 %v335, 16
        %v402 = vrot.slane %v400, 1
        %v403 = vor.u32 %v398, %v402
        %v405 = vshll.u32 %v375, 16
        %v407 = vrot.slane %v405, 1
        %v408 = vsel %vm384, %v403, %v407
        %v410 = vshrl.u32 %v336, 16
        %v412 = vshll.u32 %v336, 16
        %v414 = vrot.slane %v412, 1
        %v415 = vor.u32 %v410, %v414
        %v417 = vshll.u32 %v376, 16
        %v419 = vrot.slane %v417, 1
        %v420 = vsel %vm384, %v415, %v419
        %v422 = vshrl.u32 %v337, 16
        %v424 = vshll.u32 %v337, 16
        %v426 = vrot.slane %v424, 1
        %v427 = vor.u32 %v422, %v426
        %v429 = vshll.u32 %v377, 16
        %v431 = vrot.slane %v429, 1
        %v432 = vsel %vm384, %v427, %v431
        %v434 = vshrl.u32 %v338, 16
        %v436 = vshll.u32 %v338, 16
        %v438 = vrot.slane %v436, 1
        %v439 = vor.u32 %v434, %v438
        %v441 = vshll.u32 %v378, 16
        %v443 = vrot.slane %v441, 1
        %v444 = vsel %vm384, %v439, %v443
        %v446 = vshrl.u32 %v339, 16
        %v448 = vshll.u32 %v339, 16
        %v450 = vrot.slane %v448, 1
        %v451 = vor.u32 %v446, %v450
        %v453 = vshll.u32 %v379, 16
        %v455 = vrot.slane %v453, 1
        %v456 = vsel %vm384, %v451, %v455
        %v458 = vshrl.u32 %v340, 16
        %v460 = vshll.u32 %v340, 16
        %v462 = vrot.slane %v460, 1
        %v463 = vor.u32 %v458, %v462
        %v465 = vshll.u32 %v380, 16
        %v467 = vrot.slane %v465, 1
        %v468 = vsel %vm384, %v463, %v467
        %v470 = vshrl.u32 %v341, 16
        %v472 = vshll.u32 %v341, 16
        %v474 = vrot.slane %v472, 1
        %v475 = vor.u32 %v470, %v474
        %v477 = vshll.u32 %v381, 16
        %v479 = vrot.slane %v477, 1
        %v480 = vsel %vm384, %v475, %v479
        %v482 = vshrl.u32 %v342, 16
        %v484 = vshll.u32 %v342, 16
        %v486 = vrot.slane %v484, 1
        %v487 = vor.u32 %v482, %v486
        %v489 = vshll.u32 %v382, 16
        %v491 = vrot.slane %v489, 1
        %v492 = vsel %vm384, %v487, %v491
        %v494 = vshrl.u32 %v343, 16
        %v496 = vshll.u32 %v343, 16
        %v498 = vrot.slane %v496, 1
        %v499 = vor.u32 %v494, %v498
        %v501 = vshll.u32 %v383, 16
        %v503 = vrot.slane %v501, 1
        %v504 = vsel %vm384, %v499, %v503
        %vm515 = vcmask 1046528
        %v516 = vrot.slane %v334, 1
        %v517 = vrot.slane %v374, 1
        %v518 = vsel %vm515, %v516, %v517
        %v519 = vrot.slane %v335, 1
        %v520 = vrot.slane %v375, 1
        %v521 = vsel %vm515, %v519, %v520
        %v522 = vrot.slane %v336, 1
        %v523 = vrot.slane %v376, 1
        %v524 = vsel %vm515, %v522, %v523
        %v525 = vrot.slane %v337, 1
        %v526 = vrot.slane %v377, 1
        %v527 = vsel %vm515, %v525, %v526
        %v528 = vrot.slane %v338, 1
        %v529 = vrot.slane %v378, 1
        %v530 = vsel %vm515, %v528, %v529
        %v531 = vrot.slane %v339, 1
        %v532 = vrot.slane %v379, 1
        %v533 = vsel %vm515, %v531, %v532
        %v534 = vrot.slane %v340, 1
        %v535 = vrot.slane %v380, 1
        %v536 = vsel %vm515, %v534, %v535
        %v537 = vrot.slane %v341, 1
        %v538 = vrot.slane %v381, 1
        %v539 = vsel %vm515, %v537, %v538
        %v540 = vrot.slane %v342, 1
        %v541 = vrot.slane %v382, 1
        %v542 = vsel %vm515, %v540, %v541
        %v543 = vrot.slane %v343, 1
        %v544 = vrot.slane %v383, 1
        %v545 = vsel %vm515, %v543, %v544
        %v558 = vunpack.c.l.b16 %v288
        %v559 = vunpack.c.l.b16 %v289
        %v560 = vpack.c.b16 %v559, %v558
        %v563 = vunpack.c.l.b16 %v290
        %v564 = vpack.c.b16 %v563, %v563
        %v566 = vshrl.u32 %v560, 16
        %v568 = vshll.u32 %v560, 16
        %v570 = vrot.slane %v568, 1
        %v571 = vor.u32 %v566, %v570
        %v573 = vshll.u32 %v564, 16
        %v575 = vrot.slane %v573, 1
        %v576 = vsel %vm384, %v571, %v575
        %v578 = vrot.slane %v560, 1
        %v579 = vrot.slane %v564, 1
        %v580 = vsel %vm515, %v578, %v579
        %v584 = vunpack.c.l.b16 %v291
        %v585 = vunpack.c.l.b16 %v292
        %v586 = vpack.c.b16 %v585, %v584
        %v589 = vunpack.c.l.b16 %v293
        %v590 = vpack.c.b16 %v589, %v589
        %v592 = vshrl.u32 %v586, 16
        %v594 = vshll.u32 %v586, 16
        %v596 = vrot.slane %v594, 1
        %v597 = vor.u32 %v592, %v596
        %v599 = vshll.u32 %v590, 16
        %v601 = vrot.slane %v599, 1
        %v602 = vsel %vm384, %v597, %v601
        %v604 = vrot.slane %v586, 1
        %v605 = vrot.slane %v590, 1
        %v606 = vsel %vm515, %v604, %v605
        %v608 = vld [vmem:[%s1] sm:$0xf]
        %v609 = vld [vmem:[%s1 + $0x4] sm:$0xf]
        %v610 = vld [vmem:[%s1 + $0x8] sm:$0xf]
        %v611 = vld [vmem:[%s1 + $0xc] sm:$0xf]
        %v612 = vld [vmem:[%s1 + $0x10] sm:$0xf]
        %v613 = vld [vmem:[%s1 + $0x14] sm:$0xf]
        %v614 = vld [vmem:[%s1 + $0x18] sm:$0xf]
        %v615 = vld [vmem:[%s1 + $0x1c] sm:$0xf]
        %v616 = vld [vmem:[%s1 + $0x20] sm:$0xf]
        %v617 = vld [vmem:[%s1 + $0x24] sm:$0xf]
        %v618 = vld [vmem:[%s1 + $0x28] sm:$0xf]
        %v619 = vld [vmem:[%s1 + $0x2c] sm:$0xf]
        %v620 = vld [vmem:[%s1 + $0x30] sm:$0xf]
        %v621 = vld [vmem:[%s1 + $0x34] sm:$0xf]
        %v622 = vld [vmem:[%s1 + $0x38] sm:$0xf]
        %v623 = vld [vmem:[%s1 + $0x3c] sm:$0xf]
        %v624 = vld [vmem:[%s1 + $0x40] sm:$0xf]
        %v625 = vld [vmem:[%s1 + $0x44] sm:$0xf]
        %v626 = vld [vmem:[%s1 + $0x48] sm:$0xf]
        %v627 = vld [vmem:[%s1 + $0x4c] sm:$0xf]
        %v628 = vld [vmem:[%s1 + $0x50] sm:$0xf]
        %v629 = vld [vmem:[%s1 + $0x54] sm:$0xf]
        %v630 = vld [vmem:[%s1 + $0x58] sm:$0xf]
        %v631 = vld [vmem:[%s1 + $0x5c] sm:$0xf]
        %v632 = vld [vmem:[%s1 + $0x60] sm:$0xf]
        %v633 = vld [vmem:[%s1 + $0x64] sm:$0xf]
        %v634 = vld [vmem:[%s1 + $0x68] sm:$0xf]
        %v635 = vld [vmem:[%s1 + $0x6c] sm:$0xf]
        %v636 = vld [vmem:[%s1 + $0x70] sm:$0xf]
        %v637 = vld [vmem:[%s1 + $0x74] sm:$0xf]
        %v638 = vld [vmem:[%s1 + $0x78] sm:$0xf]
        %v639 = vld [vmem:[%s1 + $0x7c] sm:$0xf]
        %v640 = vld [vmem:[%s1 + $0x80] sm:$0xf]
        %v641 = vld [vmem:[%s1 + $0x84] sm:$0xf]
        %v642 = vld [vmem:[%s1 + $0x88] sm:$0xf]
        %v643 = vld [vmem:[%s1 + $0x8c] sm:$0xf]
        %v644 = vld [vmem:[%s1 + $0x90] sm:$0xf]
        %v645 = vld [vmem:[%s1 + $0x94] sm:$0xf]
        %v646 = vld [vmem:[%s1 + $0x98] sm:$0xf]
        %v647 = vld [vmem:[%s1 + $0x9c] sm:$0xf]
        %v648 = vld [vmem:[%s1 + $0xa0] sm:$0xf]
        %v649 = vld [vmem:[%s1 + $0xa4] sm:$0xf]
        %v650 = vld [vmem:[%s1 + $0xa8] sm:$0xf]
        %v651 = vld [vmem:[%s1 + $0xac] sm:$0xf]
        %v652 = vld [vmem:[%s1 + $0xb0] sm:$0xf]
        %v653 = vld [vmem:[%s1 + $0xb4] sm:$0xf]
        %v654 = vld [vmem:[%s1 + $0xb8] sm:$0xf]
        %v655 = vld [vmem:[%s1 + $0xbc] sm:$0xf]
        %v656 = vld [vmem:[%s1 + $0xc0] sm:$0xf]
        %v657 = vld [vmem:[%s1 + $0xc4] sm:$0xf]
        %v658 = vld [vmem:[%s1 + $0xc8] sm:$0xf]
        %v659 = vld [vmem:[%s1 + $0xcc] sm:$0xf]
        %v660 = vld [vmem:[%s1 + $0xd0] sm:$0xf]
        %v661 = vld [vmem:[%s1 + $0xd4] sm:$0xf]
        %v662 = vld [vmem:[%s1 + $0xd8] sm:$0xf]
        %v663 = vld [vmem:[%s1 + $0xdc] sm:$0xf]
        %v664 = vld [vmem:[%s1 + $0xe0] sm:$0xf]
        %v665 = vld [vmem:[%s1 + $0xe4] sm:$0xf]
        %v666 = vld [vmem:[%s1 + $0xe8] sm:$0xf]
        %v667 = vld [vmem:[%s1 + $0xec] sm:$0xf]
        %v668 = vld [vmem:[%s1 + $0xf0] sm:$0xf]
        %v669 = vld [vmem:[%s1 + $0xf4] sm:$0xf]
        %v670 = vld [vmem:[%s1 + $0xf8] sm:$0xf]
        %v671 = vld [vmem:[%s1 + $0xfc] sm:$0xf]
        %v672 = vld [vmem:[%s1 + $0x100] sm:$0xf]
        %v673 = vld [vmem:[%s1 + $0x104] sm:$0xf]
        %v674 = vld [vmem:[%s1 + $0x108] sm:$0xf]
        %v675 = vld [vmem:[%s1 + $0x10c] sm:$0xf]
        %v676 = vld [vmem:[%s1 + $0x110] sm:$0xf]
        %v677 = vld [vmem:[%s1 + $0x114] sm:$0xf]
        %v678 = vld [vmem:[%s1 + $0x118] sm:$0xf]
        %v679 = vld [vmem:[%s1 + $0x11c] sm:$0xf]
        %v680 = vld [vmem:[%s1 + $0x120] sm:$0xf]
        %v681 = vld [vmem:[%s1 + $0x124] sm:$0xf]
        %v682 = vld [vmem:[%s1 + $0x128] sm:$0xf]
        %v683 = vld [vmem:[%s1 + $0x12c] sm:$0xf]
        %v684 = vld [vmem:[%s1 + $0x130] sm:$0xf]
        %v685 = vld [vmem:[%s1 + $0x134] sm:$0xf]
        %v686 = vld [vmem:[%s1 + $0x138] sm:$0xf]
        %v687 = vld [vmem:[%s1 + $0x13c] sm:$0xf]
        %v688 = vld [vmem:[%s1 + $0x140] sm:$0xf]
        %v689 = vld [vmem:[%s1 + $0x144] sm:$0xf]
        %v690 = vld [vmem:[%s1 + $0x148] sm:$0xf]
        %v691 = vld [vmem:[%s1 + $0x14c] sm:$0xf]
        %v692 = vld [vmem:[%s1 + $0x150] sm:$0xf]
        %v693 = vld [vmem:[%s1 + $0x154] sm:$0xf]
        %v694 = vld [vmem:[%s1 + $0x158] sm:$0xf]
        %v695 = vld [vmem:[%s1 + $0x15c] sm:$0xf]
        %v696 = vld [vmem:[%s1 + $0x160] sm:$0xf]
        %v697 = vld [vmem:[%s1 + $0x164] sm:$0xf]
        %v698 = vld [vmem:[%s1 + $0x168] sm:$0xf]
        %v699 = vld [vmem:[%s1 + $0x16c] sm:$0xf]
        %v700 = vld [vmem:[%s1 + $0x170] sm:$0xf]
        %v701 = vld [vmem:[%s1 + $0x174] sm:$0xf]
        %v702 = vld [vmem:[%s1 + $0x178] sm:$0xf]
        %v703 = vld [vmem:[%s1 + $0x17c] sm:$0xf]
        %v704 = vld [vmem:[%s1 + $0x180] sm:$0xf]
        %v705 = vld [vmem:[%s1 + $0x184] sm:$0xf]
        %v706 = vld [vmem:[%s1 + $0x188] sm:$0xf]
        %v707 = vld [vmem:[%s1 + $0x18c] sm:$0xf]
        %v708 = vld [vmem:[%s1 + $0x190] sm:$0xf]
        %v709 = vld [vmem:[%s1 + $0x194] sm:$0xf]
        %v710 = vld [vmem:[%s1 + $0x198] sm:$0xf]
        %v711 = vld [vmem:[%s1 + $0x19c] sm:$0xf]
        %v712 = vld [vmem:[%s1 + $0x1a0] sm:$0xf]
        %v713 = vld [vmem:[%s1 + $0x1a4] sm:$0xf]
        %v714 = vld [vmem:[%s1 + $0x1a8] sm:$0xf]
        %v715 = vld [vmem:[%s1 + $0x1ac] sm:$0xf]
        %v716 = vld [vmem:[%s1 + $0x1b0] sm:$0xf]
        %v717 = vld [vmem:[%s1 + $0x1b4] sm:$0xf]
        %v718 = vld [vmem:[%s1 + $0x1b8] sm:$0xf]
        %v719 = vld [vmem:[%s1 + $0x1bc] sm:$0xf]
        %v720 = vld [vmem:[%s1 + $0x1c0] sm:$0xf]
        %v721 = vld [vmem:[%s1 + $0x1c4] sm:$0xf]
        %v722 = vld [vmem:[%s1 + $0x1c8] sm:$0xf]
        %v723 = vld [vmem:[%s1 + $0x1cc] sm:$0xf]
        %v724 = vld [vmem:[%s1 + $0x1d0] sm:$0xf]
        %v725 = vld [vmem:[%s1 + $0x1d4] sm:$0xf]
        %v726 = vld [vmem:[%s1 + $0x1d8] sm:$0xf]
        %v727 = vld [vmem:[%s1 + $0x1dc] sm:$0xf]
        %v728 = vld [vmem:[%s1 + $0x1e0] sm:$0xf]
        %v729 = vld [vmem:[%s1 + $0x1e4] sm:$0xf]
        %v730 = vld [vmem:[%s1 + $0x1e8] sm:$0xf]
        %v731 = vld [vmem:[%s1 + $0x1ec] sm:$0xf]
        %v732 = vld [vmem:[%s1 + $0x1f0] sm:$0xf]
        %v733 = vld [vmem:[%s1 + $0x1f4] sm:$0xf]
        %v734 = vld [vmem:[%s1 + $0x1f8] sm:$0xf]
        %v735 = vld [vmem:[%s1 + $0x1fc] sm:$0xf]
        %v736 = vld [vmem:[%s1 + $0x200] sm:$0xf]
        %v737 = vld [vmem:[%s1 + $0x204] sm:$0xf]
        %v738 = vld [vmem:[%s1 + $0x208] sm:$0xf]
        %v739 = vld [vmem:[%s1 + $0x20c] sm:$0xf]
        %v740 = vld [vmem:[%s1 + $0x210] sm:$0xf]
        %v741 = vld [vmem:[%s1 + $0x214] sm:$0xf]
        %v742 = vld [vmem:[%s1 + $0x218] sm:$0xf]
        %v743 = vld [vmem:[%s1 + $0x21c] sm:$0xf]
        %v744 = vld [vmem:[%s1 + $0x220] sm:$0xf]
        %v745 = vld [vmem:[%s1 + $0x224] sm:$0xf]
        %v746 = vld [vmem:[%s1 + $0x228] sm:$0xf]
        %v747 = vld [vmem:[%s1 + $0x22c] sm:$0xf]
        %v748 = vld [vmem:[%s1 + $0x230] sm:$0xf]
        %v749 = vld [vmem:[%s1 + $0x234] sm:$0xf]
        %v750 = vld [vmem:[%s1 + $0x238] sm:$0xf]
        %v751 = vld [vmem:[%s1 + $0x23c] sm:$0xf]
        %v752 = vld [vmem:[%s2] sm:$0x1]
        %v754 = vlaneseq
        %v755 = vshrl.u32 %v754, 7
        %v756 = vsub.s32 0, %v755
        %v757 = vrot.slane %v752, %v756
        %v903 = vunpack.c.l.b16 %v608
        %v904 = vunpack.c.l.b16 %v609
        %v905 = vunpack.c.l.b16 %v610
        %v906 = vunpack.c.l.b16 %v611
        %v907 = vunpack.c.l.b16 %v612
        %v908 = vunpack.c.l.b16 %v613
        %v909 = vunpack.c.l.b16 %v614
        %v910 = vunpack.c.l.b16 %v615
        %v911 = vunpack.c.l.b16 %v616
        %v912 = vunpack.c.l.b16 %v617
        %v913 = vunpack.c.l.b16 %v618
        %v914 = vunpack.c.l.b16 %v619
        %v915 = vunpack.c.l.b16 %v620
        %v916 = vunpack.c.l.b16 %v621
        %v917 = vunpack.c.l.b16 %v622
        %v918 = vunpack.c.l.b16 %v623
        %v919 = vunpack.c.l.b16 %v624
        %v920 = vunpack.c.l.b16 %v625
        %v921 = vunpack.c.l.b16 %v626
        %v922 = vunpack.c.l.b16 %v627
        %v923 = vunpack.c.l.b16 %v628
        %v924 = vunpack.c.l.b16 %v629
        %v925 = vunpack.c.l.b16 %v630
        %v926 = vunpack.c.l.b16 %v631
        %v927 = vunpack.c.l.b16 %v632
        %v928 = vunpack.c.l.b16 %v633
        %v929 = vunpack.c.l.b16 %v634
        %v930 = vunpack.c.l.b16 %v635
        %v931 = vunpack.c.l.b16 %v636
        %v932 = vunpack.c.l.b16 %v637
        %v933 = vunpack.c.l.b16 %v638
        %v934 = vunpack.c.l.b16 %v639
        %v935 = vunpack.c.l.b16 %v640
        %v936 = vunpack.c.l.b16 %v641
        %v937 = vunpack.c.l.b16 %v642
        %v938 = vunpack.c.l.b16 %v643
        %v939 = vunpack.c.l.b16 %v644
        %v940 = vunpack.c.l.b16 %v645
        %v941 = vunpack.c.l.b16 %v646
        %v942 = vunpack.c.l.b16 %v647
        %v943 = vunpack.c.l.b16 %v648
        %v944 = vunpack.c.l.b16 %v649
        %v945 = vunpack.c.l.b16 %v650
        %v946 = vunpack.c.l.b16 %v651
        %v947 = vunpack.c.l.b16 %v652
        %v948 = vunpack.c.l.b16 %v653
        %v949 = vunpack.c.l.b16 %v654
        %v950 = vunpack.c.l.b16 %v655
        %v951 = vunpack.c.l.b16 %v656
        %v952 = vunpack.c.l.b16 %v657
        %v953 = vunpack.c.l.b16 %v658
        %v954 = vunpack.c.l.b16 %v659
        %v955 = vunpack.c.l.b16 %v660
        %v956 = vunpack.c.l.b16 %v661
        %v957 = vunpack.c.l.b16 %v662
        %v958 = vunpack.c.l.b16 %v663
        %v959 = vunpack.c.l.b16 %v664
        %v960 = vunpack.c.l.b16 %v665
        %v961 = vunpack.c.l.b16 %v666
        %v962 = vunpack.c.l.b16 %v667
        %v963 = vunpack.c.l.b16 %v668
        %v964 = vunpack.c.l.b16 %v669
        %v965 = vunpack.c.l.b16 %v670
        %v966 = vunpack.c.l.b16 %v671
        %v967 = vunpack.c.l.b16 %v672
        %v968 = vunpack.c.l.b16 %v673
        %v969 = vunpack.c.l.b16 %v674
        %v970 = vunpack.c.l.b16 %v675
        %v971 = vunpack.c.l.b16 %v676
        %v972 = vunpack.c.l.b16 %v677
        %v973 = vunpack.c.l.b16 %v678
        %v974 = vunpack.c.l.b16 %v679
        %v975 = vunpack.c.l.b16 %v680
        %v976 = vunpack.c.l.b16 %v681
        %v977 = vunpack.c.l.b16 %v682
        %v978 = vunpack.c.l.b16 %v683
        %v979 = vunpack.c.l.b16 %v684
        %v980 = vunpack.c.l.b16 %v685
        %v981 = vunpack.c.l.b16 %v686
        %v982 = vunpack.c.l.b16 %v687
        %v983 = vunpack.c.l.b16 %v688
        %v984 = vunpack.c.l.b16 %v689
        %v985 = vunpack.c.l.b16 %v690
        %v986 = vunpack.c.l.b16 %v691
        %v987 = vunpack.c.l.b16 %v692
        %v988 = vunpack.c.l.b16 %v693
        %v989 = vunpack.c.l.b16 %v694
        %v990 = vunpack.c.l.b16 %v695
        %v991 = vunpack.c.l.b16 %v696
        %v992 = vunpack.c.l.b16 %v697
        %v993 = vunpack.c.l.b16 %v698
        %v994 = vunpack.c.l.b16 %v699
        %v995 = vunpack.c.l.b16 %v700
        %v996 = vunpack.c.l.b16 %v701
        %v997 = vunpack.c.l.b16 %v702
        %v998 = vunpack.c.l.b16 %v703
        %v999 = vunpack.c.l.b16 %v704
        %v1000 = vunpack.c.l.b16 %v705
        %v1001 = vunpack.c.l.b16 %v706
        %v1002 = vunpack.c.l.b16 %v707
        %v1003 = vunpack.c.l.b16 %v708
        %v1004 = vunpack.c.l.b16 %v709
        %v1005 = vunpack.c.l.b16 %v710
        %v1006 = vunpack.c.l.b16 %v711
        %v1007 = vunpack.c.l.b16 %v712
        %v1008 = vunpack.c.l.b16 %v713
        %v1009 = vunpack.c.l.b16 %v714
        %v1010 = vunpack.c.l.b16 %v715
        %v1011 = vunpack.c.l.b16 %v716
        %v1012 = vunpack.c.l.b16 %v717
        %v1013 = vunpack.c.l.b16 %v718
        %v1014 = vunpack.c.l.b16 %v719
        %v1015 = vunpack.c.l.b16 %v720
        %v1016 = vunpack.c.l.b16 %v721
        %v1017 = vunpack.c.l.b16 %v722
        %v1018 = vunpack.c.l.b16 %v723
        %v1019 = vunpack.c.l.b16 %v724
        %v1020 = vunpack.c.l.b16 %v725
        %v1021 = vunpack.c.l.b16 %v726
        %v1022 = vunpack.c.l.b16 %v727
        %v1023 = vunpack.c.l.b16 %v728
        %v1024 = vunpack.c.l.b16 %v729
        %v1025 = vunpack.c.l.b16 %v730
        %v1026 = vunpack.c.l.b16 %v731
        %v1027 = vunpack.c.l.b16 %v732
        %v1028 = vunpack.c.l.b16 %v733
        %v1029 = vunpack.c.l.b16 %v734
        %v1030 = vunpack.c.l.b16 %v735
        %v1031 = vunpack.c.l.b16 %v736
        %v1032 = vunpack.c.l.b16 %v737
        %v1033 = vunpack.c.l.b16 %v738
        %v1034 = vunpack.c.l.b16 %v739
        %v1035 = vunpack.c.l.b16 %v740
        %v1036 = vunpack.c.l.b16 %v741
        %v1037 = vunpack.c.l.b16 %v742
        %v1038 = vunpack.c.l.b16 %v743
        %v1039 = vunpack.c.l.b16 %v744
        %v1040 = vunpack.c.l.b16 %v745
        %v1041 = vunpack.c.l.b16 %v746
        %v1042 = vunpack.c.l.b16 %v747
        %v1043 = vunpack.c.l.b16 %v748
        %v1044 = vunpack.c.l.b16 %v749
        %v1045 = vunpack.c.l.b16 %v750
        %v1046 = vunpack.c.l.b16 %v751
        %v1047 = vpack.c.b16 %v904, %v903
        %v1048 = vpack.c.b16 %v906, %v905
        %v1049 = vpack.c.b16 %v908, %v907
        %v1050 = vpack.c.b16 %v910, %v909
        %v1051 = vpack.c.b16 %v912, %v911
        %v1052 = vpack.c.b16 %v914, %v913
        %v1053 = vpack.c.b16 %v916, %v915
        %v1054 = vpack.c.b16 %v918, %v917
        %v1055 = vpack.c.b16 %v920, %v919
        %v1056 = vpack.c.b16 %v922, %v921
        %v1057 = vpack.c.b16 %v924, %v923
        %v1058 = vpack.c.b16 %v926, %v925
        %v1059 = vpack.c.b16 %v928, %v927
        %v1060 = vpack.c.b16 %v930, %v929
        %v1061 = vpack.c.b16 %v932, %v931
        %v1062 = vpack.c.b16 %v934, %v933
        %v1063 = vpack.c.b16 %v936, %v935
        %v1064 = vpack.c.b16 %v938, %v937
        %v1065 = vpack.c.b16 %v940, %v939
        %v1066 = vpack.c.b16 %v942, %v941
        %v1067 = vpack.c.b16 %v944, %v943
        %v1068 = vpack.c.b16 %v946, %v945
        %v1069 = vpack.c.b16 %v948, %v947
        %v1070 = vpack.c.b16 %v950, %v949
        %v1071 = vpack.c.b16 %v952, %v951
        %v1072 = vpack.c.b16 %v954, %v953
        %v1073 = vpack.c.b16 %v956, %v955
        %v1074 = vpack.c.b16 %v958, %v957
        %v1075 = vpack.c.b16 %v960, %v959
        %v1076 = vpack.c.b16 %v962, %v961
        %v1077 = vpack.c.b16 %v964, %v963
        %v1078 = vpack.c.b16 %v966, %v965
        %v1079 = vpack.c.b16 %v968, %v967
        %v1080 = vpack.c.b16 %v970, %v969
        %v1081 = vpack.c.b16 %v972, %v971
        %v1082 = vpack.c.b16 %v974, %v973
        %v1083 = vpack.c.b16 %v976, %v975
        %v1084 = vpack.c.b16 %v978, %v977
        %v1085 = vpack.c.b16 %v980, %v979
        %v1086 = vpack.c.b16 %v982, %v981
        %v1087 = vpack.c.b16 %v984, %v983
        %v1088 = vpack.c.b16 %v986, %v985
        %v1089 = vpack.c.b16 %v988, %v987
        %v1090 = vpack.c.b16 %v990, %v989
        %v1091 = vpack.c.b16 %v992, %v991
        %v1092 = vpack.c.b16 %v994, %v993
        %v1093 = vpack.c.b16 %v996, %v995
        %v1094 = vpack.c.b16 %v998, %v997
        %v1095 = vpack.c.b16 %v1000, %v999
        %v1096 = vpack.c.b16 %v1002, %v1001
        %v1097 = vpack.c.b16 %v1004, %v1003
        %v1098 = vpack.c.b16 %v1006, %v1005
        %v1099 = vpack.c.b16 %v1008, %v1007
        %v1100 = vpack.c.b16 %v1010, %v1009
        %v1101 = vpack.c.b16 %v1012, %v1011
        %v1102 = vpack.c.b16 %v1014, %v1013
        %v1103 = vpack.c.b16 %v1016, %v1015
        %v1104 = vpack.c.b16 %v1018, %v1017
        %v1105 = vpack.c.b16 %v1020, %v1019
        %v1106 = vpack.c.b16 %v1022, %v1021
        %v1107 = vpack.c.b16 %v1024, %v1023
        %v1108 = vpack.c.b16 %v1026, %v1025
        %v1109 = vpack.c.b16 %v1028, %v1027
        %v1110 = vpack.c.b16 %v1030, %v1029
        %v1111 = vpack.c.b16 %v1032, %v1031
        %v1112 = vpack.c.b16 %v1034, %v1033
        %v1113 = vpack.c.b16 %v1036, %v1035
        %v1114 = vpack.c.b16 %v1038, %v1037
        %v1115 = vpack.c.b16 %v1040, %v1039
        %v1116 = vpack.c.b16 %v1042, %v1041
        %v1117 = vpack.c.b16 %v1044, %v1043
        %v1118 = vpack.c.b16 %v1046, %v1045
        %1191 = vmatprep.subr.bf16.mxu0 0
        %1192 = vmatpush1.bf16.msra.mxu0 %v1047
        %1193 = vmatprep.subr.bf16.mxu0 0
        %1194 = vmatpush1.bf16.msra.mxu0 %v1048
        %1195 = vmatprep.subr.bf16.mxu0 0
        %1196 = vmatpush1.bf16.msra.mxu0 %v1049
        %1197 = vmatprep.subr.bf16.mxu0 0
        %1198 = vmatpush1.bf16.msra.mxu0 %v1050
        %1199 = vmatprep.subr.bf16.mxu0 0
        %1200 = vmatpush1.bf16.msra.mxu0 %v1051
        %1201 = vmatprep.subr.bf16.mxu0 0
        %1202 = vmatpush1.bf16.msra.mxu0 %v1052
        %1203 = vmatprep.subr.bf16.mxu0 0
        %1204 = vmatpush1.bf16.msra.mxu0 %v1053
        %1205 = vmatprep.subr.bf16.mxu0 0
        %1206 = vmatpush1.bf16.msra.mxu0 %v1054
        %1207 = vmatprep.subr.bf16.mxu0 0
        %1208 = vmatpush1.bf16.msra.mxu0 %v1055
        %1209 = vmatprep.subr.bf16.mxu0 0
        %1210 = vmatpush1.bf16.msra.mxu0 %v1056
        %1211 = vmatprep.subr.bf16.mxu0 0
        %1212 = vmatpush1.bf16.msra.mxu0 %v1057
        %1213 = vmatprep.subr.bf16.mxu0 0
        %1214 = vmatpush1.bf16.msra.mxu0 %v1058
        %1215 = vmatprep.subr.bf16.mxu0 0
        %1216 = vmatpush1.bf16.msra.mxu0 %v1059
        %1217 = vmatprep.subr.bf16.mxu0 0
        %1218 = vmatpush1.bf16.msra.mxu0 %v1060
        %1219 = vmatprep.subr.bf16.mxu0 0
        %1220 = vmatpush1.bf16.msra.mxu0 %v1061
        %1221 = vmatprep.subr.bf16.mxu0 0
        %1222 = vmatpush1.bf16.msra.mxu0 %v1062
        %1223 = vmatprep.mubr.bf16.mxu0 %v396
        %1224 = vmatmul.mubr.bf16.gmra.mrb[0].mxu0 %v334
        %v1225 = vpop.f32.mrb[0].mxu0
        %v1226 = vadd.f32 %v757, %v1225
        %v1227 = vpop.f32.mrb[0].mxu0
        %v1228 = vpop.f32.mrb[0].mxu0
        %v1229 = vadd.f32 %v757, %v1228
        %v1230 = vpop.f32.mrb[0].mxu0
        %1231 = vmatprep.mubr.bf16.mxu0 %v408
        %1232 = vmatmul.mubr.bf16.gmra.mrb[0].mxu0 %v335
        %v1233 = vpop.f32.mrb[0].mxu0
        %v1234 = vadd.f32 %v757, %v1233
        %v1235 = vpop.f32.mrb[0].mxu0
        %v1236 = vpop.f32.mrb[0].mxu0
        %v1237 = vadd.f32 %v757, %v1236
        %v1238 = vpop.f32.mrb[0].mxu0
        %1239 = vmatprep.mubr.bf16.mxu0 %v420
        %1240 = vmatmul.mubr.bf16.gmra.mrb[0].mxu0 %v336
        %v1241 = vpop.f32.mrb[0].mxu0
        %v1242 = vadd.f32 %v757, %v1241
        %v1243 = vpop.f32.mrb[0].mxu0
        %v1244 = vpop.f32.mrb[0].mxu0
        %v1245 = vadd.f32 %v757, %v1244
        %v1246 = vpop.f32.mrb[0].mxu0
        %1247 = vmatprep.mubr.bf16.mxu0 %v432
        %1248 = vmatmul.mubr.bf16.gmra.mrb[0].mxu0 %v337
        %v1249 = vpop.f32.mrb[0].mxu0
        %v1250 = vadd.f32 %v757, %v1249
        %v1251 = vpop.f32.mrb[0].mxu0
        %v1252 = vpop.f32.mrb[0].mxu0
        %v1253 = vadd.f32 %v757, %v1252
        %v1254 = vpop.f32.mrb[0].mxu0
        %1255 = vmatprep.mubr.bf16.mxu0 %v444
        %1256 = vmatmul.mubr.bf16.gmra.mrb[0].mxu0 %v338
        %v1257 = vpop.f32.mrb[0].mxu0
        %v1258 = vadd.f32 %v757, %v1257
        %v1259 = vpop.f32.mrb[0].mxu0
        %v1260 = vpop.f32.mrb[0].mxu0
        %v1261 = vadd.f32 %v757, %v1260
        %v1262 = vpop.f32.mrb[0].mxu0
        %1263 = vmatprep.mubr.bf16.mxu0 %v456
        %1264 = vmatmul.mubr.bf16.gmra.mrb[0].mxu0 %v339
        %v1265 = vpop.f32.mrb[0].mxu0
        %v1266 = vadd.f32 %v757, %v1265
        %v1267 = vpop.f32.mrb[0].mxu0
        %v1268 = vpop.f32.mrb[0].mxu0
        %v1269 = vadd.f32 %v757, %v1268
        %v1270 = vpop.f32.mrb[0].mxu0
        %1271 = vmatprep.mubr.bf16.mxu0 %v468
        %1272 = vmatmul.mubr.bf16.gmra.mrb[0].mxu0 %v340
        %v1273 = vpop.f32.mrb[0].mxu0
        %v1274 = vadd.f32 %v757, %v1273
        %v1275 = vpop.f32.mrb[0].mxu0
        %v1276 = vpop.f32.mrb[0].mxu0
        %v1277 = vadd.f32 %v757, %v1276
        %v1278 = vpop.f32.mrb[0].mxu0
        %1279 = vmatprep.mubr.bf16.mxu0 %v480
        %1280 = vmatmul.mubr.bf16.gmra.mrb[0].mxu0 %v341
        %v1281 = vpop.f32.mrb[0].mxu0
        %v1282 = vadd.f32 %v757, %v1281
        %v1283 = vpop.f32.mrb[0].mxu0
        %v1284 = vpop.f32.mrb[0].mxu0
        %v1285 = vadd.f32 %v757, %v1284
        %v1286 = vpop.f32.mrb[0].mxu0
        %1287 = vmatprep.mubr.bf16.mxu0 %v492
        %1288 = vmatmul.mubr.bf16.gmra.mrb[0].mxu0 %v342
        %v1289 = vpop.f32.mrb[0].mxu0
        %v1290 = vadd.f32 %v757, %v1289
        %v1291 = vpop.f32.mrb[0].mxu0
        %v1292 = vpop.f32.mrb[0].mxu0
        %v1293 = vadd.f32 %v757, %v1292
        %v1294 = vpop.f32.mrb[0].mxu0
        %1295 = vmatprep.mubr.bf16.mxu0 %v504
        %1296 = vmatmul.mubr.bf16.gmra.mrb[0].mxu0 %v343
        %v1297 = vpop.f32.mrb[0].mxu0
        %v1298 = vadd.f32 %v757, %v1297
        %v1299 = vpop.f32.mrb[0].mxu0
        %v1300 = vpop.f32.mrb[0].mxu0
        %v1301 = vadd.f32 %v757, %v1300
        %v1302 = vpop.f32.mrb[0].mxu0
        %1303 = vdwg.mxu0
        %1304 = vmatprep.subr.bf16.mxu0 0
        %1305 = vmatpush1.bf16.msra.mxu0 %v1063
        %1306 = vmatprep.subr.bf16.mxu0 0
        %1307 = vmatpush1.bf16.msra.mxu0 %v1064
        %1308 = vmatprep.subr.bf16.mxu0 0
        %1309 = vmatpush1.bf16.msra.mxu0 %v1065
        %1310 = vmatprep.subr.bf16.mxu0 0
        %1311 = vmatpush1.bf16.msra.mxu0 %v1066
        %1312 = vmatprep.subr.bf16.mxu0 0
        %1313 = vmatpush1.bf16.msra.mxu0 %v1067
        %1314 = vmatprep.subr.bf16.mxu0 0
        %1315 = vmatpush1.bf16.msra.mxu0 %v1068
        %1316 = vmatprep.subr.bf16.mxu0 0
        %1317 = vmatpush1.bf16.msra.mxu0 %v1069
        %1318 = vmatprep.subr.bf16.mxu0 0
        %1319 = vmatpush1.bf16.msra.mxu0 %v1070
        %1320 = vmatprep.subr.bf16.mxu0 0
        %1321 = vmatpush1.bf16.msra.mxu0 %v1071
        %1322 = vmatprep.subr.bf16.mxu0 0
        %1323 = vmatpush1.bf16.msra.mxu0 %v1072
        %1324 = vmatprep.subr.bf16.mxu0 0
        %1325 = vmatpush1.bf16.msra.mxu0 %v1073
        %1326 = vmatprep.subr.bf16.mxu0 0
        %1327 = vmatpush1.bf16.msra.mxu0 %v1074
        %1328 = vmatprep.subr.bf16.mxu0 0
        %1329 = vmatpush1.bf16.msra.mxu0 %v1075
        %1330 = vmatprep.subr.bf16.mxu0 0
        %1331 = vmatpush1.bf16.msra.mxu0 %v1076
        %1332 = vmatprep.subr.bf16.mxu0 0
        %1333 = vmatpush1.bf16.msra.mxu0 %v1077
        %1334 = vmatprep.subr.bf16.mxu0 0
        %1335 = vmatpush1.bf16.msra.mxu0 %v1078
        %1336 = vmatprep.mubr.bf16.mxu0 %v335
        %1337 = vmatmul.mubr.bf16.gmra.mrb[0].mxu0 %v518
        %v1338 = vpop.f32.mrb[0].mxu0
        %v1339 = vadd.f32 %v1226, %v1338
        %v1340 = vpop.f32.mrb[0].mxu0
        %v1341 = vpop.f32.mrb[0].mxu0
        %v1342 = vadd.f32 %v1229, %v1341
        %v1343 = vpop.f32.mrb[0].mxu0
        %1344 = vmatprep.mubr.bf16.mxu0 %v336
        %1345 = vmatmul.mubr.bf16.gmra.mrb[0].mxu0 %v521
        %v1346 = vpop.f32.mrb[0].mxu0
        %v1347 = vadd.f32 %v1234, %v1346
        %v1348 = vpop.f32.mrb[0].mxu0
        %v1349 = vpop.f32.mrb[0].mxu0
        %v1350 = vadd.f32 %v1237, %v1349
        %v1351 = vpop.f32.mrb[0].mxu0
        %1352 = vmatprep.mubr.bf16.mxu0 %v337
        %1353 = vmatmul.mubr.bf16.gmra.mrb[0].mxu0 %v524
        %v1354 = vpop.f32.mrb[0].mxu0
        %v1355 = vadd.f32 %v1242, %v1354
        %v1356 = vpop.f32.mrb[0].mxu0
        %v1357 = vpop.f32.mrb[0].mxu0
        %v1358 = vadd.f32 %v1245, %v1357
        %v1359 = vpop.f32.mrb[0].mxu0
        %1360 = vmatprep.mubr.bf16.mxu0 %v338
        %1361 = vmatmul.mubr.bf16.gmra.mrb[0].mxu0 %v527
        %v1362 = vpop.f32.mrb[0].mxu0
        %v1363 = vadd.f32 %v1250, %v1362
        %v1364 = vpop.f32.mrb[0].mxu0
        %v1365 = vpop.f32.mrb[0].mxu0
        %v1366 = vadd.f32 %v1253, %v1365
        %v1367 = vpop.f32.mrb[0].mxu0
        %1368 = vmatprep.mubr.bf16.mxu0 %v339
        %1369 = vmatmul.mubr.bf16.gmra.mrb[0].mxu0 %v530
        %v1370 = vpop.f32.mrb[0].mxu0
        %v1371 = vadd.f32 %v1258, %v1370
        %v1372 = vpop.f32.mrb[0].mxu0
        %v1373 = vpop.f32.mrb[0].mxu0
        %v1374 = vadd.f32 %v1261, %v1373
        %v1375 = vpop.f32.mrb[0].mxu0
        %1376 = vmatprep.mubr.bf16.mxu0 %v340
        %1377 = vmatmul.mubr.bf16.gmra.mrb[0].mxu0 %v533
        %v1378 = vpop.f32.mrb[0].mxu0
        %v1379 = vadd.f32 %v1266, %v1378
        %v1380 = vpop.f32.mrb[0].mxu0
        %v1381 = vpop.f32.mrb[0].mxu0
        %v1382 = vadd.f32 %v1269, %v1381
        %v1383 = vpop.f32.mrb[0].mxu0
        %1384 = vmatprep.mubr.bf16.mxu0 %v341
        %1385 = vmatmul.mubr.bf16.gmra.mrb[0].mxu0 %v536
        %v1386 = vpop.f32.mrb[0].mxu0
        %v1387 = vadd.f32 %v1274, %v1386
        %v1388 = vpop.f32.mrb[0].mxu0
        %v1389 = vpop.f32.mrb[0].mxu0
        %v1390 = vadd.f32 %v1277, %v1389
        %v1391 = vpop.f32.mrb[0].mxu0
        %1392 = vmatprep.mubr.bf16.mxu0 %v342
        %1393 = vmatmul.mubr.bf16.gmra.mrb[0].mxu0 %v539
        %v1394 = vpop.f32.mrb[0].mxu0
        %v1395 = vadd.f32 %v1282, %v1394
        %v1396 = vpop.f32.mrb[0].mxu0
        %v1397 = vpop.f32.mrb[0].mxu0
        %v1398 = vadd.f32 %v1285, %v1397
        %v1399 = vpop.f32.mrb[0].mxu0
        %1400 = vmatprep.mubr.bf16.mxu0 %v343
        %1401 = vmatmul.mubr.bf16.gmra.mrb[0].mxu0 %v542
        %v1402 = vpop.f32.mrb[0].mxu0
        %v1403 = vadd.f32 %v1290, %v1402
        %v1404 = vpop.f32.mrb[0].mxu0
        %v1405 = vpop.f32.mrb[0].mxu0
        %v1406 = vadd.f32 %v1293, %v1405
        %v1407 = vpop.f32.mrb[0].mxu0
        %1408 = vmatprep.mubr.bf16.mxu0 %v560
        %1409 = vmatmul.mubr.bf16.gmra.mrb[0].mxu0 %v545
        %v1410 = vpop.f32.mrb[0].mxu0
        %v1411 = vadd.f32 %v1298, %v1410
        %v1412 = vpop.f32.mrb[0].mxu0
        %v1413 = vpop.f32.mrb[0].mxu0
        %v1414 = vadd.f32 %v1301, %v1413
        %v1415 = vpop.f32.mrb[0].mxu0
        %1416 = vdwg.mxu0
        %1417 = vmatprep.subr.bf16.mxu0 0
        %1418 = vmatpush1.bf16.msra.mxu0 %v1079
        %1419 = vmatprep.subr.bf16.mxu0 0
        %1420 = vmatpush1.bf16.msra.mxu0 %v1080
        %1421 = vmatprep.subr.bf16.mxu0 0
        %1422 = vmatpush1.bf16.msra.mxu0 %v1081
        %1423 = vmatprep.subr.bf16.mxu0 0
        %1424 = vmatpush1.bf16.msra.mxu0 %v1082
        %1425 = vmatprep.subr.bf16.mxu0 0
        %1426 = vmatpush1.bf16.msra.mxu0 %v1083
        %1427 = vmatprep.subr.bf16.mxu0 0
        %1428 = vmatpush1.bf16.msra.mxu0 %v1084
        %1429 = vmatprep.subr.bf16.mxu0 0
        %1430 = vmatpush1.bf16.msra.mxu0 %v1085
        %1431 = vmatprep.subr.bf16.mxu0 0
        %1432 = vmatpush1.bf16.msra.mxu0 %v1086
        %1433 = vmatprep.subr.bf16.mxu0 0
        %1434 = vmatpush1.bf16.msra.mxu0 %v1087
        %1435 = vmatprep.subr.bf16.mxu0 0
        %1436 = vmatpush1.bf16.msra.mxu0 %v1088
        %1437 = vmatprep.subr.bf16.mxu0 0
        %1438 = vmatpush1.bf16.msra.mxu0 %v1089
        %1439 = vmatprep.subr.bf16.mxu0 0
        %1440 = vmatpush1.bf16.msra.mxu0 %v1090
        %1441 = vmatprep.subr.bf16.mxu0 0
        %1442 = vmatpush1.bf16.msra.mxu0 %v1091
        %1443 = vmatprep.subr.bf16.mxu0 0
        %1444 = vmatpush1.bf16.msra.mxu0 %v1092
        %1445 = vmatprep.subr.bf16.mxu0 0
        %1446 = vmatpush1.bf16.msra.mxu0 %v1093
        %1447 = vmatprep.subr.bf16.mxu0 0
        %1448 = vmatpush1.bf16.msra.mxu0 %v1094
        %1449 = vmatprep.mubr.bf16.mxu0 %v521
        %1450 = vmatmul.mubr.bf16.gmra.mrb[0].mxu0 %v408
        %v1451 = vpop.f32.mrb[0].mxu0
        %v1452 = vadd.f32 %v1339, %v1451
        %v1453 = vpop.f32.mrb[0].mxu0
        %v1454 = vpop.f32.mrb[0].mxu0
        %v1455 = vadd.f32 %v1342, %v1454
        %v1456 = vpop.f32.mrb[0].mxu0
        %1457 = vmatprep.mubr.bf16.mxu0 %v524
        %1458 = vmatmul.mubr.bf16.gmra.mrb[0].mxu0 %v420
        %v1459 = vpop.f32.mrb[0].mxu0
        %v1460 = vadd.f32 %v1347, %v1459
        %v1461 = vpop.f32.mrb[0].mxu0
        %v1462 = vpop.f32.mrb[0].mxu0
        %v1463 = vadd.f32 %v1350, %v1462
        %v1464 = vpop.f32.mrb[0].mxu0
        %1465 = vmatprep.mubr.bf16.mxu0 %v527
        %1466 = vmatmul.mubr.bf16.gmra.mrb[0].mxu0 %v432
        %v1467 = vpop.f32.mrb[0].mxu0
        %v1468 = vadd.f32 %v1355, %v1467
        %v1469 = vpop.f32.mrb[0].mxu0
        %v1470 = vpop.f32.mrb[0].mxu0
        %v1471 = vadd.f32 %v1358, %v1470
        %v1472 = vpop.f32.mrb[0].mxu0
        %1473 = vmatprep.mubr.bf16.mxu0 %v530
        %1474 = vmatmul.mubr.bf16.gmra.mrb[0].mxu0 %v444
        %v1475 = vpop.f32.mrb[0].mxu0
        %v1476 = vadd.f32 %v1363, %v1475
        %v1477 = vpop.f32.mrb[0].mxu0
        %v1478 = vpop.f32.mrb[0].mxu0
        %v1479 = vadd.f32 %v1366, %v1478
        %v1480 = vpop.f32.mrb[0].mxu0
        %1481 = vmatprep.mubr.bf16.mxu0 %v533
        %1482 = vmatmul.mubr.bf16.gmra.mrb[0].mxu0 %v456
        %v1483 = vpop.f32.mrb[0].mxu0
        %v1484 = vadd.f32 %v1371, %v1483
        %v1485 = vpop.f32.mrb[0].mxu0
        %v1486 = vpop.f32.mrb[0].mxu0
        %v1487 = vadd.f32 %v1374, %v1486
        %v1488 = vpop.f32.mrb[0].mxu0
        %1489 = vmatprep.mubr.bf16.mxu0 %v536
        %1490 = vmatmul.mubr.bf16.gmra.mrb[0].mxu0 %v468
        %v1491 = vpop.f32.mrb[0].mxu0
        %v1492 = vadd.f32 %v1379, %v1491
        %v1493 = vpop.f32.mrb[0].mxu0
        %v1494 = vpop.f32.mrb[0].mxu0
        %v1495 = vadd.f32 %v1382, %v1494
        %v1496 = vpop.f32.mrb[0].mxu0
        %1497 = vmatprep.mubr.bf16.mxu0 %v539
        %1498 = vmatmul.mubr.bf16.gmra.mrb[0].mxu0 %v480
        %v1499 = vpop.f32.mrb[0].mxu0
        %v1500 = vadd.f32 %v1387, %v1499
        %v1501 = vpop.f32.mrb[0].mxu0
        %v1502 = vpop.f32.mrb[0].mxu0
        %v1503 = vadd.f32 %v1390, %v1502
        %v1504 = vpop.f32.mrb[0].mxu0
        %1505 = vmatprep.mubr.bf16.mxu0 %v542
        %1506 = vmatmul.mubr.bf16.gmra.mrb[0].mxu0 %v492
        %v1507 = vpop.f32.mrb[0].mxu0
        %v1508 = vadd.f32 %v1395, %v1507
        %v1509 = vpop.f32.mrb[0].mxu0
        %v1510 = vpop.f32.mrb[0].mxu0
        %v1511 = vadd.f32 %v1398, %v1510
        %v1512 = vpop.f32.mrb[0].mxu0
        %1513 = vmatprep.mubr.bf16.mxu0 %v545
        %1514 = vmatmul.mubr.bf16.gmra.mrb[0].mxu0 %v504
        %v1515 = vpop.f32.mrb[0].mxu0
        %v1516 = vadd.f32 %v1403, %v1515
        %v1517 = vpop.f32.mrb[0].mxu0
        %v1518 = vpop.f32.mrb[0].mxu0
        %v1519 = vadd.f32 %v1406, %v1518
        %v1520 = vpop.f32.mrb[0].mxu0
        %1521 = vmatprep.mubr.bf16.mxu0 %v580
        %1522 = vmatmul.mubr.bf16.gmra.mrb[0].mxu0 %v576
        %v1523 = vpop.f32.mrb[0].mxu0
        %v1524 = vadd.f32 %v1411, %v1523
        %v1525 = vpop.f32.mrb[0].mxu0
        %v1526 = vpop.f32.mrb[0].mxu0
        %v1527 = vadd.f32 %v1414, %v1526
        %v1528 = vpop.f32.mrb[0].mxu0
        %1529 = vdwg.mxu0
        %1530 = vmatprep.subr.bf16.mxu0 0
        %1531 = vmatpush1.bf16.msra.mxu0 %v1095
        %1532 = vmatprep.subr.bf16.mxu0 0
        %1533 = vmatpush1.bf16.msra.mxu0 %v1096
        %1534 = vmatprep.subr.bf16.mxu0 0
        %1535 = vmatpush1.bf16.msra.mxu0 %v1097
        %1536 = vmatprep.subr.bf16.mxu0 0
        %1537 = vmatpush1.bf16.msra.mxu0 %v1098
        %1538 = vmatprep.subr.bf16.mxu0 0
        %1539 = vmatpush1.bf16.msra.mxu0 %v1099
        %1540 = vmatprep.subr.bf16.mxu0 0
        %1541 = vmatpush1.bf16.msra.mxu0 %v1100
        %1542 = vmatprep.subr.bf16.mxu0 0
        %1543 = vmatpush1.bf16.msra.mxu0 %v1101
        %1544 = vmatprep.subr.bf16.mxu0 0
        %1545 = vmatpush1.bf16.msra.mxu0 %v1102
        %1546 = vmatprep.subr.bf16.mxu0 0
        %1547 = vmatpush1.bf16.msra.mxu0 %v1103
        %1548 = vmatprep.subr.bf16.mxu0 0
        %1549 = vmatpush1.bf16.msra.mxu0 %v1104
        %1550 = vmatprep.subr.bf16.mxu0 0
        %1551 = vmatpush1.bf16.msra.mxu0 %v1105
        %1552 = vmatprep.subr.bf16.mxu0 0
        %1553 = vmatpush1.bf16.msra.mxu0 %v1106
        %1554 = vmatprep.subr.bf16.mxu0 0
        %1555 = vmatpush1.bf16.msra.mxu0 %v1107
        %1556 = vmatprep.subr.bf16.mxu0 0
        %1557 = vmatpush1.bf16.msra.mxu0 %v1108
        %1558 = vmatprep.subr.bf16.mxu0 0
        %1559 = vmatpush1.bf16.msra.mxu0 %v1109
        %1560 = vmatprep.subr.bf16.mxu0 0
        %1561 = vmatpush1.bf16.msra.mxu0 %v1110
        %1562 = vmatprep.mubr.bf16.mxu0 %v420
        %1563 = vmatmul.mubr.bf16.gmra.mrb[0].mxu0 %v336
        %v1564 = vpop.f32.mrb[0].mxu0
        %v1565 = vadd.f32 %v1452, %v1564
        %v1566 = vpop.f32.mrb[0].mxu0
        %v1567 = vpop.f32.mrb[0].mxu0
        %v1568 = vadd.f32 %v1455, %v1567
        %v1569 = vpop.f32.mrb[0].mxu0
        %1570 = vmatprep.mubr.bf16.mxu0 %v432
        %1571 = vmatmul.mubr.bf16.gmra.mrb[0].mxu0 %v337
        %v1572 = vpop.f32.mrb[0].mxu0
        %v1573 = vadd.f32 %v1460, %v1572
        %v1574 = vpop.f32.mrb[0].mxu0
        %v1575 = vpop.f32.mrb[0].mxu0
        %v1576 = vadd.f32 %v1463, %v1575
        %v1577 = vpop.f32.mrb[0].mxu0
        %1578 = vmatprep.mubr.bf16.mxu0 %v444
        %1579 = vmatmul.mubr.bf16.gmra.mrb[0].mxu0 %v338
        %v1580 = vpop.f32.mrb[0].mxu0
        %v1581 = vadd.f32 %v1468, %v1580
        %v1582 = vpop.f32.mrb[0].mxu0
        %v1583 = vpop.f32.mrb[0].mxu0
        %v1584 = vadd.f32 %v1471, %v1583
        %v1585 = vpop.f32.mrb[0].mxu0
        %1586 = vmatprep.mubr.bf16.mxu0 %v456
        %1587 = vmatmul.mubr.bf16.gmra.mrb[0].mxu0 %v339
        %v1588 = vpop.f32.mrb[0].mxu0
        %v1589 = vadd.f32 %v1476, %v1588
        %v1590 = vpop.f32.mrb[0].mxu0
        %v1591 = vpop.f32.mrb[0].mxu0
        %v1592 = vadd.f32 %v1479, %v1591
        %v1593 = vpop.f32.mrb[0].mxu0
        %1594 = vmatprep.mubr.bf16.mxu0 %v468
        %1595 = vmatmul.mubr.bf16.gmra.mrb[0].mxu0 %v340
        %v1596 = vpop.f32.mrb[0].mxu0
        %v1597 = vadd.f32 %v1484, %v1596
        %v1598 = vpop.f32.mrb[0].mxu0
        %v1599 = vpop.f32.mrb[0].mxu0
        %v1600 = vadd.f32 %v1487, %v1599
        %v1601 = vpop.f32.mrb[0].mxu0
        %1602 = vmatprep.mubr.bf16.mxu0 %v480
        %1603 = vmatmul.mubr.bf16.gmra.mrb[0].mxu0 %v341
        %v1604 = vpop.f32.mrb[0].mxu0
        %v1605 = vadd.f32 %v1492, %v1604
        %v1606 = vpop.f32.mrb[0].mxu0
        %v1607 = vpop.f32.mrb[0].mxu0
        %v1608 = vadd.f32 %v1495, %v1607
        %v1609 = vpop.f32.mrb[0].mxu0
        %1610 = vmatprep.mubr.bf16.mxu0 %v492
        %1611 = vmatmul.mubr.bf16.gmra.mrb[0].mxu0 %v342
        %v1612 = vpop.f32.mrb[0].mxu0
        %v1613 = vadd.f32 %v1500, %v1612
        %v1614 = vpop.f32.mrb[0].mxu0
        %v1615 = vpop.f32.mrb[0].mxu0
        %v1616 = vadd.f32 %v1503, %v1615
        %v1617 = vpop.f32.mrb[0].mxu0
        %1618 = vmatprep.mubr.bf16.mxu0 %v504
        %1619 = vmatmul.mubr.bf16.gmra.mrb[0].mxu0 %v343
        %v1620 = vpop.f32.mrb[0].mxu0
        %v1621 = vadd.f32 %v1508, %v1620
        %v1622 = vpop.f32.mrb[0].mxu0
        %v1623 = vpop.f32.mrb[0].mxu0
        %v1624 = vadd.f32 %v1511, %v1623
        %v1625 = vpop.f32.mrb[0].mxu0
        %1626 = vmatprep.mubr.bf16.mxu0 %v576
        %1627 = vmatmul.mubr.bf16.gmra.mrb[0].mxu0 %v560
        %v1628 = vpop.f32.mrb[0].mxu0
        %v1629 = vadd.f32 %v1516, %v1628
        %v1630 = vpop.f32.mrb[0].mxu0
        %v1631 = vpop.f32.mrb[0].mxu0
        %v1632 = vadd.f32 %v1519, %v1631
        %v1633 = vpop.f32.mrb[0].mxu0
        %1634 = vmatprep.mubr.bf16.mxu0 %v602
        %1635 = vmatmul.mubr.bf16.gmra.mrb[0].mxu0 %v586
        %v1636 = vpop.f32.mrb[0].mxu0
        %v1637 = vadd.f32 %v1524, %v1636
        %v1638 = vpop.f32.mrb[0].mxu0
        %v1639 = vpop.f32.mrb[0].mxu0
        %v1640 = vadd.f32 %v1527, %v1639
        %v1641 = vpop.f32.mrb[0].mxu0
        %1642 = vdwg.mxu0
        %1643 = vmatprep.subr.bf16.mxu0 0
        %1644 = vmatpush1.bf16.msra.mxu0 %v1111
        %1645 = vmatprep.subr.bf16.mxu0 0
        %1646 = vmatpush1.bf16.msra.mxu0 %v1112
        %1647 = vmatprep.subr.bf16.mxu0 0
        %1648 = vmatpush1.bf16.msra.mxu0 %v1113
        %1649 = vmatprep.subr.bf16.mxu0 0
        %1650 = vmatpush1.bf16.msra.mxu0 %v1114
        %1651 = vmatprep.subr.bf16.mxu0 0
        %1652 = vmatpush1.bf16.msra.mxu0 %v1115
        %1653 = vmatprep.subr.bf16.mxu0 0
        %1654 = vmatpush1.bf16.msra.mxu0 %v1116
        %1655 = vmatprep.subr.bf16.mxu0 0
        %1656 = vmatpush1.bf16.msra.mxu0 %v1117
        %1657 = vmatprep.subr.bf16.mxu0 0
        %1658 = vmatpush1.bf16.msra.mxu0 %v1118
        %1659 = vmatprep.subr.bf16.mxu0 0
        %1660 = vmatpush1.bf16.msra.mxu0 0
        %1661 = vmatprep.subr.bf16.mxu0 0
        %1662 = vmatpush1.bf16.msra.mxu0 0
        %1663 = vmatprep.subr.bf16.mxu0 0
        %1664 = vmatpush1.bf16.msra.mxu0 0
        %1665 = vmatprep.subr.bf16.mxu0 0
        %1666 = vmatpush1.bf16.msra.mxu0 0
        %1667 = vmatprep.subr.bf16.mxu0 0
        %1668 = vmatpush1.bf16.msra.mxu0 0
        %1669 = vmatprep.subr.bf16.mxu0 0
        %1670 = vmatpush1.bf16.msra.mxu0 0
        %1671 = vmatprep.subr.bf16.mxu0 0
        %1672 = vmatpush1.bf16.msra.mxu0 0
        %1673 = vmatprep.subr.bf16.mxu0 0
        %1674 = vmatpush1.bf16.msra.mxu0 0
        %1675 = vmatprep.mubr.bf16.mxu0 0
        %1676 = vmatmul.mubr.bf16.gmra.mrb[0].mxu0 %v524
        %v1677 = vpop.f32.mrb[0].mxu0
        %v1678 = vadd.f32 %v1565, %v1677
        %v1679 = vpop.f32.mrb[0].mxu0
        %v1680 = vpop.f32.mrb[0].mxu0
        %v1681 = vadd.f32 %v1568, %v1680
        %v1682 = vpop.f32.mrb[0].mxu0
        %1683 = vmatprep.mubr.bf16.mxu0 0
        %1684 = vmatmul.mubr.bf16.gmra.mrb[0].mxu0 %v527
        %v1685 = vpop.f32.mrb[0].mxu0
        %v1686 = vadd.f32 %v1573, %v1685
        %v1687 = vpop.f32.mrb[0].mxu0
        %v1688 = vpop.f32.mrb[0].mxu0
        %v1689 = vadd.f32 %v1576, %v1688
        %v1690 = vpop.f32.mrb[0].mxu0
        %1691 = vmatprep.mubr.bf16.mxu0 0
        %1692 = vmatmul.mubr.bf16.gmra.mrb[0].mxu0 %v530
        %v1693 = vpop.f32.mrb[0].mxu0
        %v1694 = vadd.f32 %v1581, %v1693
        %v1695 = vpop.f32.mrb[0].mxu0
        %v1696 = vpop.f32.mrb[0].mxu0
        %v1697 = vadd.f32 %v1584, %v1696
        %v1698 = vpop.f32.mrb[0].mxu0
        %1699 = vmatprep.mubr.bf16.mxu0 0
        %1700 = vmatmul.mubr.bf16.gmra.mrb[0].mxu0 %v533
        %v1701 = vpop.f32.mrb[0].mxu0
        %v1702 = vadd.f32 %v1589, %v1701
        %v1703 = vpop.f32.mrb[0].mxu0
        %v1704 = vpop.f32.mrb[0].mxu0
        %v1705 = vadd.f32 %v1592, %v1704
        %v1706 = vpop.f32.mrb[0].mxu0
        %1707 = vmatprep.mubr.bf16.mxu0 0
        %1708 = vmatmul.mubr.bf16.gmra.mrb[0].mxu0 %v536
        %v1709 = vpop.f32.mrb[0].mxu0
        %v1710 = vadd.f32 %v1597, %v1709
        %v1711 = vpop.f32.mrb[0].mxu0
        %v1712 = vpop.f32.mrb[0].mxu0
        %v1713 = vadd.f32 %v1600, %v1712
        %v1714 = vpop.f32.mrb[0].mxu0
        %1715 = vmatprep.mubr.bf16.mxu0 0
        %1716 = vmatmul.mubr.bf16.gmra.mrb[0].mxu0 %v539
        %v1717 = vpop.f32.mrb[0].mxu0
        %v1718 = vadd.f32 %v1605, %v1717
        %v1719 = vpop.f32.mrb[0].mxu0
        %v1720 = vpop.f32.mrb[0].mxu0
        %v1721 = vadd.f32 %v1608, %v1720
        %v1722 = vpop.f32.mrb[0].mxu0
        %1723 = vmatprep.mubr.bf16.mxu0 0
        %1724 = vmatmul.mubr.bf16.gmra.mrb[0].mxu0 %v542
        %v1725 = vpop.f32.mrb[0].mxu0
        %v1726 = vadd.f32 %v1613, %v1725
        %v1727 = vpop.f32.mrb[0].mxu0
        %v1728 = vpop.f32.mrb[0].mxu0
        %v1729 = vadd.f32 %v1616, %v1728
        %v1730 = vpop.f32.mrb[0].mxu0
        %1731 = vmatprep.mubr.bf16.mxu0 0
        %1732 = vmatmul.mubr.bf16.gmra.mrb[0].mxu0 %v545
        %v1733 = vpop.f32.mrb[0].mxu0
        %v1734 = vadd.f32 %v1621, %v1733
        %v1735 = vpop.f32.mrb[0].mxu0
        %v1736 = vpop.f32.mrb[0].mxu0
        %v1737 = vadd.f32 %v1624, %v1736
        %v1738 = vpop.f32.mrb[0].mxu0
        %1739 = vmatprep.mubr.bf16.mxu0 0
        %1740 = vmatmul.mubr.bf16.gmra.mrb[0].mxu0 %v580
        %v1741 = vpop.f32.mrb[0].mxu0
        %v1742 = vadd.f32 %v1629, %v1741
        %v1743 = vpop.f32.mrb[0].mxu0
        %v1744 = vpop.f32.mrb[0].mxu0
        %v1745 = vadd.f32 %v1632, %v1744
        %v1746 = vpop.f32.mrb[0].mxu0
        %1747 = vmatprep.mubr.bf16.mxu0 0
        %1748 = vmatmul.mubr.bf16.gmra.mrb[0].mxu0 %v606
        %v1749 = vpop.f32.mrb[0].mxu0
        %v1750 = vadd.f32 %v1637, %v1749
        %v1751 = vpop.f32.mrb[0].mxu0
        %v1752 = vpop.f32.mrb[0].mxu0
        %v1753 = vadd.f32 %v1640, %v1752
        %v1754 = vpop.f32.mrb[0].mxu0
        %1755 = vdwg.mxu0
        %v1756 = vmax.f32 %v1678, 0.0
        %v1757 = vmax.f32 %v1681, 0.0
        %v1758 = vmax.f32 %v1686, 0.0
        %v1759 = vmax.f32 %v1689, 0.0
        %v1760 = vmax.f32 %v1694, 0.0
        %v1761 = vmax.f32 %v1697, 0.0
        %v1762 = vmax.f32 %v1702, 0.0
        %v1763 = vmax.f32 %v1705, 0.0
        %v1764 = vmax.f32 %v1710, 0.0
        %v1765 = vmax.f32 %v1713, 0.0
        %v1766 = vmax.f32 %v1718, 0.0
        %v1767 = vmax.f32 %v1721, 0.0
        %v1768 = vmax.f32 %v1726, 0.0
        %v1769 = vmax.f32 %v1729, 0.0
        %v1770 = vmax.f32 %v1734, 0.0
        %v1771 = vmax.f32 %v1737, 0.0
        %v1772 = vmax.f32 %v1742, 0.0
        %v1773 = vmax.f32 %v1745, 0.0
        %v1774 = vmax.f32 %v1750, 0.0
        %v1775 = vmax.f32 %v1753, 0.0
        %s1776 = ssub.s32 %s254, 1
        %v1777 = vstv %s1776
        %v1778 = vadd.s32 %v1777, 1
        %v1779 = vadd.s32 %v1777, 2
        %v1780 = vadd.s32 %v1777, 3
        %v1781 = vadd.s32 %v1777, 4
        %v1782 = vadd.s32 %v1777, 5
        %v1783 = vadd.s32 %v1777, 6
        %v1784 = vadd.s32 %v1777, 7
        %v1785 = vadd.s32 %v1777, 8
        %v1786 = vadd.s32 %v1777, 9
        %vm1787 = vcmp.ge.s32.totalorder %v1777, 0
        %vm1788 = vcmp.ge.s32.totalorder %v1778, 0
        %vm1789 = vcmp.ge.s32.totalorder %v1779, 0
        %vm1790 = vcmp.ge.s32.totalorder %v1780, 0
        %vm1791 = vcmp.ge.s32.totalorder %v1781, 0
        %vm1792 = vcmp.ge.s32.totalorder %v1782, 0
        %vm1793 = vcmp.ge.s32.totalorder %v1783, 0
        %vm1794 = vcmp.ge.s32.totalorder %v1784, 0
        %vm1795 = vcmp.ge.s32.totalorder %v1785, 0
        %vm1796 = vcmp.ge.s32.totalorder %v1786, 0
        %vm1797 = vcmp.lt.s32.totalorder %v1777, 16
        %vm1798 = vcmp.lt.s32.totalorder %v1778, 16
        %vm1799 = vcmp.lt.s32.totalorder %v1779, 16
        %vm1800 = vcmp.lt.s32.totalorder %v1780, 16
        %vm1801 = vcmp.lt.s32.totalorder %v1781, 16
        %vm1802 = vcmp.lt.s32.totalorder %v1782, 16
        %vm1803 = vcmp.lt.s32.totalorder %v1783, 16
        %vm1804 = vcmp.lt.s32.totalorder %v1784, 16
        %vm1805 = vcmp.lt.s32.totalorder %v1785, 16
        %vm1806 = vcmp.lt.s32.totalorder %v1786, 16
        %vm1807 = vmand %vm1787, %vm1797
        %vm1808 = vmand %vm1788, %vm1798
        %vm1809 = vmand %vm1789, %vm1799
        %vm1810 = vmand %vm1790, %vm1800
        %vm1811 = vmand %vm1791, %vm1801
        %vm1812 = vmand %vm1792, %vm1802
        %vm1813 = vmand %vm1793, %vm1803
        %vm1814 = vmand %vm1794, %vm1804
        %vm1815 = vmand %vm1795, %vm1805
        %vm1816 = vmand %vm1796, %vm1806
        %v1817 = vsel %vm1807, 1, 0
        %v1818 = vsel %vm1808, 1, 0
        %v1819 = vsel %vm1809, 1, 0
        %v1820 = vsel %vm1810, 1, 0
        %v1821 = vsel %vm1811, 1, 0
        %v1822 = vsel %vm1812, 1, 0
        %v1823 = vsel %vm1813, 1, 0
        %v1824 = vsel %vm1814, 1, 0
        %v1825 = vsel %vm1815, 1, 0
        %v1826 = vsel %vm1816, 1, 0
        %vm1827 = vcmp.eq.s32.totalorder %v1817, 1
        %vm1828 = vcmp.eq.s32.totalorder %v1818, 1
        %vm1829 = vcmp.eq.s32.totalorder %v1819, 1
        %vm1830 = vcmp.eq.s32.totalorder %v1820, 1
        %vm1831 = vcmp.eq.s32.totalorder %v1821, 1
        %vm1832 = vcmp.eq.s32.totalorder %v1822, 1
        %vm1833 = vcmp.eq.s32.totalorder %v1823, 1
        %vm1834 = vcmp.eq.s32.totalorder %v1824, 1
        %vm1835 = vcmp.eq.s32.totalorder %v1825, 1
        %vm1836 = vcmp.eq.s32.totalorder %v1826, 1
        %v1837 = vsel %vm1827, %v1756, 0.0
        %v1838 = vsel %vm1827, %v1757, 0.0
        %v1839 = vsel %vm1828, %v1758, 0.0
        %v1840 = vsel %vm1828, %v1759, 0.0
        %v1841 = vsel %vm1829, %v1760, 0.0
        %v1842 = vsel %vm1829, %v1761, 0.0
        %v1843 = vsel %vm1830, %v1762, 0.0
        %v1844 = vsel %vm1830, %v1763, 0.0
        %v1845 = vsel %vm1831, %v1764, 0.0
        %v1846 = vsel %vm1831, %v1765, 0.0
        %v1847 = vsel %vm1832, %v1766, 0.0
        %v1848 = vsel %vm1832, %v1767, 0.0
        %v1849 = vsel %vm1833, %v1768, 0.0
        %v1850 = vsel %vm1833, %v1769, 0.0
        %v1851 = vsel %vm1834, %v1770, 0.0
        %v1852 = vsel %vm1834, %v1771, 0.0
        %v1853 = vsel %vm1835, %v1772, 0.0
        %v1854 = vsel %vm1835, %v1773, 0.0
        %v1855 = vsel %vm1836, %v1774, 0.0
        %v1856 = vsel %vm1836, %v1775, 0.0
        %v1857 = vpack.c.bf16 %v1838, %v1837
        %v1858 = vpack.c.bf16 %v1840, %v1839
        %v1859 = vpack.c.bf16 %v1842, %v1841
        %v1860 = vpack.c.bf16 %v1844, %v1843
        %v1861 = vpack.c.bf16 %v1846, %v1845
        %v1862 = vpack.c.bf16 %v1848, %v1847
        %v1863 = vpack.c.bf16 %v1850, %v1849
        %v1864 = vpack.c.bf16 %v1852, %v1851
        %v1865 = vpack.c.bf16 %v1854, %v1853
        %v1866 = vpack.c.bf16 %v1856, %v1855
        %v1868 = vshrl.u32 %v1857, 16
        %v1870 = vrot.slane %v1868, 7
        %v1871 = vshll.u32 %v1857, 16
        %v1873 = vor.u32 %v1870, %v1871
        %v1875 = vshrl.u32 %v1858, 16
        %v1877 = vrot.slane %v1875, 7
        %v1878 = vshll.u32 %v1858, 16
        %v1880 = vor.u32 %v1877, %v1878
        %v1882 = vshrl.u32 %v1859, 16
        %v1884 = vrot.slane %v1882, 7
        %v1885 = vshll.u32 %v1859, 16
        %v1887 = vor.u32 %v1884, %v1885
        %v1889 = vshrl.u32 %v1860, 16
        %v1891 = vrot.slane %v1889, 7
        %v1892 = vshll.u32 %v1860, 16
        %v1894 = vor.u32 %v1891, %v1892
        %v1896 = vshrl.u32 %v1861, 16
        %v1898 = vrot.slane %v1896, 7
        %v1899 = vshll.u32 %v1861, 16
        %v1901 = vor.u32 %v1898, %v1899
        %v1903 = vshrl.u32 %v1862, 16
        %v1905 = vrot.slane %v1903, 7
        %v1906 = vshll.u32 %v1862, 16
        %v1908 = vor.u32 %v1905, %v1906
        %v1910 = vshrl.u32 %v1863, 16
        %v1912 = vrot.slane %v1910, 7
        %v1913 = vshll.u32 %v1863, 16
        %v1915 = vor.u32 %v1912, %v1913
        %v1917 = vshrl.u32 %v1864, 16
        %v1919 = vrot.slane %v1917, 7
        %v1920 = vshll.u32 %v1864, 16
        %v1922 = vor.u32 %v1919, %v1920
        %v1924 = vshrl.u32 %v1865, 16
        %v1926 = vrot.slane %v1924, 7
        %v1927 = vshll.u32 %v1865, 16
        %v1929 = vor.u32 %v1926, %v1927
        %v1931 = vshrl.u32 %v1866, 16
        %v1933 = vrot.slane %v1931, 7
        %v1934 = vshll.u32 %v1866, 16
        %v1936 = vor.u32 %v1933, %v1934
        %vm1957 = vcmask 1040384
        %vm1958 = vsmask.f32 256
        %vm1959 = vmand %vm1957, %vm1958
        %v1960 = vsel %vm1959, 0, %v1873
        %v1961 = vsel %vm1959, 0, %v1880
        %v1962 = vsel %vm1959, 0, %v1887
        %v1963 = vsel %vm1959, 0, %v1894
        %v1964 = vsel %vm1959, 0, %v1901
        %v1965 = vsel %vm1959, 0, %v1908
        %v1966 = vsel %vm1959, 0, %v1915
        %v1967 = vsel %vm1959, 0, %v1922
        %v1968 = vsel %vm1959, 0, %v1929
        %v1969 = vsel %vm1959, 0, %v1936
        %v1970 = vsel %vm1959, %v1870, 0
        %v1971 = vsel %vm1959, %v1877, 0
        %v1972 = vsel %vm1959, %v1884, 0
        %v1973 = vsel %vm1959, %v1891, 0
        %v1974 = vsel %vm1959, %v1898, 0
        %v1975 = vsel %vm1959, %v1905, 0
        %v1976 = vsel %vm1959, %v1912, 0
        %v1977 = vsel %vm1959, %v1919, 0
        %v1978 = vsel %vm1959, %v1926, 0
        %v1979 = vsel %vm1959, %v1933, 0
        %v1981 = vshrl.u32 %v1960, 16
        %v1983 = vshll.u32 %v1960, 16
        %v1985 = vrot.slane %v1983, 1
        %v1986 = vor.u32 %v1981, %v1985
        %v1988 = vshll.u32 %v1970, 16
        %v1990 = vrot.slane %v1988, 1
        %v1991 = vsel %vm384, %v1986, %v1990
        %v1993 = vshrl.u32 %v1961, 16
        %v1995 = vshll.u32 %v1961, 16
        %v1997 = vrot.slane %v1995, 1
        %v1998 = vor.u32 %v1993, %v1997
        %v2000 = vshll.u32 %v1971, 16
        %v2002 = vrot.slane %v2000, 1
        %v2003 = vsel %vm384, %v1998, %v2002
        %v2005 = vshrl.u32 %v1962, 16
        %v2007 = vshll.u32 %v1962, 16
        %v2009 = vrot.slane %v2007, 1
        %v2010 = vor.u32 %v2005, %v2009
        %v2012 = vshll.u32 %v1972, 16
        %v2014 = vrot.slane %v2012, 1
        %v2015 = vsel %vm384, %v2010, %v2014
        %v2017 = vshrl.u32 %v1963, 16
        %v2019 = vshll.u32 %v1963, 16
        %v2021 = vrot.slane %v2019, 1
        %v2022 = vor.u32 %v2017, %v2021
        %v2024 = vshll.u32 %v1973, 16
        %v2026 = vrot.slane %v2024, 1
        %v2027 = vsel %vm384, %v2022, %v2026
        %v2029 = vshrl.u32 %v1964, 16
        %v2031 = vshll.u32 %v1964, 16
        %v2033 = vrot.slane %v2031, 1
        %v2034 = vor.u32 %v2029, %v2033
        %v2036 = vshll.u32 %v1974, 16
        %v2038 = vrot.slane %v2036, 1
        %v2039 = vsel %vm384, %v2034, %v2038
        %v2041 = vshrl.u32 %v1965, 16
        %v2043 = vshll.u32 %v1965, 16
        %v2045 = vrot.slane %v2043, 1
        %v2046 = vor.u32 %v2041, %v2045
        %v2048 = vshll.u32 %v1975, 16
        %v2050 = vrot.slane %v2048, 1
        %v2051 = vsel %vm384, %v2046, %v2050
        %v2053 = vshrl.u32 %v1966, 16
        %v2055 = vshll.u32 %v1966, 16
        %v2057 = vrot.slane %v2055, 1
        %v2058 = vor.u32 %v2053, %v2057
        %v2060 = vshll.u32 %v1976, 16
        %v2062 = vrot.slane %v2060, 1
        %v2063 = vsel %vm384, %v2058, %v2062
        %v2065 = vshrl.u32 %v1967, 16
        %v2067 = vshll.u32 %v1967, 16
        %v2069 = vrot.slane %v2067, 1
        %v2070 = vor.u32 %v2065, %v2069
        %v2072 = vshll.u32 %v1977, 16
        %v2074 = vrot.slane %v2072, 1
        %v2075 = vsel %vm384, %v2070, %v2074
        %v2100 = vrot.slane %v1960, 1
        %v2101 = vrot.slane %v1970, 1
        %v2102 = vsel %vm515, %v2100, %v2101
        %v2103 = vrot.slane %v1961, 1
        %v2104 = vrot.slane %v1971, 1
        %v2105 = vsel %vm515, %v2103, %v2104
        %v2106 = vrot.slane %v1962, 1
        %v2107 = vrot.slane %v1972, 1
        %v2108 = vsel %vm515, %v2106, %v2107
        %v2109 = vrot.slane %v1963, 1
        %v2110 = vrot.slane %v1973, 1
        %v2111 = vsel %vm515, %v2109, %v2110
        %v2112 = vrot.slane %v1964, 1
        %v2113 = vrot.slane %v1974, 1
        %v2114 = vsel %vm515, %v2112, %v2113
        %v2115 = vrot.slane %v1965, 1
        %v2116 = vrot.slane %v1975, 1
        %v2117 = vsel %vm515, %v2115, %v2116
        %v2118 = vrot.slane %v1966, 1
        %v2119 = vrot.slane %v1976, 1
        %v2120 = vsel %vm515, %v2118, %v2119
        %v2121 = vrot.slane %v1967, 1
        %v2122 = vrot.slane %v1977, 1
        %v2123 = vsel %vm515, %v2121, %v2122
        %v2133 = vshrl.u32 %v1968, 16
        %v2135 = vshll.u32 %v1968, 16
        %v2137 = vrot.slane %v2135, 1
        %v2138 = vor.u32 %v2133, %v2137
        %v2140 = vshll.u32 %v1978, 16
        %v2142 = vrot.slane %v2140, 1
        %v2143 = vsel %vm384, %v2138, %v2142
        %v2147 = vrot.slane %v1968, 1
        %v2148 = vrot.slane %v1978, 1
        %v2149 = vsel %vm515, %v2147, %v2148
        %v2152 = vshrl.u32 %v1969, 16
        %v2154 = vshll.u32 %v1969, 16
        %v2156 = vrot.slane %v2154, 1
        %v2157 = vor.u32 %v2152, %v2156
        %v2159 = vshll.u32 %v1979, 16
        %v2161 = vrot.slane %v2159, 1
        %v2162 = vsel %vm384, %v2157, %v2161
        %v2166 = vrot.slane %v1969, 1
        %v2167 = vrot.slane %v1979, 1
        %v2168 = vsel %vm515, %v2166, %v2167
        %v2170 = vld [vmem:[#allocation2] sm:$0xf]
        %v2171 = vld [vmem:[#allocation2 + $0x4] sm:$0xf]
        %v2172 = vld [vmem:[#allocation2 + $0x8] sm:$0xf]
        %v2173 = vld [vmem:[#allocation2 + $0xc] sm:$0xf]
        %v2174 = vld [vmem:[#allocation2 + $0x10] sm:$0xf]
        %v2175 = vld [vmem:[#allocation2 + $0x14] sm:$0xf]
        %v2176 = vld [vmem:[#allocation2 + $0x18] sm:$0xf]
        %v2177 = vld [vmem:[#allocation2 + $0x1c] sm:$0xf]
        %v2178 = vld [vmem:[#allocation2 + $0x20] sm:$0xf]
        %v2179 = vld [vmem:[#allocation2 + $0x24] sm:$0xf]
        %v2180 = vld [vmem:[#allocation2 + $0x28] sm:$0xf]
        %v2181 = vld [vmem:[#allocation2 + $0x2c] sm:$0xf]
        %v2182 = vld [vmem:[#allocation2 + $0x30] sm:$0xf]
        %v2183 = vld [vmem:[#allocation2 + $0x34] sm:$0xf]
        %v2184 = vld [vmem:[#allocation2 + $0x38] sm:$0xf]
        %v2185 = vld [vmem:[#allocation2 + $0x3c] sm:$0xf]
        %v2186 = vld [vmem:[#allocation2 + $0x40] sm:$0xf]
        %v2187 = vld [vmem:[#allocation2 + $0x44] sm:$0xf]
        %v2188 = vld [vmem:[#allocation2 + $0x48] sm:$0xf]
        %v2189 = vld [vmem:[#allocation2 + $0x4c] sm:$0xf]
        %v2190 = vld [vmem:[#allocation2 + $0x50] sm:$0xf]
        %v2191 = vld [vmem:[#allocation2 + $0x54] sm:$0xf]
        %v2192 = vld [vmem:[#allocation2 + $0x58] sm:$0xf]
        %v2193 = vld [vmem:[#allocation2 + $0x5c] sm:$0xf]
        %v2194 = vld [vmem:[#allocation2 + $0x60] sm:$0xf]
        %v2195 = vld [vmem:[#allocation2 + $0x64] sm:$0xf]
        %v2196 = vld [vmem:[#allocation2 + $0x68] sm:$0xf]
        %v2197 = vld [vmem:[#allocation2 + $0x6c] sm:$0xf]
        %v2198 = vld [vmem:[#allocation2 + $0x70] sm:$0xf]
        %v2199 = vld [vmem:[#allocation2 + $0x74] sm:$0xf]
        %v2200 = vld [vmem:[#allocation2 + $0x78] sm:$0xf]
        %v2201 = vld [vmem:[#allocation2 + $0x7c] sm:$0xf]
        %v2202 = vld [vmem:[#allocation2 + $0x80] sm:$0xf]
        %v2203 = vld [vmem:[#allocation2 + $0x84] sm:$0xf]
        %v2204 = vld [vmem:[#allocation2 + $0x88] sm:$0xf]
        %v2205 = vld [vmem:[#allocation2 + $0x8c] sm:$0xf]
        %v2206 = vld [vmem:[#allocation2 + $0x90] sm:$0xf]
        %v2207 = vld [vmem:[#allocation2 + $0x94] sm:$0xf]
        %v2208 = vld [vmem:[#allocation2 + $0x98] sm:$0xf]
        %v2209 = vld [vmem:[#allocation2 + $0x9c] sm:$0xf]
        %v2210 = vld [vmem:[#allocation2 + $0xa0] sm:$0xf]
        %v2211 = vld [vmem:[#allocation2 + $0xa4] sm:$0xf]
        %v2212 = vld [vmem:[#allocation2 + $0xa8] sm:$0xf]
        %v2213 = vld [vmem:[#allocation2 + $0xac] sm:$0xf]
        %v2214 = vld [vmem:[#allocation2 + $0xb0] sm:$0xf]
        %v2215 = vld [vmem:[#allocation2 + $0xb4] sm:$0xf]
        %v2216 = vld [vmem:[#allocation2 + $0xb8] sm:$0xf]
        %v2217 = vld [vmem:[#allocation2 + $0xbc] sm:$0xf]
        %v2218 = vld [vmem:[#allocation2 + $0xc0] sm:$0xf]
        %v2219 = vld [vmem:[#allocation2 + $0xc4] sm:$0xf]
        %v2220 = vld [vmem:[#allocation2 + $0xc8] sm:$0xf]
        %v2221 = vld [vmem:[#allocation2 + $0xcc] sm:$0xf]
        %v2222 = vld [vmem:[#allocation2 + $0xd0] sm:$0xf]
        %v2223 = vld [vmem:[#allocation2 + $0xd4] sm:$0xf]
        %v2224 = vld [vmem:[#allocation2 + $0xd8] sm:$0xf]
        %v2225 = vld [vmem:[#allocation2 + $0xdc] sm:$0xf]
        %v2226 = vld [vmem:[#allocation2 + $0xe0] sm:$0xf]
        %v2227 = vld [vmem:[#allocation2 + $0xe4] sm:$0xf]
        %v2228 = vld [vmem:[#allocation2 + $0xe8] sm:$0xf]
        %v2229 = vld [vmem:[#allocation2 + $0xec] sm:$0xf]
        %v2230 = vld [vmem:[#allocation2 + $0xf0] sm:$0xf]
        %v2231 = vld [vmem:[#allocation2 + $0xf4] sm:$0xf]
        %v2232 = vld [vmem:[#allocation2 + $0xf8] sm:$0xf]
        %v2233 = vld [vmem:[#allocation2 + $0xfc] sm:$0xf]
        %v2234 = vld [vmem:[#allocation2 + $0x100] sm:$0xf]
        %v2235 = vld [vmem:[#allocation2 + $0x104] sm:$0xf]
        %v2236 = vld [vmem:[#allocation2 + $0x108] sm:$0xf]
        %v2237 = vld [vmem:[#allocation2 + $0x10c] sm:$0xf]
        %v2238 = vld [vmem:[#allocation2 + $0x110] sm:$0xf]
        %v2239 = vld [vmem:[#allocation2 + $0x114] sm:$0xf]
        %v2240 = vld [vmem:[#allocation2 + $0x118] sm:$0xf]
        %v2241 = vld [vmem:[#allocation2 + $0x11c] sm:$0xf]
        %v2242 = vld [vmem:[#allocation2 + $0x120] sm:$0xf]
        %v2243 = vld [vmem:[#allocation2 + $0x124] sm:$0xf]
        %v2244 = vld [vmem:[#allocation2 + $0x128] sm:$0xf]
        %v2245 = vld [vmem:[#allocation2 + $0x12c] sm:$0xf]
        %v2246 = vld [vmem:[#allocation2 + $0x130] sm:$0xf]
        %v2247 = vld [vmem:[#allocation2 + $0x134] sm:$0xf]
        %v2248 = vld [vmem:[#allocation2 + $0x138] sm:$0xf]
        %v2249 = vld [vmem:[#allocation2 + $0x13c] sm:$0xf]
        %v2250 = vld [vmem:[#allocation2 + $0x140] sm:$0xf]
        %v2251 = vld [vmem:[#allocation2 + $0x144] sm:$0xf]
        %v2252 = vld [vmem:[#allocation2 + $0x148] sm:$0xf]
        %v2253 = vld [vmem:[#allocation2 + $0x14c] sm:$0xf]
        %v2254 = vld [vmem:[#allocation2 + $0x150] sm:$0xf]
        %v2255 = vld [vmem:[#allocation2 + $0x154] sm:$0xf]
        %v2256 = vld [vmem:[#allocation2 + $0x158] sm:$0xf]
        %v2257 = vld [vmem:[#allocation2 + $0x15c] sm:$0xf]
        %v2258 = vld [vmem:[#allocation2 + $0x160] sm:$0xf]
        %v2259 = vld [vmem:[#allocation2 + $0x164] sm:$0xf]
        %v2260 = vld [vmem:[#allocation2 + $0x168] sm:$0xf]
        %v2261 = vld [vmem:[#allocation2 + $0x16c] sm:$0xf]
        %v2262 = vld [vmem:[#allocation2 + $0x170] sm:$0xf]
        %v2263 = vld [vmem:[#allocation2 + $0x174] sm:$0xf]
        %v2264 = vld [vmem:[#allocation2 + $0x178] sm:$0xf]
        %v2265 = vld [vmem:[#allocation2 + $0x17c] sm:$0xf]
        %v2266 = vld [vmem:[#allocation2 + $0x180] sm:$0xf]
        %v2267 = vld [vmem:[#allocation2 + $0x184] sm:$0xf]
        %v2268 = vld [vmem:[#allocation2 + $0x188] sm:$0xf]
        %v2269 = vld [vmem:[#allocation2 + $0x18c] sm:$0xf]
        %v2270 = vld [vmem:[#allocation2 + $0x190] sm:$0xf]
        %v2271 = vld [vmem:[#allocation2 + $0x194] sm:$0xf]
        %v2272 = vld [vmem:[#allocation2 + $0x198] sm:$0xf]
        %v2273 = vld [vmem:[#allocation2 + $0x19c] sm:$0xf]
        %v2274 = vld [vmem:[#allocation2 + $0x1a0] sm:$0xf]
        %v2275 = vld [vmem:[#allocation2 + $0x1a4] sm:$0xf]
        %v2276 = vld [vmem:[#allocation2 + $0x1a8] sm:$0xf]
        %v2277 = vld [vmem:[#allocation2 + $0x1ac] sm:$0xf]
        %v2278 = vld [vmem:[#allocation2 + $0x1b0] sm:$0xf]
        %v2279 = vld [vmem:[#allocation2 + $0x1b4] sm:$0xf]
        %v2280 = vld [vmem:[#allocation2 + $0x1b8] sm:$0xf]
        %v2281 = vld [vmem:[#allocation2 + $0x1bc] sm:$0xf]
        %v2282 = vld [vmem:[#allocation2 + $0x1c0] sm:$0xf]
        %v2283 = vld [vmem:[#allocation2 + $0x1c4] sm:$0xf]
        %v2284 = vld [vmem:[#allocation2 + $0x1c8] sm:$0xf]
        %v2285 = vld [vmem:[#allocation2 + $0x1cc] sm:$0xf]
        %v2286 = vld [vmem:[#allocation2 + $0x1d0] sm:$0xf]
        %v2287 = vld [vmem:[#allocation2 + $0x1d4] sm:$0xf]
        %v2288 = vld [vmem:[#allocation2 + $0x1d8] sm:$0xf]
        %v2289 = vld [vmem:[#allocation2 + $0x1dc] sm:$0xf]
        %v2290 = vld [vmem:[#allocation2 + $0x1e0] sm:$0xf]
        %v2291 = vld [vmem:[#allocation2 + $0x1e4] sm:$0xf]
        %v2292 = vld [vmem:[#allocation2 + $0x1e8] sm:$0xf]
        %v2293 = vld [vmem:[#allocation2 + $0x1ec] sm:$0xf]
        %v2294 = vld [vmem:[#allocation2 + $0x1f0] sm:$0xf]
        %v2295 = vld [vmem:[#allocation2 + $0x1f4] sm:$0xf]
        %v2296 = vld [vmem:[#allocation2 + $0x1f8] sm:$0xf]
        %v2297 = vld [vmem:[#allocation2 + $0x1fc] sm:$0xf]
        %v2298 = vld [vmem:[#allocation2 + $0x200] sm:$0xf]
        %v2299 = vld [vmem:[#allocation2 + $0x204] sm:$0xf]
        %v2300 = vld [vmem:[#allocation2 + $0x208] sm:$0xf]
        %v2301 = vld [vmem:[#allocation2 + $0x20c] sm:$0xf]
        %v2302 = vld [vmem:[#allocation2 + $0x210] sm:$0xf]
        %v2303 = vld [vmem:[#allocation2 + $0x214] sm:$0xf]
        %v2304 = vld [vmem:[#allocation2 + $0x218] sm:$0xf]
        %v2305 = vld [vmem:[#allocation2 + $0x21c] sm:$0xf]
        %v2306 = vld [vmem:[#allocation2 + $0x220] sm:$0xf]
        %v2307 = vld [vmem:[#allocation2 + $0x224] sm:$0xf]
        %v2308 = vld [vmem:[#allocation2 + $0x228] sm:$0xf]
        %v2309 = vld [vmem:[#allocation2 + $0x22c] sm:$0xf]
        %v2310 = vld [vmem:[#allocation2 + $0x230] sm:$0xf]
        %v2311 = vld [vmem:[#allocation2 + $0x234] sm:$0xf]
        %v2312 = vld [vmem:[#allocation2 + $0x238] sm:$0xf]
        %v2313 = vld [vmem:[#allocation2 + $0x23c] sm:$0xf]
        %v2314 = vunpack.c.l.bf16 %v264
        %v2315 = vunpack.c.l.bf16 %v265
        %v2316 = vunpack.c.l.bf16 %v266
        %v2317 = vunpack.c.l.bf16 %v267
        %v2318 = vunpack.c.l.bf16 %v268
        %v2319 = vunpack.c.l.bf16 %v269
        %v2320 = vunpack.c.l.bf16 %v270
        %v2321 = vunpack.c.l.bf16 %v271
        %v2322 = vunpack.c.l.bf16 %v272
        %v2323 = vunpack.c.l.bf16 %v273
        %v2324 = vunpack.c.l.bf16 %v274
        %v2325 = vunpack.c.l.bf16 %v275
        %v2326 = vunpack.c.l.bf16 %v276
        %v2327 = vunpack.c.l.bf16 %v277
        %v2328 = vunpack.c.l.bf16 %v278
        %v2329 = vunpack.c.l.bf16 %v279
        %v2330 = vunpack.c.l.bf16 %v280
        %v2331 = vunpack.c.l.bf16 %v281
        %v2332 = vunpack.c.l.bf16 %v282
        %v2333 = vunpack.c.l.bf16 %v283
        %v2334 = vunpack.c.l.bf16 %v284
        %v2335 = vunpack.c.l.bf16 %v285
        %v2336 = vunpack.c.l.bf16 %v286
        %v2337 = vunpack.c.l.bf16 %v287
        %vm2362 = vcmask 1046528
        %v2363 = vrot.slane %v2314, 1
        %v2364 = vrot.slane %v2315, 1
        %v2365 = vsel %vm2362, %v2363, %v2364
        %v2366 = vrot.slane %v2316, 1
        %v2367 = vsel %vm2362, %v2364, %v2366
        %v2368 = vrot.slane %v2317, 1
        %v2369 = vrot.slane %v2318, 1
        %v2370 = vsel %vm2362, %v2368, %v2369
        %v2371 = vrot.slane %v2319, 1
        %v2372 = vsel %vm2362, %v2369, %v2371
        %v2373 = vrot.slane %v2320, 1
        %v2374 = vrot.slane %v2321, 1
        %v2375 = vsel %vm2362, %v2373, %v2374
        %v2376 = vrot.slane %v2322, 1
        %v2377 = vsel %vm2362, %v2374, %v2376
        %v2378 = vrot.slane %v2323, 1
        %v2379 = vrot.slane %v2324, 1
        %v2380 = vsel %vm2362, %v2378, %v2379
        %v2381 = vrot.slane %v2325, 1
        %v2382 = vsel %vm2362, %v2379, %v2381
        %v2383 = vrot.slane %v2326, 1
        %v2384 = vrot.slane %v2327, 1
        %v2385 = vsel %vm2362, %v2383, %v2384
        %v2386 = vrot.slane %v2328, 1
        %v2387 = vsel %vm2362, %v2384, %v2386
        %v2388 = vrot.slane %v2329, 1
        %v2389 = vrot.slane %v2330, 1
        %v2390 = vsel %vm2362, %v2388, %v2389
        %v2391 = vrot.slane %v2331, 1
        %v2392 = vsel %vm2362, %v2389, %v2391
        %v2393 = vrot.slane %v2332, 1
        %v2394 = vrot.slane %v2333, 1
        %v2395 = vsel %vm2362, %v2393, %v2394
        %v2396 = vrot.slane %v2334, 1
        %v2397 = vsel %vm2362, %v2394, %v2396
        %v2398 = vrot.slane %v2335, 1
        %v2399 = vrot.slane %v2336, 1
        %v2400 = vsel %vm2362, %v2398, %v2399
        %v2401 = vrot.slane %v2337, 1
        %v2402 = vsel %vm2362, %v2399, %v2401
        %v2419 = vld [vmem:[%s4] sm:$0x1]
        %v2421 = vlaneseq
        %v2422 = vshrl.u32 %v2421, 7
        %v2423 = vsub.s32 0, %v2422
        %v2424 = vrot.slane %v2419, %v2423
        %v2570 = vunpack.c.l.b16 %v2170
        %v2571 = vunpack.c.l.b16 %v2171
        %v2572 = vunpack.c.l.b16 %v2172
        %v2573 = vunpack.c.l.b16 %v2173
        %v2574 = vunpack.c.l.b16 %v2174
        %v2575 = vunpack.c.l.b16 %v2175
        %v2576 = vunpack.c.l.b16 %v2176
        %v2577 = vunpack.c.l.b16 %v2177
        %v2578 = vunpack.c.l.b16 %v2178
        %v2579 = vunpack.c.l.b16 %v2179
        %v2580 = vunpack.c.l.b16 %v2180
        %v2581 = vunpack.c.l.b16 %v2181
        %v2582 = vunpack.c.l.b16 %v2182
        %v2583 = vunpack.c.l.b16 %v2183
        %v2584 = vunpack.c.l.b16 %v2184
        %v2585 = vunpack.c.l.b16 %v2185
        %v2586 = vunpack.c.l.b16 %v2186
        %v2587 = vunpack.c.l.b16 %v2187
        %v2588 = vunpack.c.l.b16 %v2188
        %v2589 = vunpack.c.l.b16 %v2189
        %v2590 = vunpack.c.l.b16 %v2190
        %v2591 = vunpack.c.l.b16 %v2191
        %v2592 = vunpack.c.l.b16 %v2192
        %v2593 = vunpack.c.l.b16 %v2193
        %v2594 = vunpack.c.l.b16 %v2194
        %v2595 = vunpack.c.l.b16 %v2195
        %v2596 = vunpack.c.l.b16 %v2196
        %v2597 = vunpack.c.l.b16 %v2197
        %v2598 = vunpack.c.l.b16 %v2198
        %v2599 = vunpack.c.l.b16 %v2199
        %v2600 = vunpack.c.l.b16 %v2200
        %v2601 = vunpack.c.l.b16 %v2201
        %v2602 = vunpack.c.l.b16 %v2202
        %v2603 = vunpack.c.l.b16 %v2203
        %v2604 = vunpack.c.l.b16 %v2204
        %v2605 = vunpack.c.l.b16 %v2205
        %v2606 = vunpack.c.l.b16 %v2206
        %v2607 = vunpack.c.l.b16 %v2207
        %v2608 = vunpack.c.l.b16 %v2208
        %v2609 = vunpack.c.l.b16 %v2209
        %v2610 = vunpack.c.l.b16 %v2210
        %v2611 = vunpack.c.l.b16 %v2211
        %v2612 = vunpack.c.l.b16 %v2212
        %v2613 = vunpack.c.l.b16 %v2213
        %v2614 = vunpack.c.l.b16 %v2214
        %v2615 = vunpack.c.l.b16 %v2215
        %v2616 = vunpack.c.l.b16 %v2216
        %v2617 = vunpack.c.l.b16 %v2217
        %v2618 = vunpack.c.l.b16 %v2218
        %v2619 = vunpack.c.l.b16 %v2219
        %v2620 = vunpack.c.l.b16 %v2220
        %v2621 = vunpack.c.l.b16 %v2221
        %v2622 = vunpack.c.l.b16 %v2222
        %v2623 = vunpack.c.l.b16 %v2223
        %v2624 = vunpack.c.l.b16 %v2224
        %v2625 = vunpack.c.l.b16 %v2225
        %v2626 = vunpack.c.l.b16 %v2226
        %v2627 = vunpack.c.l.b16 %v2227
        %v2628 = vunpack.c.l.b16 %v2228
        %v2629 = vunpack.c.l.b16 %v2229
        %v2630 = vunpack.c.l.b16 %v2230
        %v2631 = vunpack.c.l.b16 %v2231
        %v2632 = vunpack.c.l.b16 %v2232
        %v2633 = vunpack.c.l.b16 %v2233
        %v2634 = vunpack.c.l.b16 %v2234
        %v2635 = vunpack.c.l.b16 %v2235
        %v2636 = vunpack.c.l.b16 %v2236
        %v2637 = vunpack.c.l.b16 %v2237
        %v2638 = vunpack.c.l.b16 %v2238
        %v2639 = vunpack.c.l.b16 %v2239
        %v2640 = vunpack.c.l.b16 %v2240
        %v2641 = vunpack.c.l.b16 %v2241
        %v2642 = vunpack.c.l.b16 %v2242
        %v2643 = vunpack.c.l.b16 %v2243
        %v2644 = vunpack.c.l.b16 %v2244
        %v2645 = vunpack.c.l.b16 %v2245
        %v2646 = vunpack.c.l.b16 %v2246
        %v2647 = vunpack.c.l.b16 %v2247
        %v2648 = vunpack.c.l.b16 %v2248
        %v2649 = vunpack.c.l.b16 %v2249
        %v2650 = vunpack.c.l.b16 %v2250
        %v2651 = vunpack.c.l.b16 %v2251
        %v2652 = vunpack.c.l.b16 %v2252
        %v2653 = vunpack.c.l.b16 %v2253
        %v2654 = vunpack.c.l.b16 %v2254
        %v2655 = vunpack.c.l.b16 %v2255
        %v2656 = vunpack.c.l.b16 %v2256
        %v2657 = vunpack.c.l.b16 %v2257
        %v2658 = vunpack.c.l.b16 %v2258
        %v2659 = vunpack.c.l.b16 %v2259
        %v2660 = vunpack.c.l.b16 %v2260
        %v2661 = vunpack.c.l.b16 %v2261
        %v2662 = vunpack.c.l.b16 %v2262
        %v2663 = vunpack.c.l.b16 %v2263
        %v2664 = vunpack.c.l.b16 %v2264
        %v2665 = vunpack.c.l.b16 %v2265
        %v2666 = vunpack.c.l.b16 %v2266
        %v2667 = vunpack.c.l.b16 %v2267
        %v2668 = vunpack.c.l.b16 %v2268
        %v2669 = vunpack.c.l.b16 %v2269
        %v2670 = vunpack.c.l.b16 %v2270
        %v2671 = vunpack.c.l.b16 %v2271
        %v2672 = vunpack.c.l.b16 %v2272
        %v2673 = vunpack.c.l.b16 %v2273
        %v2674 = vunpack.c.l.b16 %v2274
        %v2675 = vunpack.c.l.b16 %v2275
        %v2676 = vunpack.c.l.b16 %v2276
        %v2677 = vunpack.c.l.b16 %v2277
        %v2678 = vunpack.c.l.b16 %v2278
        %v2679 = vunpack.c.l.b16 %v2279
        %v2680 = vunpack.c.l.b16 %v2280
        %v2681 = vunpack.c.l.b16 %v2281
        %v2682 = vunpack.c.l.b16 %v2282
        %v2683 = vunpack.c.l.b16 %v2283
        %v2684 = vunpack.c.l.b16 %v2284
        %v2685 = vunpack.c.l.b16 %v2285
        %v2686 = vunpack.c.l.b16 %v2286
        %v2687 = vunpack.c.l.b16 %v2287
        %v2688 = vunpack.c.l.b16 %v2288
        %v2689 = vunpack.c.l.b16 %v2289
        %v2690 = vunpack.c.l.b16 %v2290
        %v2691 = vunpack.c.l.b16 %v2291
        %v2692 = vunpack.c.l.b16 %v2292
        %v2693 = vunpack.c.l.b16 %v2293
        %v2694 = vunpack.c.l.b16 %v2294
        %v2695 = vunpack.c.l.b16 %v2295
        %v2696 = vunpack.c.l.b16 %v2296
        %v2697 = vunpack.c.l.b16 %v2297
        %v2698 = vunpack.c.l.b16 %v2298
        %v2699 = vunpack.c.l.b16 %v2299
        %v2700 = vunpack.c.l.b16 %v2300
        %v2701 = vunpack.c.l.b16 %v2301
        %v2702 = vunpack.c.l.b16 %v2302
        %v2703 = vunpack.c.l.b16 %v2303
        %v2704 = vunpack.c.l.b16 %v2304
        %v2705 = vunpack.c.l.b16 %v2305
        %v2706 = vunpack.c.l.b16 %v2306
        %v2707 = vunpack.c.l.b16 %v2307
        %v2708 = vunpack.c.l.b16 %v2308
        %v2709 = vunpack.c.l.b16 %v2309
        %v2710 = vunpack.c.l.b16 %v2310
        %v2711 = vunpack.c.l.b16 %v2311
        %v2712 = vunpack.c.l.b16 %v2312
        %v2713 = vunpack.c.l.b16 %v2313
        %v2714 = vpack.c.b16 %v2571, %v2570
        %v2715 = vpack.c.b16 %v2573, %v2572
        %v2716 = vpack.c.b16 %v2575, %v2574
        %v2717 = vpack.c.b16 %v2577, %v2576
        %v2718 = vpack.c.b16 %v2579, %v2578
        %v2719 = vpack.c.b16 %v2581, %v2580
        %v2720 = vpack.c.b16 %v2583, %v2582
        %v2721 = vpack.c.b16 %v2585, %v2584
        %v2722 = vpack.c.b16 %v2587, %v2586
        %v2723 = vpack.c.b16 %v2589, %v2588
        %v2724 = vpack.c.b16 %v2591, %v2590
        %v2725 = vpack.c.b16 %v2593, %v2592
        %v2726 = vpack.c.b16 %v2595, %v2594
        %v2727 = vpack.c.b16 %v2597, %v2596
        %v2728 = vpack.c.b16 %v2599, %v2598
        %v2729 = vpack.c.b16 %v2601, %v2600
        %v2730 = vpack.c.b16 %v2603, %v2602
        %v2731 = vpack.c.b16 %v2605, %v2604
        %v2732 = vpack.c.b16 %v2607, %v2606
        %v2733 = vpack.c.b16 %v2609, %v2608
        %v2734 = vpack.c.b16 %v2611, %v2610
        %v2735 = vpack.c.b16 %v2613, %v2612
        %v2736 = vpack.c.b16 %v2615, %v2614
        %v2737 = vpack.c.b16 %v2617, %v2616
        %v2738 = vpack.c.b16 %v2619, %v2618
        %v2739 = vpack.c.b16 %v2621, %v2620
        %v2740 = vpack.c.b16 %v2623, %v2622
        %v2741 = vpack.c.b16 %v2625, %v2624
        %v2742 = vpack.c.b16 %v2627, %v2626
        %v2743 = vpack.c.b16 %v2629, %v2628
        %v2744 = vpack.c.b16 %v2631, %v2630
        %v2745 = vpack.c.b16 %v2633, %v2632
        %v2746 = vpack.c.b16 %v2635, %v2634
        %v2747 = vpack.c.b16 %v2637, %v2636
        %v2748 = vpack.c.b16 %v2639, %v2638
        %v2749 = vpack.c.b16 %v2641, %v2640
        %v2750 = vpack.c.b16 %v2643, %v2642
        %v2751 = vpack.c.b16 %v2645, %v2644
        %v2752 = vpack.c.b16 %v2647, %v2646
        %v2753 = vpack.c.b16 %v2649, %v2648
        %v2754 = vpack.c.b16 %v2651, %v2650
        %v2755 = vpack.c.b16 %v2653, %v2652
        %v2756 = vpack.c.b16 %v2655, %v2654
        %v2757 = vpack.c.b16 %v2657, %v2656
        %v2758 = vpack.c.b16 %v2659, %v2658
        %v2759 = vpack.c.b16 %v2661, %v2660
        %v2760 = vpack.c.b16 %v2663, %v2662
        %v2761 = vpack.c.b16 %v2665, %v2664
        %v2762 = vpack.c.b16 %v2667, %v2666
        %v2763 = vpack.c.b16 %v2669, %v2668
        %v2764 = vpack.c.b16 %v2671, %v2670
        %v2765 = vpack.c.b16 %v2673, %v2672
        %v2766 = vpack.c.b16 %v2675, %v2674
        %v2767 = vpack.c.b16 %v2677, %v2676
        %v2768 = vpack.c.b16 %v2679, %v2678
        %v2769 = vpack.c.b16 %v2681, %v2680
        %v2770 = vpack.c.b16 %v2683, %v2682
        %v2771 = vpack.c.b16 %v2685, %v2684
        %v2772 = vpack.c.b16 %v2687, %v2686
        %v2773 = vpack.c.b16 %v2689, %v2688
        %v2774 = vpack.c.b16 %v2691, %v2690
        %v2775 = vpack.c.b16 %v2693, %v2692
        %v2776 = vpack.c.b16 %v2695, %v2694
        %v2777 = vpack.c.b16 %v2697, %v2696
        %v2778 = vpack.c.b16 %v2699, %v2698
        %v2779 = vpack.c.b16 %v2701, %v2700
        %v2780 = vpack.c.b16 %v2703, %v2702
        %v2781 = vpack.c.b16 %v2705, %v2704
        %v2782 = vpack.c.b16 %v2707, %v2706
        %v2783 = vpack.c.b16 %v2709, %v2708
        %v2784 = vpack.c.b16 %v2711, %v2710
        %v2785 = vpack.c.b16 %v2713, %v2712
        %2858 = vmatprep.subr.bf16.mxu0 0
        %2859 = vmatpush1.bf16.msra.mxu0 %v2714
        %2860 = vmatprep.subr.bf16.mxu0 0
        %2861 = vmatpush1.bf16.msra.mxu0 %v2715
        %2862 = vmatprep.subr.bf16.mxu0 0
        %2863 = vmatpush1.bf16.msra.mxu0 %v2716
        %2864 = vmatprep.subr.bf16.mxu0 0
        %2865 = vmatpush1.bf16.msra.mxu0 %v2717
        %2866 = vmatprep.subr.bf16.mxu0 0
        %2867 = vmatpush1.bf16.msra.mxu0 %v2718
        %2868 = vmatprep.subr.bf16.mxu0 0
        %2869 = vmatpush1.bf16.msra.mxu0 %v2719
        %2870 = vmatprep.subr.bf16.mxu0 0
        %2871 = vmatpush1.bf16.msra.mxu0 %v2720
        %2872 = vmatprep.subr.bf16.mxu0 0
        %2873 = vmatpush1.bf16.msra.mxu0 %v2721
        %2874 = vmatprep.subr.bf16.mxu0 0
        %2875 = vmatpush1.bf16.msra.mxu0 %v2722
        %2876 = vmatprep.subr.bf16.mxu0 0
        %2877 = vmatpush1.bf16.msra.mxu0 %v2723
        %2878 = vmatprep.subr.bf16.mxu0 0
        %2879 = vmatpush1.bf16.msra.mxu0 %v2724
        %2880 = vmatprep.subr.bf16.mxu0 0
        %2881 = vmatpush1.bf16.msra.mxu0 %v2725
        %2882 = vmatprep.subr.bf16.mxu0 0
        %2883 = vmatpush1.bf16.msra.mxu0 %v2726
        %2884 = vmatprep.subr.bf16.mxu0 0
        %2885 = vmatpush1.bf16.msra.mxu0 %v2727
        %2886 = vmatprep.subr.bf16.mxu0 0
        %2887 = vmatpush1.bf16.msra.mxu0 %v2728
        %2888 = vmatprep.subr.bf16.mxu0 0
        %2889 = vmatpush1.bf16.msra.mxu0 %v2729
        %2890 = vmatprep.mubr.bf16.mxu0 %v1991
        %2891 = vmatmul.mubr.bf16.gmra.mrb[0].mxu0 %v1960
        %v2892 = vpop.f32.mrb[0].mxu0
        %v2893 = vadd.f32 %v2424, %v2892
        %v2894 = vpop.f32.mrb[0].mxu0
        %v2895 = vpop.f32.mrb[0].mxu0
        %v2896 = vadd.f32 %v2424, %v2895
        %v2897 = vpop.f32.mrb[0].mxu0
        %2898 = vmatprep.mubr.bf16.mxu0 %v2003
        %2899 = vmatmul.mubr.bf16.gmra.mrb[0].mxu0 %v1961
        %v2900 = vpop.f32.mrb[0].mxu0
        %v2901 = vadd.f32 %v2424, %v2900
        %v2902 = vpop.f32.mrb[0].mxu0
        %v2903 = vpop.f32.mrb[0].mxu0
        %v2904 = vadd.f32 %v2424, %v2903
        %v2905 = vpop.f32.mrb[0].mxu0
        %2906 = vmatprep.mubr.bf16.mxu0 %v2015
        %2907 = vmatmul.mubr.bf16.gmra.mrb[0].mxu0 %v1962
        %v2908 = vpop.f32.mrb[0].mxu0
        %v2909 = vadd.f32 %v2424, %v2908
        %v2910 = vpop.f32.mrb[0].mxu0
        %v2911 = vpop.f32.mrb[0].mxu0
        %v2912 = vadd.f32 %v2424, %v2911
        %v2913 = vpop.f32.mrb[0].mxu0
        %2914 = vmatprep.mubr.bf16.mxu0 %v2027
        %2915 = vmatmul.mubr.bf16.gmra.mrb[0].mxu0 %v1963
        %v2916 = vpop.f32.mrb[0].mxu0
        %v2917 = vadd.f32 %v2424, %v2916
        %v2918 = vpop.f32.mrb[0].mxu0
        %v2919 = vpop.f32.mrb[0].mxu0
        %v2920 = vadd.f32 %v2424, %v2919
        %v2921 = vpop.f32.mrb[0].mxu0
        %2922 = vmatprep.mubr.bf16.mxu0 %v2039
        %2923 = vmatmul.mubr.bf16.gmra.mrb[0].mxu0 %v1964
        %v2924 = vpop.f32.mrb[0].mxu0
        %v2925 = vadd.f32 %v2424, %v2924
        %v2926 = vpop.f32.mrb[0].mxu0
        %v2927 = vpop.f32.mrb[0].mxu0
        %v2928 = vadd.f32 %v2424, %v2927
        %v2929 = vpop.f32.mrb[0].mxu0
        %2930 = vmatprep.mubr.bf16.mxu0 %v2051
        %2931 = vmatmul.mubr.bf16.gmra.mrb[0].mxu0 %v1965
        %v2932 = vpop.f32.mrb[0].mxu0
        %v2933 = vadd.f32 %v2424, %v2932
        %v2934 = vpop.f32.mrb[0].mxu0
        %v2935 = vpop.f32.mrb[0].mxu0
        %v2936 = vadd.f32 %v2424, %v2935
        %v2937 = vpop.f32.mrb[0].mxu0
        %2938 = vmatprep.mubr.bf16.mxu0 %v2063
        %2939 = vmatmul.mubr.bf16.gmra.mrb[0].mxu0 %v1966
        %v2940 = vpop.f32.mrb[0].mxu0
        %v2941 = vadd.f32 %v2424, %v2940
        %v2942 = vpop.f32.mrb[0].mxu0
        %v2943 = vpop.f32.mrb[0].mxu0
        %v2944 = vadd.f32 %v2424, %v2943
        %v2945 = vpop.f32.mrb[0].mxu0
        %2946 = vmatprep.mubr.bf16.mxu0 %v2075
        %2947 = vmatmul.mubr.bf16.gmra.mrb[0].mxu0 %v1967
        %v2948 = vpop.f32.mrb[0].mxu0
        %v2949 = vadd.f32 %v2424, %v2948
        %v2950 = vpop.f32.mrb[0].mxu0
        %v2951 = vpop.f32.mrb[0].mxu0
        %v2952 = vadd.f32 %v2424, %v2951
        %v2953 = vpop.f32.mrb[0].mxu0
        %2954 = vdwg.mxu0
        %2955 = vmatprep.subr.bf16.mxu0 0
        %2956 = vmatpush1.bf16.msra.mxu0 %v2730
        %2957 = vmatprep.subr.bf16.mxu0 0
        %2958 = vmatpush1.bf16.msra.mxu0 %v2731
        %2959 = vmatprep.subr.bf16.mxu0 0
        %2960 = vmatpush1.bf16.msra.mxu0 %v2732
        %2961 = vmatprep.subr.bf16.mxu0 0
        %2962 = vmatpush1.bf16.msra.mxu0 %v2733
        %2963 = vmatprep.subr.bf16.mxu0 0
        %2964 = vmatpush1.bf16.msra.mxu0 %v2734
        %2965 = vmatprep.subr.bf16.mxu0 0
        %2966 = vmatpush1.bf16.msra.mxu0 %v2735
        %2967 = vmatprep.subr.bf16.mxu0 0
        %2968 = vmatpush1.bf16.msra.mxu0 %v2736
        %2969 = vmatprep.subr.bf16.mxu0 0
        %2970 = vmatpush1.bf16.msra.mxu0 %v2737
        %2971 = vmatprep.subr.bf16.mxu0 0
        %2972 = vmatpush1.bf16.msra.mxu0 %v2738
        %2973 = vmatprep.subr.bf16.mxu0 0
        %2974 = vmatpush1.bf16.msra.mxu0 %v2739
        %2975 = vmatprep.subr.bf16.mxu0 0
        %2976 = vmatpush1.bf16.msra.mxu0 %v2740
        %2977 = vmatprep.subr.bf16.mxu0 0
        %2978 = vmatpush1.bf16.msra.mxu0 %v2741
        %2979 = vmatprep.subr.bf16.mxu0 0
        %2980 = vmatpush1.bf16.msra.mxu0 %v2742
        %2981 = vmatprep.subr.bf16.mxu0 0
        %2982 = vmatpush1.bf16.msra.mxu0 %v2743
        %2983 = vmatprep.subr.bf16.mxu0 0
        %2984 = vmatpush1.bf16.msra.mxu0 %v2744
        %2985 = vmatprep.subr.bf16.mxu0 0
        %2986 = vmatpush1.bf16.msra.mxu0 %v2745
        %2987 = vmatprep.mubr.bf16.mxu0 %v1961
        %2988 = vmatmul.mubr.bf16.gmra.mrb[0].mxu0 %v2102
        %v2989 = vpop.f32.mrb[0].mxu0
        %v2990 = vadd.f32 %v2893, %v2989
        %v2991 = vpop.f32.mrb[0].mxu0
        %v2992 = vpop.f32.mrb[0].mxu0
        %v2993 = vadd.f32 %v2896, %v2992
        %v2994 = vpop.f32.mrb[0].mxu0
        %2995 = vmatprep.mubr.bf16.mxu0 %v1962
        %2996 = vmatmul.mubr.bf16.gmra.mrb[0].mxu0 %v2105
        %v2997 = vpop.f32.mrb[0].mxu0
        %v2998 = vadd.f32 %v2901, %v2997
        %v2999 = vpop.f32.mrb[0].mxu0
        %v3000 = vpop.f32.mrb[0].mxu0
        %v3001 = vadd.f32 %v2904, %v3000
        %v3002 = vpop.f32.mrb[0].mxu0
        %3003 = vmatprep.mubr.bf16.mxu0 %v1963
        %3004 = vmatmul.mubr.bf16.gmra.mrb[0].mxu0 %v2108
        %v3005 = vpop.f32.mrb[0].mxu0
        %v3006 = vadd.f32 %v2909, %v3005
        %v3007 = vpop.f32.mrb[0].mxu0
        %v3008 = vpop.f32.mrb[0].mxu0
        %v3009 = vadd.f32 %v2912, %v3008
        %v3010 = vpop.f32.mrb[0].mxu0
        %3011 = vmatprep.mubr.bf16.mxu0 %v1964
        %3012 = vmatmul.mubr.bf16.gmra.mrb[0].mxu0 %v2111
        %v3013 = vpop.f32.mrb[0].mxu0
        %v3014 = vadd.f32 %v2917, %v3013
        %v3015 = vpop.f32.mrb[0].mxu0
        %v3016 = vpop.f32.mrb[0].mxu0
        %v3017 = vadd.f32 %v2920, %v3016
        %v3018 = vpop.f32.mrb[0].mxu0
        %3019 = vmatprep.mubr.bf16.mxu0 %v1965
        %3020 = vmatmul.mubr.bf16.gmra.mrb[0].mxu0 %v2114
        %v3021 = vpop.f32.mrb[0].mxu0
        %v3022 = vadd.f32 %v2925, %v3021
        %v3023 = vpop.f32.mrb[0].mxu0
        %v3024 = vpop.f32.mrb[0].mxu0
        %v3025 = vadd.f32 %v2928, %v3024
        %v3026 = vpop.f32.mrb[0].mxu0
        %3027 = vmatprep.mubr.bf16.mxu0 %v1966
        %3028 = vmatmul.mubr.bf16.gmra.mrb[0].mxu0 %v2117
        %v3029 = vpop.f32.mrb[0].mxu0
        %v3030 = vadd.f32 %v2933, %v3029
        %v3031 = vpop.f32.mrb[0].mxu0
        %v3032 = vpop.f32.mrb[0].mxu0
        %v3033 = vadd.f32 %v2936, %v3032
        %v3034 = vpop.f32.mrb[0].mxu0
        %3035 = vmatprep.mubr.bf16.mxu0 %v1967
        %3036 = vmatmul.mubr.bf16.gmra.mrb[0].mxu0 %v2120
        %v3037 = vpop.f32.mrb[0].mxu0
        %v3038 = vadd.f32 %v2941, %v3037
        %v3039 = vpop.f32.mrb[0].mxu0
        %v3040 = vpop.f32.mrb[0].mxu0
        %v3041 = vadd.f32 %v2944, %v3040
        %v3042 = vpop.f32.mrb[0].mxu0
        %3043 = vmatprep.mubr.bf16.mxu0 %v1968
        %3044 = vmatmul.mubr.bf16.gmra.mrb[0].mxu0 %v2123
        %v3045 = vpop.f32.mrb[0].mxu0
        %v3046 = vadd.f32 %v2949, %v3045
        %v3047 = vpop.f32.mrb[0].mxu0
        %v3048 = vpop.f32.mrb[0].mxu0
        %v3049 = vadd.f32 %v2952, %v3048
        %v3050 = vpop.f32.mrb[0].mxu0
        %3051 = vdwg.mxu0
        %3052 = vmatprep.subr.bf16.mxu0 0
        %3053 = vmatpush1.bf16.msra.mxu0 %v2746
        %3054 = vmatprep.subr.bf16.mxu0 0
        %3055 = vmatpush1.bf16.msra.mxu0 %v2747
        %3056 = vmatprep.subr.bf16.mxu0 0
        %3057 = vmatpush1.bf16.msra.mxu0 %v2748
        %3058 = vmatprep.subr.bf16.mxu0 0
        %3059 = vmatpush1.bf16.msra.mxu0 %v2749
        %3060 = vmatprep.subr.bf16.mxu0 0
        %3061 = vmatpush1.bf16.msra.mxu0 %v2750
        %3062 = vmatprep.subr.bf16.mxu0 0
        %3063 = vmatpush1.bf16.msra.mxu0 %v2751
        %3064 = vmatprep.subr.bf16.mxu0 0
        %3065 = vmatpush1.bf16.msra.mxu0 %v2752
        %3066 = vmatprep.subr.bf16.mxu0 0
        %3067 = vmatpush1.bf16.msra.mxu0 %v2753
        %3068 = vmatprep.subr.bf16.mxu0 0
        %3069 = vmatpush1.bf16.msra.mxu0 %v2754
        %3070 = vmatprep.subr.bf16.mxu0 0
        %3071 = vmatpush1.bf16.msra.mxu0 %v2755
        %3072 = vmatprep.subr.bf16.mxu0 0
        %3073 = vmatpush1.bf16.msra.mxu0 %v2756
        %3074 = vmatprep.subr.bf16.mxu0 0
        %3075 = vmatpush1.bf16.msra.mxu0 %v2757
        %3076 = vmatprep.subr.bf16.mxu0 0
        %3077 = vmatpush1.bf16.msra.mxu0 %v2758
        %3078 = vmatprep.subr.bf16.mxu0 0
        %3079 = vmatpush1.bf16.msra.mxu0 %v2759
        %3080 = vmatprep.subr.bf16.mxu0 0
        %3081 = vmatpush1.bf16.msra.mxu0 %v2760
        %3082 = vmatprep.subr.bf16.mxu0 0
        %3083 = vmatpush1.bf16.msra.mxu0 %v2761
        %3084 = vmatprep.mubr.bf16.mxu0 %v2105
        %3085 = vmatmul.mubr.bf16.gmra.mrb[0].mxu0 %v2003
        %v3086 = vpop.f32.mrb[0].mxu0
        %v3087 = vadd.f32 %v2990, %v3086
        %v3088 = vpop.f32.mrb[0].mxu0
        %v3089 = vpop.f32.mrb[0].mxu0
        %v3090 = vadd.f32 %v2993, %v3089
        %v3091 = vpop.f32.mrb[0].mxu0
        %3092 = vmatprep.mubr.bf16.mxu0 %v2108
        %3093 = vmatmul.mubr.bf16.gmra.mrb[0].mxu0 %v2015
        %v3094 = vpop.f32.mrb[0].mxu0
        %v3095 = vadd.f32 %v2998, %v3094
        %v3096 = vpop.f32.mrb[0].mxu0
        %v3097 = vpop.f32.mrb[0].mxu0
        %v3098 = vadd.f32 %v3001, %v3097
        %v3099 = vpop.f32.mrb[0].mxu0
        %3100 = vmatprep.mubr.bf16.mxu0 %v2111
        %3101 = vmatmul.mubr.bf16.gmra.mrb[0].mxu0 %v2027
        %v3102 = vpop.f32.mrb[0].mxu0
        %v3103 = vadd.f32 %v3006, %v3102
        %v3104 = vpop.f32.mrb[0].mxu0
        %v3105 = vpop.f32.mrb[0].mxu0
        %v3106 = vadd.f32 %v3009, %v3105
        %v3107 = vpop.f32.mrb[0].mxu0
        %3108 = vmatprep.mubr.bf16.mxu0 %v2114
        %3109 = vmatmul.mubr.bf16.gmra.mrb[0].mxu0 %v2039
        %v3110 = vpop.f32.mrb[0].mxu0
        %v3111 = vadd.f32 %v3014, %v3110
        %v3112 = vpop.f32.mrb[0].mxu0
        %v3113 = vpop.f32.mrb[0].mxu0
        %v3114 = vadd.f32 %v3017, %v3113
        %v3115 = vpop.f32.mrb[0].mxu0
        %3116 = vmatprep.mubr.bf16.mxu0 %v2117
        %3117 = vmatmul.mubr.bf16.gmra.mrb[0].mxu0 %v2051
        %v3118 = vpop.f32.mrb[0].mxu0
        %v3119 = vadd.f32 %v3022, %v3118
        %v3120 = vpop.f32.mrb[0].mxu0
        %v3121 = vpop.f32.mrb[0].mxu0
        %v3122 = vadd.f32 %v3025, %v3121
        %v3123 = vpop.f32.mrb[0].mxu0
        %3124 = vmatprep.mubr.bf16.mxu0 %v2120
        %3125 = vmatmul.mubr.bf16.gmra.mrb[0].mxu0 %v2063
        %v3126 = vpop.f32.mrb[0].mxu0
        %v3127 = vadd.f32 %v3030, %v3126
        %v3128 = vpop.f32.mrb[0].mxu0
        %v3129 = vpop.f32.mrb[0].mxu0
        %v3130 = vadd.f32 %v3033, %v3129
        %v3131 = vpop.f32.mrb[0].mxu0
        %3132 = vmatprep.mubr.bf16.mxu0 %v2123
        %3133 = vmatmul.mubr.bf16.gmra.mrb[0].mxu0 %v2075
        %v3134 = vpop.f32.mrb[0].mxu0
        %v3135 = vadd.f32 %v3038, %v3134
        %v3136 = vpop.f32.mrb[0].mxu0
        %v3137 = vpop.f32.mrb[0].mxu0
        %v3138 = vadd.f32 %v3041, %v3137
        %v3139 = vpop.f32.mrb[0].mxu0
        %3140 = vmatprep.mubr.bf16.mxu0 %v2149
        %3141 = vmatmul.mubr.bf16.gmra.mrb[0].mxu0 %v2143
        %v3142 = vpop.f32.mrb[0].mxu0
        %v3143 = vadd.f32 %v3046, %v3142
        %v3144 = vpop.f32.mrb[0].mxu0
        %v3145 = vpop.f32.mrb[0].mxu0
        %v3146 = vadd.f32 %v3049, %v3145
        %v3147 = vpop.f32.mrb[0].mxu0
        %3148 = vdwg.mxu0
        %3149 = vmatprep.subr.bf16.mxu0 0
        %3150 = vmatpush1.bf16.msra.mxu0 %v2762
        %3151 = vmatprep.subr.bf16.mxu0 0
        %3152 = vmatpush1.bf16.msra.mxu0 %v2763
        %3153 = vmatprep.subr.bf16.mxu0 0
        %3154 = vmatpush1.bf16.msra.mxu0 %v2764
        %3155 = vmatprep.subr.bf16.mxu0 0
        %3156 = vmatpush1.bf16.msra.mxu0 %v2765
        %3157 = vmatprep.subr.bf16.mxu0 0
        %3158 = vmatpush1.bf16.msra.mxu0 %v2766
        %3159 = vmatprep.subr.bf16.mxu0 0
        %3160 = vmatpush1.bf16.msra.mxu0 %v2767
        %3161 = vmatprep.subr.bf16.mxu0 0
        %3162 = vmatpush1.bf16.msra.mxu0 %v2768
        %3163 = vmatprep.subr.bf16.mxu0 0
        %3164 = vmatpush1.bf16.msra.mxu0 %v2769
        %3165 = vmatprep.subr.bf16.mxu0 0
        %3166 = vmatpush1.bf16.msra.mxu0 %v2770
        %3167 = vmatprep.subr.bf16.mxu0 0
        %3168 = vmatpush1.bf16.msra.mxu0 %v2771
        %3169 = vmatprep.subr.bf16.mxu0 0
        %3170 = vmatpush1.bf16.msra.mxu0 %v2772
        %3171 = vmatprep.subr.bf16.mxu0 0
        %3172 = vmatpush1.bf16.msra.mxu0 %v2773
        %3173 = vmatprep.subr.bf16.mxu0 0
        %3174 = vmatpush1.bf16.msra.mxu0 %v2774
        %3175 = vmatprep.subr.bf16.mxu0 0
        %3176 = vmatpush1.bf16.msra.mxu0 %v2775
        %3177 = vmatprep.subr.bf16.mxu0 0
        %3178 = vmatpush1.bf16.msra.mxu0 %v2776
        %3179 = vmatprep.subr.bf16.mxu0 0
        %3180 = vmatpush1.bf16.msra.mxu0 %v2777
        %3181 = vmatprep.mubr.bf16.mxu0 %v2015
        %3182 = vmatmul.mubr.bf16.gmra.mrb[0].mxu0 %v1962
        %v3183 = vpop.f32.mrb[0].mxu0
        %v3184 = vadd.f32 %v3087, %v3183
        %v3185 = vpop.f32.mrb[0].mxu0
        %v3186 = vpop.f32.mrb[0].mxu0
        %v3187 = vadd.f32 %v3090, %v3186
        %v3188 = vpop.f32.mrb[0].mxu0
        %3189 = vmatprep.mubr.bf16.mxu0 %v2027
        %3190 = vmatmul.mubr.bf16.gmra.mrb[0].mxu0 %v1963
        %v3191 = vpop.f32.mrb[0].mxu0
        %v3192 = vadd.f32 %v3095, %v3191
        %v3193 = vpop.f32.mrb[0].mxu0
        %v3194 = vpop.f32.mrb[0].mxu0
        %v3195 = vadd.f32 %v3098, %v3194
        %v3196 = vpop.f32.mrb[0].mxu0
        %3197 = vmatprep.mubr.bf16.mxu0 %v2039
        %3198 = vmatmul.mubr.bf16.gmra.mrb[0].mxu0 %v1964
        %v3199 = vpop.f32.mrb[0].mxu0
        %v3200 = vadd.f32 %v3103, %v3199
        %v3201 = vpop.f32.mrb[0].mxu0
        %v3202 = vpop.f32.mrb[0].mxu0
        %v3203 = vadd.f32 %v3106, %v3202
        %v3204 = vpop.f32.mrb[0].mxu0
        %3205 = vmatprep.mubr.bf16.mxu0 %v2051
        %3206 = vmatmul.mubr.bf16.gmra.mrb[0].mxu0 %v1965
        %v3207 = vpop.f32.mrb[0].mxu0
        %v3208 = vadd.f32 %v3111, %v3207
        %v3209 = vpop.f32.mrb[0].mxu0
        %v3210 = vpop.f32.mrb[0].mxu0
        %v3211 = vadd.f32 %v3114, %v3210
        %v3212 = vpop.f32.mrb[0].mxu0
        %3213 = vmatprep.mubr.bf16.mxu0 %v2063
        %3214 = vmatmul.mubr.bf16.gmra.mrb[0].mxu0 %v1966
        %v3215 = vpop.f32.mrb[0].mxu0
        %v3216 = vadd.f32 %v3119, %v3215
        %v3217 = vpop.f32.mrb[0].mxu0
        %v3218 = vpop.f32.mrb[0].mxu0
        %v3219 = vadd.f32 %v3122, %v3218
        %v3220 = vpop.f32.mrb[0].mxu0
        %3221 = vmatprep.mubr.bf16.mxu0 %v2075
        %3222 = vmatmul.mubr.bf16.gmra.mrb[0].mxu0 %v1967
        %v3223 = vpop.f32.mrb[0].mxu0
        %v3224 = vadd.f32 %v3127, %v3223
        %v3225 = vpop.f32.mrb[0].mxu0
        %v3226 = vpop.f32.mrb[0].mxu0
        %v3227 = vadd.f32 %v3130, %v3226
        %v3228 = vpop.f32.mrb[0].mxu0
        %3229 = vmatprep.mubr.bf16.mxu0 %v2143
        %3230 = vmatmul.mubr.bf16.gmra.mrb[0].mxu0 %v1968
        %v3231 = vpop.f32.mrb[0].mxu0
        %v3232 = vadd.f32 %v3135, %v3231
        %v3233 = vpop.f32.mrb[0].mxu0
        %v3234 = vpop.f32.mrb[0].mxu0
        %v3235 = vadd.f32 %v3138, %v3234
        %v3236 = vpop.f32.mrb[0].mxu0
        %3237 = vmatprep.mubr.bf16.mxu0 %v2162
        %3238 = vmatmul.mubr.bf16.gmra.mrb[0].mxu0 %v1969
        %v3239 = vpop.f32.mrb[0].mxu0
        %v3240 = vadd.f32 %v3143, %v3239
        %v3241 = vpop.f32.mrb[0].mxu0
        %v3242 = vpop.f32.mrb[0].mxu0
        %v3243 = vadd.f32 %v3146, %v3242
        %v3244 = vpop.f32.mrb[0].mxu0
        %3245 = vdwg.mxu0
        %3246 = vmatprep.subr.bf16.mxu0 0
        %3247 = vmatpush1.bf16.msra.mxu0 %v2778
        %3248 = vmatprep.subr.bf16.mxu0 0
        %3249 = vmatpush1.bf16.msra.mxu0 %v2779
        %3250 = vmatprep.subr.bf16.mxu0 0
        %3251 = vmatpush1.bf16.msra.mxu0 %v2780
        %3252 = vmatprep.subr.bf16.mxu0 0
        %3253 = vmatpush1.bf16.msra.mxu0 %v2781
        %3254 = vmatprep.subr.bf16.mxu0 0
        %3255 = vmatpush1.bf16.msra.mxu0 %v2782
        %3256 = vmatprep.subr.bf16.mxu0 0
        %3257 = vmatpush1.bf16.msra.mxu0 %v2783
        %3258 = vmatprep.subr.bf16.mxu0 0
        %3259 = vmatpush1.bf16.msra.mxu0 %v2784
        %3260 = vmatprep.subr.bf16.mxu0 0
        %3261 = vmatpush1.bf16.msra.mxu0 %v2785
        %3262 = vmatprep.subr.bf16.mxu0 0
        %3263 = vmatpush1.bf16.msra.mxu0 0
        %3264 = vmatprep.subr.bf16.mxu0 0
        %3265 = vmatpush1.bf16.msra.mxu0 0
        %3266 = vmatprep.subr.bf16.mxu0 0
        %3267 = vmatpush1.bf16.msra.mxu0 0
        %3268 = vmatprep.subr.bf16.mxu0 0
        %3269 = vmatpush1.bf16.msra.mxu0 0
        %3270 = vmatprep.subr.bf16.mxu0 0
        %3271 = vmatpush1.bf16.msra.mxu0 0
        %3272 = vmatprep.subr.bf16.mxu0 0
        %3273 = vmatpush1.bf16.msra.mxu0 0
        %3274 = vmatprep.subr.bf16.mxu0 0
        %3275 = vmatpush1.bf16.msra.mxu0 0
        %3276 = vmatprep.subr.bf16.mxu0 0
        %3277 = vmatpush1.bf16.msra.mxu0 0
        %3278 = vmatprep.mubr.bf16.mxu0 0
        %3279 = vmatmul.mubr.bf16.gmra.mrb[0].mxu0 %v2108
        %v3280 = vpop.f32.mrb[0].mxu0
        %v3281 = vadd.f32 %v3184, %v3280
        %v3282 = vpop.f32.mrb[0].mxu0
        %v3283 = vpop.f32.mrb[0].mxu0
        %v3284 = vadd.f32 %v3187, %v3283
        %v3285 = vpop.f32.mrb[0].mxu0
        %3286 = vmatprep.mubr.bf16.mxu0 0
        %3287 = vmatmul.mubr.bf16.gmra.mrb[0].mxu0 %v2111
        %v3288 = vpop.f32.mrb[0].mxu0
        %v3289 = vadd.f32 %v3192, %v3288
        %v3290 = vpop.f32.mrb[0].mxu0
        %v3291 = vpop.f32.mrb[0].mxu0
        %v3292 = vadd.f32 %v3195, %v3291
        %v3293 = vpop.f32.mrb[0].mxu0
        %3294 = vmatprep.mubr.bf16.mxu0 0
        %3295 = vmatmul.mubr.bf16.gmra.mrb[0].mxu0 %v2114
        %v3296 = vpop.f32.mrb[0].mxu0
        %v3297 = vadd.f32 %v3200, %v3296
        %v3298 = vpop.f32.mrb[0].mxu0
        %v3299 = vpop.f32.mrb[0].mxu0
        %v3300 = vadd.f32 %v3203, %v3299
        %v3301 = vpop.f32.mrb[0].mxu0
        %3302 = vmatprep.mubr.bf16.mxu0 0
        %3303 = vmatmul.mubr.bf16.gmra.mrb[0].mxu0 %v2117
        %v3304 = vpop.f32.mrb[0].mxu0
        %v3305 = vadd.f32 %v3208, %v3304
        %v3306 = vpop.f32.mrb[0].mxu0
        %v3307 = vpop.f32.mrb[0].mxu0
        %v3308 = vadd.f32 %v3211, %v3307
        %v3309 = vpop.f32.mrb[0].mxu0
        %3310 = vmatprep.mubr.bf16.mxu0 0
        %3311 = vmatmul.mubr.bf16.gmra.mrb[0].mxu0 %v2120
        %v3312 = vpop.f32.mrb[0].mxu0
        %v3313 = vadd.f32 %v3216, %v3312
        %v3314 = vpop.f32.mrb[0].mxu0
        %v3315 = vpop.f32.mrb[0].mxu0
        %v3316 = vadd.f32 %v3219, %v3315
        %v3317 = vpop.f32.mrb[0].mxu0
        %3318 = vmatprep.mubr.bf16.mxu0 0
        %3319 = vmatmul.mubr.bf16.gmra.mrb[0].mxu0 %v2123
        %v3320 = vpop.f32.mrb[0].mxu0
        %v3321 = vadd.f32 %v3224, %v3320
        %v3322 = vpop.f32.mrb[0].mxu0
        %v3323 = vpop.f32.mrb[0].mxu0
        %v3324 = vadd.f32 %v3227, %v3323
        %v3325 = vpop.f32.mrb[0].mxu0
        %3326 = vmatprep.mubr.bf16.mxu0 0
        %3327 = vmatmul.mubr.bf16.gmra.mrb[0].mxu0 %v2149
        %v3328 = vpop.f32.mrb[0].mxu0
        %v3329 = vadd.f32 %v3232, %v3328
        %v3330 = vpop.f32.mrb[0].mxu0
        %v3331 = vpop.f32.mrb[0].mxu0
        %v3332 = vadd.f32 %v3235, %v3331
        %v3333 = vpop.f32.mrb[0].mxu0
        %3334 = vmatprep.mubr.bf16.mxu0 0
        %3335 = vmatmul.mubr.bf16.gmra.mrb[0].mxu0 %v2168
        %v3336 = vpop.f32.mrb[0].mxu0
        %v3337 = vadd.f32 %v3240, %v3336
        %v3338 = vpop.f32.mrb[0].mxu0
        %v3339 = vpop.f32.mrb[0].mxu0
        %v3340 = vadd.f32 %v3243, %v3339
        %v3341 = vpop.f32.mrb[0].mxu0
        %3342 = vdwg.mxu0
        %v3343 = vadd.f32 %v3281, %v2365
        %v3344 = vadd.f32 %v3284, %v2367
        %v3345 = vadd.f32 %v3289, %v2370
        %v3346 = vadd.f32 %v3292, %v2372
        %v3347 = vadd.f32 %v3297, %v2375
        %v3348 = vadd.f32 %v3300, %v2377
        %v3349 = vadd.f32 %v3305, %v2380
        %v3350 = vadd.f32 %v3308, %v2382
        %v3351 = vadd.f32 %v3313, %v2385
        %v3352 = vadd.f32 %v3316, %v2387
        %v3353 = vadd.f32 %v3321, %v2390
        %v3354 = vadd.f32 %v3324, %v2392
        %v3355 = vadd.f32 %v3329, %v2395
        %v3356 = vadd.f32 %v3332, %v2397
        %v3357 = vadd.f32 %v3337, %v2400
        %v3358 = vadd.f32 %v3340, %v2402
        %v3359 = vmax.f32 %v3343, 0.0
        %v3360 = vmax.f32 %v3344, 0.0
        %v3361 = vmax.f32 %v3345, 0.0
        %v3362 = vmax.f32 %v3346, 0.0
        %v3363 = vmax.f32 %v3347, 0.0
        %v3364 = vmax.f32 %v3348, 0.0
        %v3365 = vmax.f32 %v3349, 0.0
        %v3366 = vmax.f32 %v3350, 0.0
        %v3367 = vmax.f32 %v3351, 0.0
        %v3368 = vmax.f32 %v3352, 0.0
        %v3369 = vmax.f32 %v3353, 0.0
        %v3370 = vmax.f32 %v3354, 0.0
        %v3371 = vmax.f32 %v3355, 0.0
        %v3372 = vmax.f32 %v3356, 0.0
        %v3373 = vmax.f32 %v3357, 0.0
        %v3374 = vmax.f32 %v3358, 0.0
        %v3375 = vpack.c.bf16 %v3360, %v3359
        %v3376 = vpack.c.bf16 %v3362, %v3361
        %v3377 = vpack.c.bf16 %v3364, %v3363
        %v3378 = vpack.c.bf16 %v3366, %v3365
        %v3379 = vpack.c.bf16 %v3368, %v3367
        %v3380 = vpack.c.bf16 %v3370, %v3369
        %v3381 = vpack.c.bf16 %v3372, %v3371
        %v3382 = vpack.c.bf16 %v3374, %v3373
        %v3391 = vunpack.c.l.b16 %v3375
        %v3392 = vunpack.c.h.b16 %v3375
        %v3393 = vunpack.c.l.b16 %v3376
        %v3394 = vunpack.c.h.b16 %v3376
        %v3395 = vunpack.c.l.b16 %v3377
        %v3396 = vunpack.c.h.b16 %v3377
        %v3397 = vunpack.c.l.b16 %v3378
        %v3398 = vunpack.c.h.b16 %v3378
        %v3399 = vunpack.c.l.b16 %v3379
        %v3400 = vunpack.c.h.b16 %v3379
        %v3401 = vunpack.c.l.b16 %v3380
        %v3402 = vunpack.c.h.b16 %v3380
        %v3403 = vunpack.c.l.b16 %v3381
        %v3404 = vunpack.c.h.b16 %v3381
        %v3405 = vunpack.c.l.b16 %v3382
        %v3406 = vunpack.c.h.b16 %v3382
        %v3407 = vpack.c.b16 %v3391, %v3391
        %v3408 = vpack.c.b16 %v3392, %v3392
        %v3409 = vpack.c.b16 %v3393, %v3393
        %v3410 = vpack.c.b16 %v3394, %v3394
        %v3411 = vpack.c.b16 %v3395, %v3395
        %v3412 = vpack.c.b16 %v3396, %v3396
        %v3413 = vpack.c.b16 %v3397, %v3397
        %v3414 = vpack.c.b16 %v3398, %v3398
        %v3415 = vpack.c.b16 %v3399, %v3399
        %v3416 = vpack.c.b16 %v3400, %v3400
        %v3417 = vpack.c.b16 %v3401, %v3401
        %v3418 = vpack.c.b16 %v3402, %v3402
        %v3419 = vpack.c.b16 %v3403, %v3403
        %v3420 = vpack.c.b16 %v3404, %v3404
        %v3421 = vpack.c.b16 %v3405, %v3405
        %v3422 = vpack.c.b16 %v3406, %v3406
        %3439 = vst [vmem:[%s246] sm:$0xf] %v3407
        %3440 = vst [vmem:[%s246 + $0x4] sm:$0xf] %v3408
        %3441 = vst [vmem:[%s246 + $0x8] sm:$0xf] %v3409
        %3442 = vst [vmem:[%s246 + $0xc] sm:$0xf] %v3410
        %3443 = vst [vmem:[%s246 + $0x10] sm:$0xf] %v3411
        %3444 = vst [vmem:[%s246 + $0x14] sm:$0xf] %v3412
        %3445 = vst [vmem:[%s246 + $0x18] sm:$0xf] %v3413
        %3446 = vst [vmem:[%s246 + $0x1c] sm:$0xf] %v3414
        %3447 = vst [vmem:[%s246 + $0x20] sm:$0xf] %v3415
        %3448 = vst [vmem:[%s246 + $0x24] sm:$0xf] %v3416
        %3449 = vst [vmem:[%s246 + $0x28] sm:$0xf] %v3417
        %3450 = vst [vmem:[%s246 + $0x2c] sm:$0xf] %v3418
        %3451 = vst [vmem:[%s246 + $0x30] sm:$0xf] %v3419
        %3452 = vst [vmem:[%s246 + $0x34] sm:$0xf] %v3420
        %3453 = vst [vmem:[%s246 + $0x38] sm:$0xf] %v3421
        %3454 = vst [vmem:[%s246 + $0x3c] sm:$0xf] %v3422
        %s3455 = sand.u32 %s152, 1
        %s3456 = scalar_lea.sflag [#allocation4], %s3455
        %s3457 = sand.u32 %s152, 1
        %s3458 = smul.addr %s3457, 64
        %s3459 = scalar_lea.vmem [#allocation5], %s3458
        // Predicated region
        $region45: #{tpu_custom_call.1} parent=39 // pred_check
          %p3460 = pneg %p162
        $region46: #{tpu_custom_call.1} parent=39 // pred_check_branch
          %3462 = sbr.rel (%p3460) target = $region48
        $region47: #{tpu_custom_call.1} parent=39 // pred_region
          %s3463 = smul.u32 8, %s25
          %s3465 = ssub.s32 1024, 1024
          %3466 = vsyncadd %s3456, %s3465
          %s3467 = smul.addr %s3463, 2
          %s3468 = smul.addr %s24, 32
          %s3469 = sadd.s32 %s3467, %s3468
          %s3470 = smul.addr %s3469, 64
          %s3471 = scalar_lea.hbm %s5, %s3470
          %s3472 = sshll.u32 %s3459, 4
          %s3473 = int_to_ptr.vmem [resolvable:$true] %s3472
          %3478 = dma.vmem_to_hbm [thread:$0]  %s3473, 1024, %s3471, %s3456, 64, 64, 4
        $region48: #{tpu_custom_call.1} parent=39 // pred_fallthru
          _
      $region40: #{tpu_custom_call.1} parent=5 // pred_fallthru
        _
      %p3479 = scmp.le.s32.totalorder 2, %s15
      // Predicated region
      $region49: #{tpu_custom_call.1} parent=5 // pred_check
        %p3480 = pneg %p3479
      $region50: #{tpu_custom_call.1} parent=5 // pred_check_branch
        %3482 = sbr.rel (%p3480) target = $region52
      $region51: #{tpu_custom_call.1} parent=5 // pred_region
        %s3483 = ssub.s32 %s15, 2
        // Predicated region
        $region53: #{tpu_custom_call.1} parent=51 // pred_check
          %p3484 = pneg %p168
        $region54: #{tpu_custom_call.1} parent=51 // pred_check_branch
          %3486 = sbr.rel (%p3484) target = $region56
        $region55: #{tpu_custom_call.1} parent=51 // pred_region
          %s3487 = sand.u32 %s153, 1
          %s3488 = scalar_lea.sflag [#allocation4], %s3487
          %s3489 = sand.u32 %s153, 1
          %s3490 = smul.addr %s3489, 64
          %s3491 = scalar_lea.vmem [#allocation5], %s3490
          %3492 = dma.done %s3488, 1024
        $region56: #{tpu_custom_call.1} parent=51 // pred_fallthru
          _
      $region52: #{tpu_custom_call.1} parent=5 // pred_fallthru
        _
    $region6: #{tpu_custom_call.1} parent=1 // loop_footer
      %s19 = sadd.s32 1, %s15
    $region7: #{tpu_custom_call.1} parent=1 // loop_footer_branch
      %14 = sbr.rel target = $region3
    $region8: #{tpu_custom_call.1} parent=1 // loop_exit
      _
    %3493 = vsyncpa [#allocation3], 1
    %s3494 = scalar_lea.sflag [#allocation3], 1
    %3495 = vsyncpa %s3494, 1
    %3496 = vsyncpa [#allocation4], 1
    %s3497 = scalar_lea.sflag [#allocation4], 1
    %3498 = vsyncpa %s3497, 1

// kernel: tpu_custom_call.1
$region0: #{tpu_custom_call.1}
  #allocation0 [shape = 'u32[]', space=smem, size = 0x4, offset = 0x4, fixed_abs, tag = 'smem constant byte address 0x4 - core index']
  #allocation1 [shape = 'u32[144,128]{1,0:T(1,128)}', space=vmem, size = 0x12000, scoped, tag = 'internal scratch']
  %s0 = inlined_call_operand.vmem [shape: bf16[2,20,18,128], index: 0, kind: input, shape index: {}]
  %s1 = inlined_call_operand.vmem [shape: bf16[1152,128], index: 1, kind: input, shape index: {}]
  %s2 = inlined_call_operand.vmem [shape: f32[1,128], index: 2, kind: input, shape index: {}]
  %s3 = inlined_call_operand.hbm [shape: bf16[1152,128], index: 3, kind: input, shape index: {}]
  %s4 = inlined_call_operand.vmem [shape: f32[1,128], index: 4, kind: input, shape index: {}]
  %s5 = inlined_call_operand.hbm [shape: bf16[2,16,16,128], index: 5, kind: output, shape index: {}]
  %s6 = sld [smem:[#allocation0]]
  $region57: #{tpu_custom_call.1} parent=0
    _
  %s8 = ssub.s32 1, %s6
  %s9 = scalar_select 0, %s8, %s6
  $region1: #{tpu_custom_call.1} parent=0
    #allocation2 [shape = 'u8[294912]{0}', space=vmem, size = 0x48000, scoped, tag = 'input window, operand 3, single buffered']
    #allocation3 [shape = 's32[2]{0}', space=sflag, size = 0x8, scoped, tag = 'scoped memory for tpu_custom_call.1']
    #allocation4 [shape = 's32[2]{0}', space=sflag, size = 0x8, scoped, tag = 'scoped memory for tpu_custom_call.1']
    #allocation5 [shape = 'u8[65536]{0}', space=vmem, size = 0x10000, scoped, tag = 'output window, operand 0']
    %10 = vsyncpa [#allocation3], 0
    %11 = vsyncpa [#allocation4], 0
    %s12 = scalar_lea.sflag [#allocation4], 1
    %13 = vsyncpa %s12, 0
    loop: start=0, step=1, limit=6
    $region2: #{tpu_custom_call.1} parent=1 // loop_pre_header
      _
    $region3: #{tpu_custom_call.1} parent=1 // loop_header
      %s15 = sphi 0, %s19
      %p16 = scmp.ge.s32.totalorder %s15, 6
      %s22 = sphi 0, %s34
      %s23 = sphi 0, %s30
      %s24 = sphi 0, %s22
      %s25 = sphi 0, %s23
      %s26 = sphi 0, %s24
      %s27 = sphi 0, %s25
      %s37 = sphi 0, %s39
      %s40 = sphi 0, %s37
      %s41 = sphi 0, %s40
      %s57 = sphi 0, %s41
      %s61 = sphi 0, %s61
      %s63 = sphi 0, %s61
      %s64 = sphi 0, %s63
      %s78 = sphi 0, %s64
      %s82 = sphi 0, %s82
      %s84 = sphi 0, %s82
      %s85 = sphi 0, %s84
      %s99 = sphi 0, %s85
      %s103 = sphi 0, %s103
      %s105 = sphi 0, %s103
      %s106 = sphi 0, %s105
      %s120 = sphi 0, %s106
      %s124 = sphi 0, %s124
      %s126 = sphi 0, %s124
      %s127 = sphi 0, %s126
      %s141 = sphi 0, %s127
      %s149 = sphi 0, %s151
      %s152 = sphi 0, %s149
      %s153 = sphi 0, %s152
      %s169 = sphi 0, %s153
    $region4: #{tpu_custom_call.1} parent=1 // loop_header_branch
      %18 = sbr.rel (%p16) target = $region8
    $region5: #{tpu_custom_call.1} parent=1 // loop_body
      %s20 = ssub.s32 %s15, 1
      %s21 = ssub.s32 %s15, 2
      %s28 = sadd.s32 1, %s23
      %p29 = scmp.ge.s32.totalorder %s28, 2
      %s30 = scalar_select %p29, 0, %s28
      %s31 = sadd.s32 1, %s22
      %s32 = scalar_select %p29, %s31, %s22
      %p33 = scmp.ge.s32.totalorder %s32, 2
      %s34 = scalar_select %p33, 0, %s32
      %s35 = ssub.s32 %s22, %s34
      %p36 = scmp.eq.s32.totalorder %s35, 0
      %s38 = sadd.s32 %s37, 1
      %s39 = scalar_select %p36, %s37, %s38
      %p42 = pneg %p36
      %p43 = scmp.eq.s32.totalorder %s15, 3
      %p44 = por %p42, %p43
      %p45 = scmp.ne.s32.totalorder %s37, %s40
      %p46 = scmp.eq.s32.totalorder %s15, 0
      %p47 = por %p45, %p46
      %p48 = scmp.ne.s32.totalorder %s37, %s40
      %p49 = scmp.eq.s32.totalorder %s20, 3
      %p50 = por %p48, %p49
      %p51 = scmp.ne.s32.totalorder %s40, %s41
      %p52 = scmp.eq.s32.totalorder %s20, 0
      %p53 = por %p51, %p52
      %p54 = scmp.ne.s32.totalorder %s40, %s41
      %p55 = scmp.eq.s32.totalorder %s21, 3
      %p56 = por %p54, %p55
      %p58 = scmp.ne.s32.totalorder %s41, %s57
      %p59 = scmp.eq.s32.totalorder %s21, 0
      %p60 = por %p58, %p59
      %s62 = sadd.s32 %s61, 1
      %p65 = scmp.eq.s32.totalorder %s15, 3
      %p66 = scmp.ne.s32.totalorder %s61, %s63
      %p67 = scmp.eq.s32.totalorder %s15, 0
      %p68 = por %p66, %p67
      %p69 = scmp.ne.s32.totalorder %s61, %s63
      %p70 = scmp.eq.s32.totalorder %s20, 3
      %p71 = por %p69, %p70
      %p72 = scmp.ne.s32.totalorder %s63, %s64
      %p73 = scmp.eq.s32.totalorder %s20, 0
      %p74 = por %p72, %p73
      %p75 = scmp.ne.s32.totalorder %s63, %s64
      %p76 = scmp.eq.s32.totalorder %s21, 3
      %p77 = por %p75, %p76
      %p79 = scmp.ne.s32.totalorder %s64, %s78
      %p80 = scmp.eq.s32.totalorder %s21, 0
      %p81 = por %p79, %p80
      %s83 = sadd.s32 %s82, 1
      %p86 = scmp.eq.s32.totalorder %s15, 3
      %p87 = scmp.ne.s32.totalorder %s82, %s84
      %p88 = scmp.eq.s32.totalorder %s15, 0
      %p89 = por %p87, %p88
      %p90 = scmp.ne.s32.totalorder %s82, %s84
      %p91 = scmp.eq.s32.totalorder %s20, 3
      %p92 = por %p90, %p91
      %p93 = scmp.ne.s32.totalorder %s84, %s85
      %p94 = scmp.eq.s32.totalorder %s20, 0
      %p95 = por %p93, %p94
      %p96 = scmp.ne.s32.totalorder %s84, %s85
      %p97 = scmp.eq.s32.totalorder %s21, 3
      %p98 = por %p96, %p97
      %p100 = scmp.ne.s32.totalorder %s85, %s99
      %p101 = scmp.eq.s32.totalorder %s21, 0
      %p102 = por %p100, %p101
      %s104 = sadd.s32 %s103, 1
      %p107 = scmp.eq.s32.totalorder %s15, 3
      %p108 = scmp.ne.s32.totalorder %s103, %s105
      %p109 = scmp.eq.s32.totalorder %s15, 0
      %p110 = por %p108, %p109
      %p111 = scmp.ne.s32.totalorder %s103, %s105
      %p112 = scmp.eq.s32.totalorder %s20, 3
      %p113 = por %p111, %p112
      %p114 = scmp.ne.s32.totalorder %s105, %s106
      %p115 = scmp.eq.s32.totalorder %s20, 0
      %p116 = por %p114, %p115
      %p117 = scmp.ne.s32.totalorder %s105, %s106
      %p118 = scmp.eq.s32.totalorder %s21, 3
      %p119 = por %p117, %p118
      %p121 = scmp.ne.s32.totalorder %s106, %s120
      %p122 = scmp.eq.s32.totalorder %s21, 0
      %p123 = por %p121, %p122
      %s125 = sadd.s32 %s124, 1
      %p128 = scmp.eq.s32.totalorder %s15, 3
      %p129 = scmp.ne.s32.totalorder %s124, %s126
      %p130 = scmp.eq.s32.totalorder %s15, 0
      %p131 = por %p129, %p130
      %p132 = scmp.ne.s32.totalorder %s124, %s126
      %p133 = scmp.eq.s32.totalorder %s20, 3
      %p134 = por %p132, %p133
      %p135 = scmp.ne.s32.totalorder %s126, %s127
      %p136 = scmp.eq.s32.totalorder %s20, 0
      %p137 = por %p135, %p136
      %p138 = scmp.ne.s32.totalorder %s126, %s127
      %p139 = scmp.eq.s32.totalorder %s21, 3
      %p140 = por %p138, %p139
      %p142 = scmp.ne.s32.totalorder %s127, %s141
      %p143 = scmp.eq.s32.totalorder %s21, 0
      %p144 = por %p142, %p143
      %s145 = ssub.s32 %s22, %s34
      %s146 = ssub.s32 %s23, %s30
      %s147 = sor.u32 %s145, %s146
      %p148 = scmp.eq.s32.totalorder %s147, 0
      %s150 = sadd.s32 %s149, 1
      %s151 = scalar_select %p148, %s149, %s150
      %p154 = pneg %p148
      %p155 = scmp.eq.s32.totalorder %s15, 3
      %p156 = por %p154, %p155
      %p157 = scmp.ne.s32.totalorder %s149, %s152
      %p158 = scmp.eq.s32.totalorder %s15, 0
      %p159 = por %p157, %p158
      %p160 = scmp.ne.s32.totalorder %s149, %s152
      %p161 = scmp.eq.s32.totalorder %s20, 3
      %p162 = por %p160, %p161
      %p163 = scmp.ne.s32.totalorder %s152, %s153
      %p164 = scmp.eq.s32.totalorder %s20, 0
      %p165 = por %p163, %p164
      %p166 = scmp.ne.s32.totalorder %s152, %s153
      %p167 = scmp.eq.s32.totalorder %s21, 3
      %p168 = por %p166, %p167
      %p170 = scmp.ne.s32.totalorder %s153, %s169
      %p171 = scmp.eq.s32.totalorder %s21, 0
      %p172 = por %p170, %p171
      %p173 = scmp.le.s32.totalorder 1, %s15
      %p174 = scmp.lt.s32.totalorder %s15, 5
      %p175 = pnand %p173, %p174
      %p176 = pneg %p175
      // Predicated region
      $region9: #{tpu_custom_call.1} parent=5 // pred_check
        _
      $region10: #{tpu_custom_call.1} parent=5 // pred_check_branch
        %178 = sbr.rel (%p175) target = $region12
      $region11: #{tpu_custom_call.1} parent=5 // pred_region
        %s179 = ssub.s32 %s15, 1
        // Predicated region
        $region13: #{tpu_custom_call.1} parent=11 // pred_check
          %p180 = pneg %p74
        $region14: #{tpu_custom_call.1} parent=11 // pred_check_branch
          %182 = sbr.rel (%p180) target = $region16
        $region15: #{tpu_custom_call.1} parent=11 // pred_region
          _
        $region16: #{tpu_custom_call.1} parent=11 // pred_fallthru
          _
        // Predicated region
        $region17: #{tpu_custom_call.1} parent=11 // pred_check
          %p183 = pneg %p95
        $region18: #{tpu_custom_call.1} parent=11 // pred_check_branch
          %185 = sbr.rel (%p183) target = $region20
        $region19: #{tpu_custom_call.1} parent=11 // pred_region
          _
        $region20: #{tpu_custom_call.1} parent=11 // pred_fallthru
          _
        // Predicated region
        $region21: #{tpu_custom_call.1} parent=11 // pred_check
          %p186 = pneg %p116
        $region22: #{tpu_custom_call.1} parent=11 // pred_check_branch
          %188 = sbr.rel (%p186) target = $region24
        $region23: #{tpu_custom_call.1} parent=11 // pred_region
          %s190 = ssub.s32 9216, 9216
          %191 = vsyncadd [#allocation3], %s190
          %s192 = sshll.u32 [#allocation2], 4
          %s193 = int_to_ptr.vmem [resolvable:$true] %s192
          %198 = dma.hbm_to_vmem [thread:$0]  %s3, 9216, %s193, [#allocation3], 64, 64, 4
        $region24: #{tpu_custom_call.1} parent=11 // pred_fallthru
          _
        // Predicated region
        $region25: #{tpu_custom_call.1} parent=11 // pred_check
          %p199 = pneg %p137
        $region26: #{tpu_custom_call.1} parent=11 // pred_check_branch
          %201 = sbr.rel (%p199) target = $region28
        $region27: #{tpu_custom_call.1} parent=11 // pred_region
          _
        $region28: #{tpu_custom_call.1} parent=11 // pred_fallthru
          _
      $region12: #{tpu_custom_call.1} parent=5 // pred_fallthru
        _
      %p202 = scmp.lt.s32.totalorder %s15, 4
      // Predicated region
      $region29: #{tpu_custom_call.1} parent=5 // pred_check
        %p203 = pneg %p202
      $region30: #{tpu_custom_call.1} parent=5 // pred_check_branch
        %205 = sbr.rel (%p203) target = $region32
      $region31: #{tpu_custom_call.1} parent=5 // pred_region
        // Predicated region
        $region33: #{tpu_custom_call.1} parent=31 // pred_check
          %p206 = pneg %p47
        $region34: #{tpu_custom_call.1} parent=31 // pred_check_branch
          %208 = sbr.rel (%p206) target = $region36
        $region35: #{tpu_custom_call.1} parent=31 // pred_region
          %p209 = scmp.lt.s32.totalorder %s22, 1
          %s210 = scalar_select %p209, %s22, 1
          %s211 = smul.addr %s210, 60
          %s212 = smul.addr %s211, 4
          %s213 = scalar_lea.vmem %s0, %s212
        $region36: #{tpu_custom_call.1} parent=31 // pred_fallthru
          _
      $region32: #{tpu_custom_call.1} parent=5 // pred_fallthru
        _
      %p214 = scmp.le.s32.totalorder 1, %s15
      %p215 = scmp.lt.s32.totalorder %s15, 5
      %p216 = pnand %p214, %p215
      %p217 = pneg %p216
      // Predicated region
      $region37: #{tpu_custom_call.1} parent=5 // pred_check
        _
      $region38: #{tpu_custom_call.1} parent=5 // pred_check_branch
        %219 = sbr.rel (%p216) target = $region40
      $region39: #{tpu_custom_call.1} parent=5 // pred_region
        %s220 = ssub.s32 %s15, 1
        // Predicated region
        $region41: #{tpu_custom_call.1} parent=39 // pred_check
          %p221 = pneg %p116
        $region42: #{tpu_custom_call.1} parent=39 // pred_check_branch
          %223 = sbr.rel (%p221) target = $region44
        $region43: #{tpu_custom_call.1} parent=39 // pred_region
          %224 = dma.done [#allocation3], 9216
        $region44: #{tpu_custom_call.1} parent=39 // pred_fallthru
          _
        %p225 = scmp.lt.s32.totalorder %s24, 1
        %s226 = scalar_select %p225, %s24, 1
        %s227 = smul.addr %s226, 60
        %s228 = smul.addr %s227, 4
        %s229 = scalar_lea.vmem %s0, %s228
        %p230 = pneg %p53
        %p231 = pneg %p50
        %p232 = pneg %p74
        %p233 = pneg %p71
        %p234 = pneg %p95
        %p235 = pneg %p92
        %p236 = pneg %p116
        %p237 = pneg %p113
        %p238 = pneg %p137
        %p239 = pneg %p134
        %p240 = pneg %p165
        %p241 = pneg %p162
        %s242 = sand.u32 %s152, 1
        %s243 = scalar_lea.sflag [#allocation4], %s242
        %s244 = sand.u32 %s152, 1
        %s245 = smul.addr %s244, 64
        %s246 = scalar_lea.vmem [#allocation5], %s245
        %p247 = scmp.lt.s32.totalorder %s24, 1
        %s248 = scalar_select %p247, %s24, 1
        %s249 = smul.addr %s248, 60
        %s250 = smul.addr %s249, 4
        %s251 = scalar_lea.vmem %s0, %s250
        %s252 = smul.u32 8, %s25
        %s254 = smul.u32 %s25, 8
        %s255 = smul.u32 %s254, 3
        %s256 = smul.addr %s255, 4
        %s257 = scalar_lea.vmem %s251, %s256
        %v258 = vld [vmem:[%s257] sm:$0xf]
        %v259 = vld [vmem:[%s257 + $0x4] sm:$0xf]
        %v260 = vld [vmem:[%s257 + $0x8] sm:$0x1]
        %v261 = vld [vmem:[%s257 + $0xc] sm:$0xf]
        %v262 = vld [vmem:[%s257 + $0x10] sm:$0xf]
        %v263 = vld [vmem:[%s257 + $0x14] sm:$0x1]
        %v264 = vld [vmem:[%s257 + $0x18] sm:$0xf]
        %v265 = vld [vmem:[%s257 + $0x1c] sm:$0xf]
        %v266 = vld [vmem:[%s257 + $0x20] sm:$0x1]
        %v267 = vld [vmem:[%s257 + $0x24] sm:$0xf]
        %v268 = vld [vmem:[%s257 + $0x28] sm:$0xf]
        %v269 = vld [vmem:[%s257 + $0x2c] sm:$0x1]
        %v270 = vld [vmem:[%s257 + $0x30] sm:$0xf]
        %v271 = vld [vmem:[%s257 + $0x34] sm:$0xf]
        %v272 = vld [vmem:[%s257 + $0x38] sm:$0x1]
        %v273 = vld [vmem:[%s257 + $0x3c] sm:$0xf]
        %v274 = vld [vmem:[%s257 + $0x40] sm:$0xf]
        %v275 = vld [vmem:[%s257 + $0x44] sm:$0x1]
        %v276 = vld [vmem:[%s257 + $0x48] sm:$0xf]
        %v277 = vld [vmem:[%s257 + $0x4c] sm:$0xf]
        %v278 = vld [vmem:[%s257 + $0x50] sm:$0x1]
        %v279 = vld [vmem:[%s257 + $0x54] sm:$0xf]
        %v280 = vld [vmem:[%s257 + $0x58] sm:$0xf]
        %v281 = vld [vmem:[%s257 + $0x5c] sm:$0x1]
        %v282 = vld [vmem:[%s257 + $0x60] sm:$0xf]
        %v283 = vld [vmem:[%s257 + $0x64] sm:$0xf]
        %v284 = vld [vmem:[%s257 + $0x68] sm:$0x1]
        %v285 = vld [vmem:[%s257 + $0x6c] sm:$0xf]
        %v286 = vld [vmem:[%s257 + $0x70] sm:$0xf]
        %v287 = vld [vmem:[%s257 + $0x74] sm:$0x1]
        %v288 = vld [vmem:[%s257 + $0x78] sm:$0xf]
        %v289 = vld [vmem:[%s257 + $0x7c] sm:$0xf]
        %v290 = vld [vmem:[%s257 + $0x80] sm:$0x1]
        %v291 = vld [vmem:[%s257 + $0x84] sm:$0xf]
        %v292 = vld [vmem:[%s257 + $0x88] sm:$0xf]
        %v293 = vld [vmem:[%s257 + $0x8c] sm:$0x1]
        %v314 = vunpack.c.l.b16 %v258
        %v315 = vunpack.c.l.b16 %v259
        %v316 = vunpack.c.l.b16 %v261
        %v317 = vunpack.c.l.b16 %v262
        %v318 = vunpack.c.l.b16 %v264
        %v319 = vunpack.c.l.b16 %v265
        %v320 = vunpack.c.l.b16 %v267
        %v321 = vunpack.c.l.b16 %v268
        %v322 = vunpack.c.l.b16 %v270
        %v323 = vunpack.c.l.b16 %v271
        %v324 = vunpack.c.l.b16 %v273
        %v325 = vunpack.c.l.b16 %v274
        %v326 = vunpack.c.l.b16 %v276
        %v327 = vunpack.c.l.b16 %v277
        %v328 = vunpack.c.l.b16 %v279
        %v329 = vunpack.c.l.b16 %v280
        %v330 = vunpack.c.l.b16 %v282
        %v331 = vunpack.c.l.b16 %v283
        %v332 = vunpack.c.l.b16 %v285
        %v333 = vunpack.c.l.b16 %v286
        %v334 = vpack.c.b16 %v315, %v314
        %v335 = vpack.c.b16 %v317, %v316
        %v336 = vpack.c.b16 %v319, %v318
        %v337 = vpack.c.b16 %v321, %v320
        %v338 = vpack.c.b16 %v323, %v322
        %v339 = vpack.c.b16 %v325, %v324
        %v340 = vpack.c.b16 %v327, %v326
        %v341 = vpack.c.b16 %v329, %v328
        %v342 = vpack.c.b16 %v331, %v330
        %v343 = vpack.c.b16 %v333, %v332
        %v364 = vunpack.c.l.b16 %v260
        %v365 = vunpack.c.l.b16 %v263
        %v366 = vunpack.c.l.b16 %v266
        %v367 = vunpack.c.l.b16 %v269
        %v368 = vunpack.c.l.b16 %v272
        %v369 = vunpack.c.l.b16 %v275
        %v370 = vunpack.c.l.b16 %v278
        %v371 = vunpack.c.l.b16 %v281
        %v372 = vunpack.c.l.b16 %v284
        %v373 = vunpack.c.l.b16 %v287
        %v374 = vpack.c.b16 %v364, %v364
        %v375 = vpack.c.b16 %v365, %v365
        %v376 = vpack.c.b16 %v366, %v366
        %v377 = vpack.c.b16 %v367, %v367
        %v378 = vpack.c.b16 %v368, %v368
        %v379 = vpack.c.b16 %v369, %v369
        %v380 = vpack.c.b16 %v370, %v370
        %v381 = vpack.c.b16 %v371, %v371
        %v382 = vpack.c.b16 %v372, %v372
        %v383 = vpack.c.b16 %v373, %v373
        %vm384 = vsmask.f32 7424
        %v386 = vshrl.u32 %v334, 16
        %v388 = vshll.u32 %v334, 16
        %v390 = vrot.slane %v388, 1
        %v391 = vor.u32 %v386, %v390
        %v393 = vshll.u32 %v374, 16
        %v395 = vrot.slane %v393, 1
        %v396 = vsel %vm384, %v391, %v395
        %v398 = vshrl.u32 %v335, 16
        %v400 = vshll.u32 %v335, 16
        %v402 = vrot.slane %v400, 1
        %v403 = vor.u32 %v398, %v402
        %v405 = vshll.u32 %v375, 16
        %v407 = vrot.slane %v405, 1
        %v408 = vsel %vm384, %v403, %v407
        %v410 = vshrl.u32 %v336, 16
        %v412 = vshll.u32 %v336, 16
        %v414 = vrot.slane %v412, 1
        %v415 = vor.u32 %v410, %v414
        %v417 = vshll.u32 %v376, 16
        %v419 = vrot.slane %v417, 1
        %v420 = vsel %vm384, %v415, %v419
        %v422 = vshrl.u32 %v337, 16
        %v424 = vshll.u32 %v337, 16
        %v426 = vrot.slane %v424, 1
        %v427 = vor.u32 %v422, %v426
        %v429 = vshll.u32 %v377, 16
        %v431 = vrot.slane %v429, 1
        %v432 = vsel %vm384, %v427, %v431
        %v434 = vshrl.u32 %v338, 16
        %v436 = vshll.u32 %v338, 16
        %v438 = vrot.slane %v436, 1
        %v439 = vor.u32 %v434, %v438
        %v441 = vshll.u32 %v378, 16
        %v443 = vrot.slane %v441, 1
        %v444 = vsel %vm384, %v439, %v443
        %v446 = vshrl.u32 %v339, 16
        %v448 = vshll.u32 %v339, 16
        %v450 = vrot.slane %v448, 1
        %v451 = vor.u32 %v446, %v450
        %v453 = vshll.u32 %v379, 16
        %v455 = vrot.slane %v453, 1
        %v456 = vsel %vm384, %v451, %v455
        %v458 = vshrl.u32 %v340, 16
        %v460 = vshll.u32 %v340, 16
        %v462 = vrot.slane %v460, 1
        %v463 = vor.u32 %v458, %v462
        %v465 = vshll.u32 %v380, 16
        %v467 = vrot.slane %v465, 1
        %v468 = vsel %vm384, %v463, %v467
        %v470 = vshrl.u32 %v341, 16
        %v472 = vshll.u32 %v341, 16
        %v474 = vrot.slane %v472, 1
        %v475 = vor.u32 %v470, %v474
        %v477 = vshll.u32 %v381, 16
        %v479 = vrot.slane %v477, 1
        %v480 = vsel %vm384, %v475, %v479
        %v482 = vshrl.u32 %v342, 16
        %v484 = vshll.u32 %v342, 16
        %v486 = vrot.slane %v484, 1
        %v487 = vor.u32 %v482, %v486
        %v489 = vshll.u32 %v382, 16
        %v491 = vrot.slane %v489, 1
        %v492 = vsel %vm384, %v487, %v491
        %v494 = vshrl.u32 %v343, 16
        %v496 = vshll.u32 %v343, 16
        %v498 = vrot.slane %v496, 1
        %v499 = vor.u32 %v494, %v498
        %v501 = vshll.u32 %v383, 16
        %v503 = vrot.slane %v501, 1
        %v504 = vsel %vm384, %v499, %v503
        %vm515 = vcmask 1046528
        %v516 = vrot.slane %v334, 1
        %v517 = vrot.slane %v374, 1
        %v518 = vsel %vm515, %v516, %v517
        %v519 = vrot.slane %v335, 1
        %v520 = vrot.slane %v375, 1
        %v521 = vsel %vm515, %v519, %v520
        %v522 = vrot.slane %v336, 1
        %v523 = vrot.slane %v376, 1
        %v524 = vsel %vm515, %v522, %v523
        %v525 = vrot.slane %v337, 1
        %v526 = vrot.slane %v377, 1
        %v527 = vsel %vm515, %v525, %v526
        %v528 = vrot.slane %v338, 1
        %v529 = vrot.slane %v378, 1
        %v530 = vsel %vm515, %v528, %v529
        %v531 = vrot.slane %v339, 1
        %v532 = vrot.slane %v379, 1
        %v533 = vsel %vm515, %v531, %v532
        %v534 = vrot.slane %v340, 1
        %v535 = vrot.slane %v380, 1
        %v536 = vsel %vm515, %v534, %v535
        %v537 = vrot.slane %v341, 1
        %v538 = vrot.slane %v381, 1
        %v539 = vsel %vm515, %v537, %v538
        %v540 = vrot.slane %v342, 1
        %v541 = vrot.slane %v382, 1
        %v542 = vsel %vm515, %v540, %v541
        %v543 = vrot.slane %v343, 1
        %v544 = vrot.slane %v383, 1
        %v545 = vsel %vm515, %v543, %v544
        %v558 = vunpack.c.l.b16 %v288
        %v559 = vunpack.c.l.b16 %v289
        %v560 = vpack.c.b16 %v559, %v558
        %v563 = vunpack.c.l.b16 %v290
        %v564 = vpack.c.b16 %v563, %v563
        %v566 = vshrl.u32 %v560, 16
        %v568 = vshll.u32 %v560, 16
        %v570 = vrot.slane %v568, 1
        %v571 = vor.u32 %v566, %v570
        %v573 = vshll.u32 %v564, 16
        %v575 = vrot.slane %v573, 1
        %v576 = vsel %vm384, %v571, %v575
        %v578 = vrot.slane %v560, 1
        %v579 = vrot.slane %v564, 1
        %v580 = vsel %vm515, %v578, %v579
        %v584 = vunpack.c.l.b16 %v291
        %v585 = vunpack.c.l.b16 %v292
        %v586 = vpack.c.b16 %v585, %v584
        %v589 = vunpack.c.l.b16 %v293
        %v590 = vpack.c.b16 %v589, %v589
        %v592 = vshrl.u32 %v586, 16
        %v594 = vshll.u32 %v586, 16
        %v596 = vrot.slane %v594, 1
        %v597 = vor.u32 %v592, %v596
        %v599 = vshll.u32 %v590, 16
        %v601 = vrot.slane %v599, 1
        %v602 = vsel %vm384, %v597, %v601
        %v604 = vrot.slane %v586, 1
        %v605 = vrot.slane %v590, 1
        %v606 = vsel %vm515, %v604, %v605
        %v608 = vld [vmem:[%s1] sm:$0xf]
        %v609 = vld [vmem:[%s1 + $0x4] sm:$0xf]
        %v610 = vld [vmem:[%s1 + $0x8] sm:$0xf]
        %v611 = vld [vmem:[%s1 + $0xc] sm:$0xf]
        %v612 = vld [vmem:[%s1 + $0x10] sm:$0xf]
        %v613 = vld [vmem:[%s1 + $0x14] sm:$0xf]
        %v614 = vld [vmem:[%s1 + $0x18] sm:$0xf]
        %v615 = vld [vmem:[%s1 + $0x1c] sm:$0xf]
        %v616 = vld [vmem:[%s1 + $0x20] sm:$0xf]
        %v617 = vld [vmem:[%s1 + $0x24] sm:$0xf]
        %v618 = vld [vmem:[%s1 + $0x28] sm:$0xf]
        %v619 = vld [vmem:[%s1 + $0x2c] sm:$0xf]
        %v620 = vld [vmem:[%s1 + $0x30] sm:$0xf]
        %v621 = vld [vmem:[%s1 + $0x34] sm:$0xf]
        %v622 = vld [vmem:[%s1 + $0x38] sm:$0xf]
        %v623 = vld [vmem:[%s1 + $0x3c] sm:$0xf]
        %v624 = vld [vmem:[%s1 + $0x40] sm:$0xf]
        %v625 = vld [vmem:[%s1 + $0x44] sm:$0xf]
        %v626 = vld [vmem:[%s1 + $0x48] sm:$0xf]
        %v627 = vld [vmem:[%s1 + $0x4c] sm:$0xf]
        %v628 = vld [vmem:[%s1 + $0x50] sm:$0xf]
        %v629 = vld [vmem:[%s1 + $0x54] sm:$0xf]
        %v630 = vld [vmem:[%s1 + $0x58] sm:$0xf]
        %v631 = vld [vmem:[%s1 + $0x5c] sm:$0xf]
        %v632 = vld [vmem:[%s1 + $0x60] sm:$0xf]
        %v633 = vld [vmem:[%s1 + $0x64] sm:$0xf]
        %v634 = vld [vmem:[%s1 + $0x68] sm:$0xf]
        %v635 = vld [vmem:[%s1 + $0x6c] sm:$0xf]
        %v636 = vld [vmem:[%s1 + $0x70] sm:$0xf]
        %v637 = vld [vmem:[%s1 + $0x74] sm:$0xf]
        %v638 = vld [vmem:[%s1 + $0x78] sm:$0xf]
        %v639 = vld [vmem:[%s1 + $0x7c] sm:$0xf]
        %v640 = vld [vmem:[%s1 + $0x80] sm:$0xf]
        %v641 = vld [vmem:[%s1 + $0x84] sm:$0xf]
        %v642 = vld [vmem:[%s1 + $0x88] sm:$0xf]
        %v643 = vld [vmem:[%s1 + $0x8c] sm:$0xf]
        %v644 = vld [vmem:[%s1 + $0x90] sm:$0xf]
        %v645 = vld [vmem:[%s1 + $0x94] sm:$0xf]
        %v646 = vld [vmem:[%s1 + $0x98] sm:$0xf]
        %v647 = vld [vmem:[%s1 + $0x9c] sm:$0xf]
        %v648 = vld [vmem:[%s1 + $0xa0] sm:$0xf]
        %v649 = vld [vmem:[%s1 + $0xa4] sm:$0xf]
        %v650 = vld [vmem:[%s1 + $0xa8] sm:$0xf]
        %v651 = vld [vmem:[%s1 + $0xac] sm:$0xf]
        %v652 = vld [vmem:[%s1 + $0xb0] sm:$0xf]
        %v653 = vld [vmem:[%s1 + $0xb4] sm:$0xf]
        %v654 = vld [vmem:[%s1 + $0xb8] sm:$0xf]
        %v655 = vld [vmem:[%s1 + $0xbc] sm:$0xf]
        %v656 = vld [vmem:[%s1 + $0xc0] sm:$0xf]
        %v657 = vld [vmem:[%s1 + $0xc4] sm:$0xf]
        %v658 = vld [vmem:[%s1 + $0xc8] sm:$0xf]
        %v659 = vld [vmem:[%s1 + $0xcc] sm:$0xf]
        %v660 = vld [vmem:[%s1 + $0xd0] sm:$0xf]
        %v661 = vld [vmem:[%s1 + $0xd4] sm:$0xf]
        %v662 = vld [vmem:[%s1 + $0xd8] sm:$0xf]
        %v663 = vld [vmem:[%s1 + $0xdc] sm:$0xf]
        %v664 = vld [vmem:[%s1 + $0xe0] sm:$0xf]
        %v665 = vld [vmem:[%s1 + $0xe4] sm:$0xf]
        %v666 = vld [vmem:[%s1 + $0xe8] sm:$0xf]
        %v667 = vld [vmem:[%s1 + $0xec] sm:$0xf]
        %v668 = vld [vmem:[%s1 + $0xf0] sm:$0xf]
        %v669 = vld [vmem:[%s1 + $0xf4] sm:$0xf]
        %v670 = vld [vmem:[%s1 + $0xf8] sm:$0xf]
        %v671 = vld [vmem:[%s1 + $0xfc] sm:$0xf]
        %v672 = vld [vmem:[%s1 + $0x100] sm:$0xf]
        %v673 = vld [vmem:[%s1 + $0x104] sm:$0xf]
        %v674 = vld [vmem:[%s1 + $0x108] sm:$0xf]
        %v675 = vld [vmem:[%s1 + $0x10c] sm:$0xf]
        %v676 = vld [vmem:[%s1 + $0x110] sm:$0xf]
        %v677 = vld [vmem:[%s1 + $0x114] sm:$0xf]
        %v678 = vld [vmem:[%s1 + $0x118] sm:$0xf]
        %v679 = vld [vmem:[%s1 + $0x11c] sm:$0xf]
        %v680 = vld [vmem:[%s1 + $0x120] sm:$0xf]
        %v681 = vld [vmem:[%s1 + $0x124] sm:$0xf]
        %v682 = vld [vmem:[%s1 + $0x128] sm:$0xf]
        %v683 = vld [vmem:[%s1 + $0x12c] sm:$0xf]
        %v684 = vld [vmem:[%s1 + $0x130] sm:$0xf]
        %v685 = vld [vmem:[%s1 + $0x134] sm:$0xf]
        %v686 = vld [vmem:[%s1 + $0x138] sm:$0xf]
        %v687 = vld [vmem:[%s1 + $0x13c] sm:$0xf]
        %v688 = vld [vmem:[%s1 + $0x140] sm:$0xf]
        %v689 = vld [vmem:[%s1 + $0x144] sm:$0xf]
        %v690 = vld [vmem:[%s1 + $0x148] sm:$0xf]
        %v691 = vld [vmem:[%s1 + $0x14c] sm:$0xf]
        %v692 = vld [vmem:[%s1 + $0x150] sm:$0xf]
        %v693 = vld [vmem:[%s1 + $0x154] sm:$0xf]
        %v694 = vld [vmem:[%s1 + $0x158] sm:$0xf]
        %v695 = vld [vmem:[%s1 + $0x15c] sm:$0xf]
        %v696 = vld [vmem:[%s1 + $0x160] sm:$0xf]
        %v697 = vld [vmem:[%s1 + $0x164] sm:$0xf]
        %v698 = vld [vmem:[%s1 + $0x168] sm:$0xf]
        %v699 = vld [vmem:[%s1 + $0x16c] sm:$0xf]
        %v700 = vld [vmem:[%s1 + $0x170] sm:$0xf]
        %v701 = vld [vmem:[%s1 + $0x174] sm:$0xf]
        %v702 = vld [vmem:[%s1 + $0x178] sm:$0xf]
        %v703 = vld [vmem:[%s1 + $0x17c] sm:$0xf]
        %v704 = vld [vmem:[%s1 + $0x180] sm:$0xf]
        %v705 = vld [vmem:[%s1 + $0x184] sm:$0xf]
        %v706 = vld [vmem:[%s1 + $0x188] sm:$0xf]
        %v707 = vld [vmem:[%s1 + $0x18c] sm:$0xf]
        %v708 = vld [vmem:[%s1 + $0x190] sm:$0xf]
        %v709 = vld [vmem:[%s1 + $0x194] sm:$0xf]
        %v710 = vld [vmem:[%s1 + $0x198] sm:$0xf]
        %v711 = vld [vmem:[%s1 + $0x19c] sm:$0xf]
        %v712 = vld [vmem:[%s1 + $0x1a0] sm:$0xf]
        %v713 = vld [vmem:[%s1 + $0x1a4] sm:$0xf]
        %v714 = vld [vmem:[%s1 + $0x1a8] sm:$0xf]
        %v715 = vld [vmem:[%s1 + $0x1ac] sm:$0xf]
        %v716 = vld [vmem:[%s1 + $0x1b0] sm:$0xf]
        %v717 = vld [vmem:[%s1 + $0x1b4] sm:$0xf]
        %v718 = vld [vmem:[%s1 + $0x1b8] sm:$0xf]
        %v719 = vld [vmem:[%s1 + $0x1bc] sm:$0xf]
        %v720 = vld [vmem:[%s1 + $0x1c0] sm:$0xf]
        %v721 = vld [vmem:[%s1 + $0x1c4] sm:$0xf]
        %v722 = vld [vmem:[%s1 + $0x1c8] sm:$0xf]
        %v723 = vld [vmem:[%s1 + $0x1cc] sm:$0xf]
        %v724 = vld [vmem:[%s1 + $0x1d0] sm:$0xf]
        %v725 = vld [vmem:[%s1 + $0x1d4] sm:$0xf]
        %v726 = vld [vmem:[%s1 + $0x1d8] sm:$0xf]
        %v727 = vld [vmem:[%s1 + $0x1dc] sm:$0xf]
        %v728 = vld [vmem:[%s1 + $0x1e0] sm:$0xf]
        %v729 = vld [vmem:[%s1 + $0x1e4] sm:$0xf]
        %v730 = vld [vmem:[%s1 + $0x1e8] sm:$0xf]
        %v731 = vld [vmem:[%s1 + $0x1ec] sm:$0xf]
        %v732 = vld [vmem:[%s1 + $0x1f0] sm:$0xf]
        %v733 = vld [vmem:[%s1 + $0x1f4] sm:$0xf]
        %v734 = vld [vmem:[%s1 + $0x1f8] sm:$0xf]
        %v735 = vld [vmem:[%s1 + $0x1fc] sm:$0xf]
        %v736 = vld [vmem:[%s1 + $0x200] sm:$0xf]
        %v737 = vld [vmem:[%s1 + $0x204] sm:$0xf]
        %v738 = vld [vmem:[%s1 + $0x208] sm:$0xf]
        %v739 = vld [vmem:[%s1 + $0x20c] sm:$0xf]
        %v740 = vld [vmem:[%s1 + $0x210] sm:$0xf]
        %v741 = vld [vmem:[%s1 + $0x214] sm:$0xf]
        %v742 = vld [vmem:[%s1 + $0x218] sm:$0xf]
        %v743 = vld [vmem:[%s1 + $0x21c] sm:$0xf]
        %v744 = vld [vmem:[%s1 + $0x220] sm:$0xf]
        %v745 = vld [vmem:[%s1 + $0x224] sm:$0xf]
        %v746 = vld [vmem:[%s1 + $0x228] sm:$0xf]
        %v747 = vld [vmem:[%s1 + $0x22c] sm:$0xf]
        %v748 = vld [vmem:[%s1 + $0x230] sm:$0xf]
        %v749 = vld [vmem:[%s1 + $0x234] sm:$0xf]
        %v750 = vld [vmem:[%s1 + $0x238] sm:$0xf]
        %v751 = vld [vmem:[%s1 + $0x23c] sm:$0xf]
        %v752 = vld [vmem:[%s2] sm:$0x1]
        %v754 = vlaneseq
        %v755 = vshrl.u32 %v754, 7
        %v756 = vsub.s32 0, %v755
        %v757 = vrot.slane %v752, %v756
        %v903 = vunpack.c.l.b16 %v608
        %v904 = vunpack.c.l.b16 %v609
        %v905 = vunpack.c.l.b16 %v610
        %v906 = vunpack.c.l.b16 %v611
        %v907 = vunpack.c.l.b16 %v612
        %v908 = vunpack.c.l.b16 %v613
        %v909 = vunpack.c.l.b16 %v614
        %v910 = vunpack.c.l.b16 %v615
        %v911 = vunpack.c.l.b16 %v616
        %v912 = vunpack.c.l.b16 %v617
        %v913 = vunpack.c.l.b16 %v618
        %v914 = vunpack.c.l.b16 %v619
        %v915 = vunpack.c.l.b16 %v620
        %v916 = vunpack.c.l.b16 %v621
        %v917 = vunpack.c.l.b16 %v622
        %v918 = vunpack.c.l.b16 %v623
        %v919 = vunpack.c.l.b16 %v624
        %v920 = vunpack.c.l.b16 %v625
        %v921 = vunpack.c.l.b16 %v626
        %v922 = vunpack.c.l.b16 %v627
        %v923 = vunpack.c.l.b16 %v628
        %v924 = vunpack.c.l.b16 %v629
        %v925 = vunpack.c.l.b16 %v630
        %v926 = vunpack.c.l.b16 %v631
        %v927 = vunpack.c.l.b16 %v632
        %v928 = vunpack.c.l.b16 %v633
        %v929 = vunpack.c.l.b16 %v634
        %v930 = vunpack.c.l.b16 %v635
        %v931 = vunpack.c.l.b16 %v636
        %v932 = vunpack.c.l.b16 %v637
        %v933 = vunpack.c.l.b16 %v638
        %v934 = vunpack.c.l.b16 %v639
        %v935 = vunpack.c.l.b16 %v640
        %v936 = vunpack.c.l.b16 %v641
        %v937 = vunpack.c.l.b16 %v642
        %v938 = vunpack.c.l.b16 %v643
        %v939 = vunpack.c.l.b16 %v644
        %v940 = vunpack.c.l.b16 %v645
        %v941 = vunpack.c.l.b16 %v646
        %v942 = vunpack.c.l.b16 %v647
        %v943 = vunpack.c.l.b16 %v648
        %v944 = vunpack.c.l.b16 %v649
        %v945 = vunpack.c.l.b16 %v650
        %v946 = vunpack.c.l.b16 %v651
        %v947 = vunpack.c.l.b16 %v652
        %v948 = vunpack.c.l.b16 %v653
        %v949 = vunpack.c.l.b16 %v654
        %v950 = vunpack.c.l.b16 %v655
        %v951 = vunpack.c.l.b16 %v656
        %v952 = vunpack.c.l.b16 %v657
        %v953 = vunpack.c.l.b16 %v658
        %v954 = vunpack.c.l.b16 %v659
        %v955 = vunpack.c.l.b16 %v660
        %v956 = vunpack.c.l.b16 %v661
        %v957 = vunpack.c.l.b16 %v662
        %v958 = vunpack.c.l.b16 %v663
        %v959 = vunpack.c.l.b16 %v664
        %v960 = vunpack.c.l.b16 %v665
        %v961 = vunpack.c.l.b16 %v666
        %v962 = vunpack.c.l.b16 %v667
        %v963 = vunpack.c.l.b16 %v668
        %v964 = vunpack.c.l.b16 %v669
        %v965 = vunpack.c.l.b16 %v670
        %v966 = vunpack.c.l.b16 %v671
        %v967 = vunpack.c.l.b16 %v672
        %v968 = vunpack.c.l.b16 %v673
        %v969 = vunpack.c.l.b16 %v674
        %v970 = vunpack.c.l.b16 %v675
        %v971 = vunpack.c.l.b16 %v676
        %v972 = vunpack.c.l.b16 %v677
        %v973 = vunpack.c.l.b16 %v678
        %v974 = vunpack.c.l.b16 %v679
        %v975 = vunpack.c.l.b16 %v680
        %v976 = vunpack.c.l.b16 %v681
        %v977 = vunpack.c.l.b16 %v682
        %v978 = vunpack.c.l.b16 %v683
        %v979 = vunpack.c.l.b16 %v684
        %v980 = vunpack.c.l.b16 %v685
        %v981 = vunpack.c.l.b16 %v686
        %v982 = vunpack.c.l.b16 %v687
        %v983 = vunpack.c.l.b16 %v688
        %v984 = vunpack.c.l.b16 %v689
        %v985 = vunpack.c.l.b16 %v690
        %v986 = vunpack.c.l.b16 %v691
        %v987 = vunpack.c.l.b16 %v692
        %v988 = vunpack.c.l.b16 %v693
        %v989 = vunpack.c.l.b16 %v694
        %v990 = vunpack.c.l.b16 %v695
        %v991 = vunpack.c.l.b16 %v696
        %v992 = vunpack.c.l.b16 %v697
        %v993 = vunpack.c.l.b16 %v698
        %v994 = vunpack.c.l.b16 %v699
        %v995 = vunpack.c.l.b16 %v700
        %v996 = vunpack.c.l.b16 %v701
        %v997 = vunpack.c.l.b16 %v702
        %v998 = vunpack.c.l.b16 %v703
        %v999 = vunpack.c.l.b16 %v704
        %v1000 = vunpack.c.l.b16 %v705
        %v1001 = vunpack.c.l.b16 %v706
        %v1002 = vunpack.c.l.b16 %v707
        %v1003 = vunpack.c.l.b16 %v708
        %v1004 = vunpack.c.l.b16 %v709
        %v1005 = vunpack.c.l.b16 %v710
        %v1006 = vunpack.c.l.b16 %v711
        %v1007 = vunpack.c.l.b16 %v712
        %v1008 = vunpack.c.l.b16 %v713
        %v1009 = vunpack.c.l.b16 %v714
        %v1010 = vunpack.c.l.b16 %v715
        %v1011 = vunpack.c.l.b16 %v716
        %v1012 = vunpack.c.l.b16 %v717
        %v1013 = vunpack.c.l.b16 %v718
        %v1014 = vunpack.c.l.b16 %v719
        %v1015 = vunpack.c.l.b16 %v720
        %v1016 = vunpack.c.l.b16 %v721
        %v1017 = vunpack.c.l.b16 %v722
        %v1018 = vunpack.c.l.b16 %v723
        %v1019 = vunpack.c.l.b16 %v724
        %v1020 = vunpack.c.l.b16 %v725
        %v1021 = vunpack.c.l.b16 %v726
        %v1022 = vunpack.c.l.b16 %v727
        %v1023 = vunpack.c.l.b16 %v728
        %v1024 = vunpack.c.l.b16 %v729
        %v1025 = vunpack.c.l.b16 %v730
        %v1026 = vunpack.c.l.b16 %v731
        %v1027 = vunpack.c.l.b16 %v732
        %v1028 = vunpack.c.l.b16 %v733
        %v1029 = vunpack.c.l.b16 %v734
        %v1030 = vunpack.c.l.b16 %v735
        %v1031 = vunpack.c.l.b16 %v736
        %v1032 = vunpack.c.l.b16 %v737
        %v1033 = vunpack.c.l.b16 %v738
        %v1034 = vunpack.c.l.b16 %v739
        %v1035 = vunpack.c.l.b16 %v740
        %v1036 = vunpack.c.l.b16 %v741
        %v1037 = vunpack.c.l.b16 %v742
        %v1038 = vunpack.c.l.b16 %v743
        %v1039 = vunpack.c.l.b16 %v744
        %v1040 = vunpack.c.l.b16 %v745
        %v1041 = vunpack.c.l.b16 %v746
        %v1042 = vunpack.c.l.b16 %v747
        %v1043 = vunpack.c.l.b16 %v748
        %v1044 = vunpack.c.l.b16 %v749
        %v1045 = vunpack.c.l.b16 %v750
        %v1046 = vunpack.c.l.b16 %v751
        %v1047 = vpack.c.b16 %v904, %v903
        %v1048 = vpack.c.b16 %v906, %v905
        %v1049 = vpack.c.b16 %v908, %v907
        %v1050 = vpack.c.b16 %v910, %v909
        %v1051 = vpack.c.b16 %v912, %v911
        %v1052 = vpack.c.b16 %v914, %v913
        %v1053 = vpack.c.b16 %v916, %v915
        %v1054 = vpack.c.b16 %v918, %v917
        %v1055 = vpack.c.b16 %v920, %v919
        %v1056 = vpack.c.b16 %v922, %v921
        %v1057 = vpack.c.b16 %v924, %v923
        %v1058 = vpack.c.b16 %v926, %v925
        %v1059 = vpack.c.b16 %v928, %v927
        %v1060 = vpack.c.b16 %v930, %v929
        %v1061 = vpack.c.b16 %v932, %v931
        %v1062 = vpack.c.b16 %v934, %v933
        %v1063 = vpack.c.b16 %v936, %v935
        %v1064 = vpack.c.b16 %v938, %v937
        %v1065 = vpack.c.b16 %v940, %v939
        %v1066 = vpack.c.b16 %v942, %v941
        %v1067 = vpack.c.b16 %v944, %v943
        %v1068 = vpack.c.b16 %v946, %v945
        %v1069 = vpack.c.b16 %v948, %v947
        %v1070 = vpack.c.b16 %v950, %v949
        %v1071 = vpack.c.b16 %v952, %v951
        %v1072 = vpack.c.b16 %v954, %v953
        %v1073 = vpack.c.b16 %v956, %v955
        %v1074 = vpack.c.b16 %v958, %v957
        %v1075 = vpack.c.b16 %v960, %v959
        %v1076 = vpack.c.b16 %v962, %v961
        %v1077 = vpack.c.b16 %v964, %v963
        %v1078 = vpack.c.b16 %v966, %v965
        %v1079 = vpack.c.b16 %v968, %v967
        %v1080 = vpack.c.b16 %v970, %v969
        %v1081 = vpack.c.b16 %v972, %v971
        %v1082 = vpack.c.b16 %v974, %v973
        %v1083 = vpack.c.b16 %v976, %v975
        %v1084 = vpack.c.b16 %v978, %v977
        %v1085 = vpack.c.b16 %v980, %v979
        %v1086 = vpack.c.b16 %v982, %v981
        %v1087 = vpack.c.b16 %v984, %v983
        %v1088 = vpack.c.b16 %v986, %v985
        %v1089 = vpack.c.b16 %v988, %v987
        %v1090 = vpack.c.b16 %v990, %v989
        %v1091 = vpack.c.b16 %v992, %v991
        %v1092 = vpack.c.b16 %v994, %v993
        %v1093 = vpack.c.b16 %v996, %v995
        %v1094 = vpack.c.b16 %v998, %v997
        %v1095 = vpack.c.b16 %v1000, %v999
        %v1096 = vpack.c.b16 %v1002, %v1001
        %v1097 = vpack.c.b16 %v1004, %v1003
        %v1098 = vpack.c.b16 %v1006, %v1005
        %v1099 = vpack.c.b16 %v1008, %v1007
        %v1100 = vpack.c.b16 %v1010, %v1009
        %v1101 = vpack.c.b16 %v1012, %v1011
        %v1102 = vpack.c.b16 %v1014, %v1013
        %v1103 = vpack.c.b16 %v1016, %v1015
        %v1104 = vpack.c.b16 %v1018, %v1017
        %v1105 = vpack.c.b16 %v1020, %v1019
        %v1106 = vpack.c.b16 %v1022, %v1021
        %v1107 = vpack.c.b16 %v1024, %v1023
        %v1108 = vpack.c.b16 %v1026, %v1025
        %v1109 = vpack.c.b16 %v1028, %v1027
        %v1110 = vpack.c.b16 %v1030, %v1029
        %v1111 = vpack.c.b16 %v1032, %v1031
        %v1112 = vpack.c.b16 %v1034, %v1033
        %v1113 = vpack.c.b16 %v1036, %v1035
        %v1114 = vpack.c.b16 %v1038, %v1037
        %v1115 = vpack.c.b16 %v1040, %v1039
        %v1116 = vpack.c.b16 %v1042, %v1041
        %v1117 = vpack.c.b16 %v1044, %v1043
        %v1118 = vpack.c.b16 %v1046, %v1045
        %1191 = vmatprep.subr.bf16.mxu0 0
        %1192 = vmatpush1.bf16.msra.mxu0 %v1047
        %1193 = vmatprep.subr.bf16.mxu0 0
        %1194 = vmatpush1.bf16.msra.mxu0 %v1048
        %1195 = vmatprep.subr.bf16.mxu0 0
        %1196 = vmatpush1.bf16.msra.mxu0 %v1049
        %1197 = vmatprep.subr.bf16.mxu0 0
        %1198 = vmatpush1.bf16.msra.mxu0 %v1050
        %1199 = vmatprep.subr.bf16.mxu0 0
        %1200 = vmatpush1.bf16.msra.mxu0 %v1051
        %1201 = vmatprep.subr.bf16.mxu0 0
        %1202 = vmatpush1.bf16.msra.mxu0 %v1052
        %1203 = vmatprep.subr.bf16.mxu0 0
        %1204 = vmatpush1.bf16.msra.mxu0 %v1053
        %1205 = vmatprep.subr.bf16.mxu0 0
        %1206 = vmatpush1.bf16.msra.mxu0 %v1054
        %1207 = vmatprep.subr.bf16.mxu0 0
        %1208 = vmatpush1.bf16.msra.mxu0 %v1055
        %1209 = vmatprep.subr.bf16.mxu0 0
        %1210 = vmatpush1.bf16.msra.mxu0 %v1056
        %1211 = vmatprep.subr.bf16.mxu0 0
        %1212 = vmatpush1.bf16.msra.mxu0 %v1057
        %1213 = vmatprep.subr.bf16.mxu0 0
        %1214 = vmatpush1.bf16.msra.mxu0 %v1058
        %1215 = vmatprep.subr.bf16.mxu0 0
        %1216 = vmatpush1.bf16.msra.mxu0 %v1059
        %1217 = vmatprep.subr.bf16.mxu0 0
        %1218 = vmatpush1.bf16.msra.mxu0 %v1060
        %1219 = vmatprep.subr.bf16.mxu0 0
        %1220 = vmatpush1.bf16.msra.mxu0 %v1061
        %1221 = vmatprep.subr.bf16.mxu0 0
        %1222 = vmatpush1.bf16.msra.mxu0 %v1062
        %1223 = vmatprep.mubr.bf16.mxu0 %v396
        %1224 = vmatmul.mubr.bf16.gmra.mrb[0].mxu0 %v334
        %v1225 = vpop.f32.mrb[0].mxu0
        %v1226 = vadd.f32 %v757, %v1225
        %v1227 = vpop.f32.mrb[0].mxu0
        %v1228 = vpop.f32.mrb[0].mxu0
        %v1229 = vadd.f32 %v757, %v1228
        %v1230 = vpop.f32.mrb[0].mxu0
        %1231 = vmatprep.mubr.bf16.mxu0 %v408
        %1232 = vmatmul.mubr.bf16.gmra.mrb[0].mxu0 %v335
        %v1233 = vpop.f32.mrb[0].mxu0
        %v1234 = vadd.f32 %v757, %v1233
        %v1235 = vpop.f32.mrb[0].mxu0
        %v1236 = vpop.f32.mrb[0].mxu0
        %v1237 = vadd.f32 %v757, %v1236
        %v1238 = vpop.f32.mrb[0].mxu0
        %1239 = vmatprep.mubr.bf16.mxu0 %v420
        %1240 = vmatmul.mubr.bf16.gmra.mrb[0].mxu0 %v336
        %v1241 = vpop.f32.mrb[0].mxu0
        %v1242 = vadd.f32 %v757, %v1241
        %v1243 = vpop.f32.mrb[0].mxu0
        %v1244 = vpop.f32.mrb[0].mxu0
        %v1245 = vadd.f32 %v757, %v1244
        %v1246 = vpop.f32.mrb[0].mxu0
        %1247 = vmatprep.mubr.bf16.mxu0 %v432
        %1248 = vmatmul.mubr.bf16.gmra.mrb[0].mxu0 %v337
        %v1249 = vpop.f32.mrb[0].mxu0
        %v1250 = vadd.f32 %v757, %v1249
        %v1251 = vpop.f32.mrb[0].mxu0
        %v1252 = vpop.f32.mrb[0].mxu0
        %v1253 = vadd.f32 %v757, %v1252
        %v1254 = vpop.f32.mrb[0].mxu0
        %1255 = vmatprep.mubr.bf16.mxu0 %v444
        %1256 = vmatmul.mubr.bf16.gmra.mrb[0].mxu0 %v338
        %v1257 = vpop.f32.mrb[0].mxu0
        %v1258 = vadd.f32 %v757, %v1257
        %v1259 = vpop.f32.mrb[0].mxu0
        %v1260 = vpop.f32.mrb[0].mxu0
        %v1261 = vadd.f32 %v757, %v1260
        %v1262 = vpop.f32.mrb[0].mxu0
        %1263 = vmatprep.mubr.bf16.mxu0 %v456
        %1264 = vmatmul.mubr.bf16.gmra.mrb[0].mxu0 %v339
        %v1265 = vpop.f32.mrb[0].mxu0
        %v1266 = vadd.f32 %v757, %v1265
        %v1267 = vpop.f32.mrb[0].mxu0
        %v1268 = vpop.f32.mrb[0].mxu0
        %v1269 = vadd.f32 %v757, %v1268
        %v1270 = vpop.f32.mrb[0].mxu0
        %1271 = vmatprep.mubr.bf16.mxu0 %v468
        %1272 = vmatmul.mubr.bf16.gmra.mrb[0].mxu0 %v340
        %v1273 = vpop.f32.mrb[0].mxu0
        %v1274 = vadd.f32 %v757, %v1273
        %v1275 = vpop.f32.mrb[0].mxu0
        %v1276 = vpop.f32.mrb[0].mxu0
        %v1277 = vadd.f32 %v757, %v1276
        %v1278 = vpop.f32.mrb[0].mxu0
        %1279 = vmatprep.mubr.bf16.mxu0 %v480
        %1280 = vmatmul.mubr.bf16.gmra.mrb[0].mxu0 %v341
        %v1281 = vpop.f32.mrb[0].mxu0
        %v1282 = vadd.f32 %v757, %v1281
        %v1283 = vpop.f32.mrb[0].mxu0
        %v1284 = vpop.f32.mrb[0].mxu0
        %v1285 = vadd.f32 %v757, %v1284
        %v1286 = vpop.f32.mrb[0].mxu0
        %1287 = vmatprep.mubr.bf16.mxu0 %v492
        %1288 = vmatmul.mubr.bf16.gmra.mrb[0].mxu0 %v342
        %v1289 = vpop.f32.mrb[0].mxu0
        %v1290 = vadd.f32 %v757, %v1289
        %v1291 = vpop.f32.mrb[0].mxu0
        %v1292 = vpop.f32.mrb[0].mxu0
        %v1293 = vadd.f32 %v757, %v1292
        %v1294 = vpop.f32.mrb[0].mxu0
        %1295 = vmatprep.mubr.bf16.mxu0 %v504
        %1296 = vmatmul.mubr.bf16.gmra.mrb[0].mxu0 %v343
        %v1297 = vpop.f32.mrb[0].mxu0
        %v1298 = vadd.f32 %v757, %v1297
        %v1299 = vpop.f32.mrb[0].mxu0
        %v1300 = vpop.f32.mrb[0].mxu0
        %v1301 = vadd.f32 %v757, %v1300
        %v1302 = vpop.f32.mrb[0].mxu0
        %1303 = vdwg.mxu0
        %1304 = vmatprep.subr.bf16.mxu0 0
        %1305 = vmatpush1.bf16.msra.mxu0 %v1063
        %1306 = vmatprep.subr.bf16.mxu0 0
        %1307 = vmatpush1.bf16.msra.mxu0 %v1064
        %1308 = vmatprep.subr.bf16.mxu0 0
        %1309 = vmatpush1.bf16.msra.mxu0 %v1065
        %1310 = vmatprep.subr.bf16.mxu0 0
        %1311 = vmatpush1.bf16.msra.mxu0 %v1066
        %1312 = vmatprep.subr.bf16.mxu0 0
        %1313 = vmatpush1.bf16.msra.mxu0 %v1067
        %1314 = vmatprep.subr.bf16.mxu0 0
        %1315 = vmatpush1.bf16.msra.mxu0 %v1068
        %1316 = vmatprep.subr.bf16.mxu0 0
        %1317 = vmatpush1.bf16.msra.mxu0 %v1069
        %1318 = vmatprep.subr.bf16.mxu0 0
        %1319 = vmatpush1.bf16.msra.mxu0 %v1070
        %1320 = vmatprep.subr.bf16.mxu0 0
        %1321 = vmatpush1.bf16.msra.mxu0 %v1071
        %1322 = vmatprep.subr.bf16.mxu0 0
        %1323 = vmatpush1.bf16.msra.mxu0 %v1072
        %1324 = vmatprep.subr.bf16.mxu0 0
        %1325 = vmatpush1.bf16.msra.mxu0 %v1073
        %1326 = vmatprep.subr.bf16.mxu0 0
        %1327 = vmatpush1.bf16.msra.mxu0 %v1074
        %1328 = vmatprep.subr.bf16.mxu0 0
        %1329 = vmatpush1.bf16.msra.mxu0 %v1075
        %1330 = vmatprep.subr.bf16.mxu0 0
        %1331 = vmatpush1.bf16.msra.mxu0 %v1076
        %1332 = vmatprep.subr.bf16.mxu0 0
        %1333 = vmatpush1.bf16.msra.mxu0 %v1077
        %1334 = vmatprep.subr.bf16.mxu0 0
        %1335 = vmatpush1.bf16.msra.mxu0 %v1078
        %1336 = vmatprep.mubr.bf16.mxu0 %v335
        %1337 = vmatmul.mubr.bf16.gmra.mrb[0].mxu0 %v518
        %v1338 = vpop.f32.mrb[0].mxu0
        %v1339 = vadd.f32 %v1226, %v1338
        %v1340 = vpop.f32.mrb[0].mxu0
        %v1341 = vpop.f32.mrb[0].mxu0
        %v1342 = vadd.f32 %v1229, %v1341
        %v1343 = vpop.f32.mrb[0].mxu0
        %1344 = vmatprep.mubr.bf16.mxu0 %v336
        %1345 = vmatmul.mubr.bf16.gmra.mrb[0].mxu0 %v521
        %v1346 = vpop.f32.mrb[0].mxu0
        %v1347 = vadd.f32 %v1234, %v1346
        %v1348 = vpop.f32.mrb[0].mxu0
        %v1349 = vpop.f32.mrb[0].mxu0
        %v1350 = vadd.f32 %v1237, %v1349
        %v1351 = vpop.f32.mrb[0].mxu0
        %1352 = vmatprep.mubr.bf16.mxu0 %v337
        %1353 = vmatmul.mubr.bf16.gmra.mrb[0].mxu0 %v524
        %v1354 = vpop.f32.mrb[0].mxu0
        %v1355 = vadd.f32 %v1242, %v1354
        %v1356 = vpop.f32.mrb[0].mxu0
        %v1357 = vpop.f32.mrb[0].mxu0
        %v1358 = vadd.f32 %v1245, %v1357
        %v1359 = vpop.f32.mrb[0].mxu0
        %1360 = vmatprep.mubr.bf16.mxu0 %v338
        %1361 = vmatmul.mubr.bf16.gmra.mrb[0].mxu0 %v527
        %v1362 = vpop.f32.mrb[0].mxu0
        %v1363 = vadd.f32 %v1250, %v1362
        %v1364 = vpop.f32.mrb[0].mxu0
        %v1365 = vpop.f32.mrb[0].mxu0
        %v1366 = vadd.f32 %v1253, %v1365
        %v1367 = vpop.f32.mrb[0].mxu0
        %1368 = vmatprep.mubr.bf16.mxu0 %v339
        %1369 = vmatmul.mubr.bf16.gmra.mrb[0].mxu0 %v530
        %v1370 = vpop.f32.mrb[0].mxu0
        %v1371 = vadd.f32 %v1258, %v1370
        %v1372 = vpop.f32.mrb[0].mxu0
        %v1373 = vpop.f32.mrb[0].mxu0
        %v1374 = vadd.f32 %v1261, %v1373
        %v1375 = vpop.f32.mrb[0].mxu0
        %1376 = vmatprep.mubr.bf16.mxu0 %v340
        %1377 = vmatmul.mubr.bf16.gmra.mrb[0].mxu0 %v533
        %v1378 = vpop.f32.mrb[0].mxu0
        %v1379 = vadd.f32 %v1266, %v1378
        %v1380 = vpop.f32.mrb[0].mxu0
        %v1381 = vpop.f32.mrb[0].mxu0
        %v1382 = vadd.f32 %v1269, %v1381
        %v1383 = vpop.f32.mrb[0].mxu0
        %1384 = vmatprep.mubr.bf16.mxu0 %v341
        %1385 = vmatmul.mubr.bf16.gmra.mrb[0].mxu0 %v536
        %v1386 = vpop.f32.mrb[0].mxu0
        %v1387 = vadd.f32 %v1274, %v1386
        %v1388 = vpop.f32.mrb[0].mxu0
        %v1389 = vpop.f32.mrb[0].mxu0
        %v1390 = vadd.f32 %v1277, %v1389
        %v1391 = vpop.f32.mrb[0].mxu0
        %1392 = vmatprep.mubr.bf16.mxu0 %v342
        %1393 = vmatmul.mubr.bf16.gmra.mrb[0].mxu0 %v539
        %v1394 = vpop.f32.mrb[0].mxu0
        %v1395 = vadd.f32 %v1282, %v1394
        %v1396 = vpop.f32.mrb[0].mxu0
        %v1397 = vpop.f32.mrb[0].mxu0
        %v1398 = vadd.f32 %v1285, %v1397
        %v1399 = vpop.f32.mrb[0].mxu0
        %1400 = vmatprep.mubr.bf16.mxu0 %v343
        %1401 = vmatmul.mubr.bf16.gmra.mrb[0].mxu0 %v542
        %v1402 = vpop.f32.mrb[0].mxu0
        %v1403 = vadd.f32 %v1290, %v1402
        %v1404 = vpop.f32.mrb[0].mxu0
        %v1405 = vpop.f32.mrb[0].mxu0
        %v1406 = vadd.f32 %v1293, %v1405
        %v1407 = vpop.f32.mrb[0].mxu0
        %1408 = vmatprep.mubr.bf16.mxu0 %v560
        %1409 = vmatmul.mubr.bf16.gmra.mrb[0].mxu0 %v545
        %v1410 = vpop.f32.mrb[0].mxu0
        %v1411 = vadd.f32 %v1298, %v1410
        %v1412 = vpop.f32.mrb[0].mxu0
        %v1413 = vpop.f32.mrb[0].mxu0
        %v1414 = vadd.f32 %v1301, %v1413
        %v1415 = vpop.f32.mrb[0].mxu0
        %1416 = vdwg.mxu0
        %1417 = vmatprep.subr.bf16.mxu0 0
        %1418 = vmatpush1.bf16.msra.mxu0 %v1079
        %1419 = vmatprep.subr.bf16.mxu0 0
        %1420 = vmatpush1.bf16.msra.mxu0 %v1080
        %1421 = vmatprep.subr.bf16.mxu0 0
        %1422 = vmatpush1.bf16.msra.mxu0 %v1081
        %1423 = vmatprep.subr.bf16.mxu0 0
        %1424 = vmatpush1.bf16.msra.mxu0 %v1082
        %1425 = vmatprep.subr.bf16.mxu0 0
        %1426 = vmatpush1.bf16.msra.mxu0 %v1083
        %1427 = vmatprep.subr.bf16.mxu0 0
        %1428 = vmatpush1.bf16.msra.mxu0 %v1084
        %1429 = vmatprep.subr.bf16.mxu0 0
        %1430 = vmatpush1.bf16.msra.mxu0 %v1085
        %1431 = vmatprep.subr.bf16.mxu0 0
        %1432 = vmatpush1.bf16.msra.mxu0 %v1086
        %1433 = vmatprep.subr.bf16.mxu0 0
        %1434 = vmatpush1.bf16.msra.mxu0 %v1087
        %1435 = vmatprep.subr.bf16.mxu0 0
        %1436 = vmatpush1.bf16.msra.mxu0 %v1088
        %1437 = vmatprep.subr.bf16.mxu0 0
        %1438 = vmatpush1.bf16.msra.mxu0 %v1089
        %1439 = vmatprep.subr.bf16.mxu0 0
        %1440 = vmatpush1.bf16.msra.mxu0 %v1090
        %1441 = vmatprep.subr.bf16.mxu0 0
        %1442 = vmatpush1.bf16.msra.mxu0 %v1091
        %1443 = vmatprep.subr.bf16.mxu0 0
        %1444 = vmatpush1.bf16.msra.mxu0 %v1092
        %1445 = vmatprep.subr.bf16.mxu0 0
        %1446 = vmatpush1.bf16.msra.mxu0 %v1093
        %1447 = vmatprep.subr.bf16.mxu0 0
        %1448 = vmatpush1.bf16.msra.mxu0 %v1094
        %1449 = vmatprep.mubr.bf16.mxu0 %v521
        %1450 = vmatmul.mubr.bf16.gmra.mrb[0].mxu0 %v408
        %v1451 = vpop.f32.mrb[0].mxu0
        %v1452 = vadd.f32 %v1339, %v1451
        %v1453 = vpop.f32.mrb[0].mxu0
        %v1454 = vpop.f32.mrb[0].mxu0
        %v1455 = vadd.f32 %v1342, %v1454
        %v1456 = vpop.f32.mrb[0].mxu0
        %1457 = vmatprep.mubr.bf16.mxu0 %v524
        %1458 = vmatmul.mubr.bf16.gmra.mrb[0].mxu0 %v420
        %v1459 = vpop.f32.mrb[0].mxu0
        %v1460 = vadd.f32 %v1347, %v1459
        %v1461 = vpop.f32.mrb[0].mxu0
        %v1462 = vpop.f32.mrb[0].mxu0
        %v1463 = vadd.f32 %v1350, %v1462
        %v1464 = vpop.f32.mrb[0].mxu0
        %1465 = vmatprep.mubr.bf16.mxu0 %v527
        %1466 = vmatmul.mubr.bf16.gmra.mrb[0].mxu0 %v432
        %v1467 = vpop.f32.mrb[0].mxu0
        %v1468 = vadd.f32 %v1355, %v1467
        %v1469 = vpop.f32.mrb[0].mxu0
        %v1470 = vpop.f32.mrb[0].mxu0
        %v1471 = vadd.f32 %v1358, %v1470
        %v1472 = vpop.f32.mrb[0].mxu0
        %1473 = vmatprep.mubr.bf16.mxu0 %v530
        %1474 = vmatmul.mubr.bf16.gmra.mrb[0].mxu0 %v444
        %v1475 = vpop.f32.mrb[0].mxu0
        %v1476 = vadd.f32 %v1363, %v1475
        %v1477 = vpop.f32.mrb[0].mxu0
        %v1478 = vpop.f32.mrb[0].mxu0
        %v1479 = vadd.f32 %v1366, %v1478
        %v1480 = vpop.f32.mrb[0].mxu0
        %1481 = vmatprep.mubr.bf16.mxu0 %v533
        %1482 = vmatmul.mubr.bf16.gmra.mrb[0].mxu0 %v456
        %v1483 = vpop.f32.mrb[0].mxu0
        %v1484 = vadd.f32 %v1371, %v1483
        %v1485 = vpop.f32.mrb[0].mxu0
        %v1486 = vpop.f32.mrb[0].mxu0
        %v1487 = vadd.f32 %v1374, %v1486
        %v1488 = vpop.f32.mrb[0].mxu0
        %1489 = vmatprep.mubr.bf16.mxu0 %v536
        %1490 = vmatmul.mubr.bf16.gmra.mrb[0].mxu0 %v468
        %v1491 = vpop.f32.mrb[0].mxu0
        %v1492 = vadd.f32 %v1379, %v1491
        %v1493 = vpop.f32.mrb[0].mxu0
        %v1494 = vpop.f32.mrb[0].mxu0
        %v1495 = vadd.f32 %v1382, %v1494
        %v1496 = vpop.f32.mrb[0].mxu0
        %1497 = vmatprep.mubr.bf16.mxu0 %v539
        %1498 = vmatmul.mubr.bf16.gmra.mrb[0].mxu0 %v480
        %v1499 = vpop.f32.mrb[0].mxu0
        %v1500 = vadd.f32 %v1387, %v1499
        %v1501 = vpop.f32.mrb[0].mxu0
        %v1502 = vpop.f32.mrb[0].mxu0
        %v1503 = vadd.f32 %v1390, %v1502
        %v1504 = vpop.f32.mrb[0].mxu0
        %1505 = vmatprep.mubr.bf16.mxu0 %v542
        %1506 = vmatmul.mubr.bf16.gmra.mrb[0].mxu0 %v492
        %v1507 = vpop.f32.mrb[0].mxu0
        %v1508 = vadd.f32 %v1395, %v1507
        %v1509 = vpop.f32.mrb[0].mxu0
        %v1510 = vpop.f32.mrb[0].mxu0
        %v1511 = vadd.f32 %v1398, %v1510
        %v1512 = vpop.f32.mrb[0].mxu0
        %1513 = vmatprep.mubr.bf16.mxu0 %v545
        %1514 = vmatmul.mubr.bf16.gmra.mrb[0].mxu0 %v504
        %v1515 = vpop.f32.mrb[0].mxu0
        %v1516 = vadd.f32 %v1403, %v1515
        %v1517 = vpop.f32.mrb[0].mxu0
        %v1518 = vpop.f32.mrb[0].mxu0
        %v1519 = vadd.f32 %v1406, %v1518
        %v1520 = vpop.f32.mrb[0].mxu0
        %1521 = vmatprep.mubr.bf16.mxu0 %v580
        %1522 = vmatmul.mubr.bf16.gmra.mrb[0].mxu0 %v576
        %v1523 = vpop.f32.mrb[0].mxu0
        %v1524 = vadd.f32 %v1411, %v1523
        %v1525 = vpop.f32.mrb[0].mxu0
        %v1526 = vpop.f32.mrb[0].mxu0
        %v1527 = vadd.f32 %v1414, %v1526
        %v1528 = vpop.f32.mrb[0].mxu0
        %1529 = vdwg.mxu0
        %1530 = vmatprep.subr.bf16.mxu0 0
        %1531 = vmatpush1.bf16.msra.mxu0 %v1095
        %1532 = vmatprep.subr.bf16.mxu0 0
        %1533 = vmatpush1.bf16.msra.mxu0 %v1096
        %1534 = vmatprep.subr.bf16.mxu0 0
        %1535 = vmatpush1.bf16.msra.mxu0 %v1097
        %1536 = vmatprep.subr.bf16.mxu0 0
        %1537 = vmatpush1.bf16.msra.mxu0 %v1098
        %1538 = vmatprep.subr.bf16.mxu0 0
        %1539 = vmatpush1.bf16.msra.mxu0 %v1099
        %1540 = vmatprep.subr.bf16.mxu0 0
        %1541 = vmatpush1.bf16.msra.mxu0 %v1100
        %1542 = vmatprep.subr.bf16.mxu0 0
        %1543 = vmatpush1.bf16.msra.mxu0 %v1101
        %1544 = vmatprep.subr.bf16.mxu0 0
        %1545 = vmatpush1.bf16.msra.mxu0 %v1102
        %1546 = vmatprep.subr.bf16.mxu0 0
        %1547 = vmatpush1.bf16.msra.mxu0 %v1103
        %1548 = vmatprep.subr.bf16.mxu0 0
        %1549 = vmatpush1.bf16.msra.mxu0 %v1104
        %1550 = vmatprep.subr.bf16.mxu0 0
        %1551 = vmatpush1.bf16.msra.mxu0 %v1105
        %1552 = vmatprep.subr.bf16.mxu0 0
        %1553 = vmatpush1.bf16.msra.mxu0 %v1106
        %1554 = vmatprep.subr.bf16.mxu0 0
        %1555 = vmatpush1.bf16.msra.mxu0 %v1107
        %1556 = vmatprep.subr.bf16.mxu0 0
        %1557 = vmatpush1.bf16.msra.mxu0 %v1108
        %1558 = vmatprep.subr.bf16.mxu0 0
        %1559 = vmatpush1.bf16.msra.mxu0 %v1109
        %1560 = vmatprep.subr.bf16.mxu0 0
        %1561 = vmatpush1.bf16.msra.mxu0 %v1110
        %1562 = vmatprep.mubr.bf16.mxu0 %v420
        %1563 = vmatmul.mubr.bf16.gmra.mrb[0].mxu0 %v336
        %v1564 = vpop.f32.mrb[0].mxu0
        %v1565 = vadd.f32 %v1452, %v1564
        %v1566 = vpop.f32.mrb[0].mxu0
        %v1567 = vpop.f32.mrb[0].mxu0
        %v1568 = vadd.f32 %v1455, %v1567
        %v1569 = vpop.f32.mrb[0].mxu0
        %1570 = vmatprep.mubr.bf16.mxu0 %v432
        %1571 = vmatmul.mubr.bf16.gmra.mrb[0].mxu0 %v337
        %v1572 = vpop.f32.mrb[0].mxu0
        %v1573 = vadd.f32 %v1460, %v1572
        %v1574 = vpop.f32.mrb[0].mxu0
        %v1575 = vpop.f32.mrb[0].mxu0
        %v1576 = vadd.f32 %v1463, %v1575
        %v1577 = vpop.f32.mrb[0].mxu0
        %1578 = vmatprep.mubr.bf16.mxu0 %v444
        %1579 = vmatmul.mubr.bf16.gmra.mrb[0].mxu0 %v338
        %v1580 = vpop.f32.mrb[0].mxu0
        %v1581 = vadd.f32 %v1468, %v1580
        %v1582 = vpop.f32.mrb[0].mxu0
        %v1583 = vpop.f32.mrb[0].mxu0
        %v1584 = vadd.f32 %v1471, %v1583
        %v1585 = vpop.f32.mrb[0].mxu0
        %1586 = vmatprep.mubr.bf16.mxu0 %v456
        %1587 = vmatmul.mubr.bf16.gmra.mrb[0].mxu0 %v339
        %v1588 = vpop.f32.mrb[0].mxu0
        %v1589 = vadd.f32 %v1476, %v1588
        %v1590 = vpop.f32.mrb[0].mxu0
        %v1591 = vpop.f32.mrb[0].mxu0
        %v1592 = vadd.f32 %v1479, %v1591
        %v1593 = vpop.f32.mrb[0].mxu0
        %1594 = vmatprep.mubr.bf16.mxu0 %v468
        %1595 = vmatmul.mubr.bf16.gmra.mrb[0].mxu0 %v340
        %v1596 = vpop.f32.mrb[0].mxu0
        %v1597 = vadd.f32 %v1484, %v1596
        %v1598 = vpop.f32.mrb[0].mxu0
        %v1599 = vpop.f32.mrb[0].mxu0
        %v1600 = vadd.f32 %v1487, %v1599
        %v1601 = vpop.f32.mrb[0].mxu0
        %1602 = vmatprep.mubr.bf16.mxu0 %v480
        %1603 = vmatmul.mubr.bf16.gmra.mrb[0].mxu0 %v341
        %v1604 = vpop.f32.mrb[0].mxu0
        %v1605 = vadd.f32 %v1492, %v1604
        %v1606 = vpop.f32.mrb[0].mxu0
        %v1607 = vpop.f32.mrb[0].mxu0
        %v1608 = vadd.f32 %v1495, %v1607
        %v1609 = vpop.f32.mrb[0].mxu0
        %1610 = vmatprep.mubr.bf16.mxu0 %v492
        %1611 = vmatmul.mubr.bf16.gmra.mrb[0].mxu0 %v342
        %v1612 = vpop.f32.mrb[0].mxu0
        %v1613 = vadd.f32 %v1500, %v1612
        %v1614 = vpop.f32.mrb[0].mxu0
        %v1615 = vpop.f32.mrb[0].mxu0
        %v1616 = vadd.f32 %v1503, %v1615
        %v1617 = vpop.f32.mrb[0].mxu0
        %1618 = vmatprep.mubr.bf16.mxu0 %v504
        %1619 = vmatmul.mubr.bf16.gmra.mrb[0].mxu0 %v343
        %v1620 = vpop.f32.mrb[0].mxu0
        %v1621 = vadd.f32 %v1508, %v1620
        %v1622 = vpop.f32.mrb[0].mxu0
        %v1623 = vpop.f32.mrb[0].mxu0
        %v1624 = vadd.f32 %v1511, %v1623
        %v1625 = vpop.f32.mrb[0].mxu0
        %1626 = vmatprep.mubr.bf16.mxu0 %v576
        %1627 = vmatmul.mubr.bf16.gmra.mrb[0].mxu0 %v560
        %v1628 = vpop.f32.mrb[0].mxu0
        %v1629 = vadd.f32 %v1516, %v1628
        %v1630 = vpop.f32.mrb[0].mxu0
        %v1631 = vpop.f32.mrb[0].mxu0
        %v1632 = vadd.f32 %v1519, %v1631
        %v1633 = vpop.f32.mrb[0].mxu0
        %1634 = vmatprep.mubr.bf16.mxu0 %v602
        %1635 = vmatmul.mubr.bf16.gmra.mrb[0].mxu0 %v586
        %v1636 = vpop.f32.mrb[0].mxu0
        %v1637 = vadd.f32 %v1524, %v1636
        %v1638 = vpop.f32.mrb[0].mxu0
        %v1639 = vpop.f32.mrb[0].mxu0
        %v1640 = vadd.f32 %v1527, %v1639
        %v1641 = vpop.f32.mrb[0].mxu0
        %1642 = vdwg.mxu0
        %1643 = vmatprep.subr.bf16.mxu0 0
        %1644 = vmatpush1.bf16.msra.mxu0 %v1111
        %1645 = vmatprep.subr.bf16.mxu0 0
        %1646 = vmatpush1.bf16.msra.mxu0 %v1112
        %1647 = vmatprep.subr.bf16.mxu0 0
        %1648 = vmatpush1.bf16.msra.mxu0 %v1113
        %1649 = vmatprep.subr.bf16.mxu0 0
        %1650 = vmatpush1.bf16.msra.mxu0 %v1114
        %1651 = vmatprep.subr.bf16.mxu0 0
        %1652 = vmatpush1.bf16.msra.mxu0 %v1115
        %1653 = vmatprep.subr.bf16.mxu0 0
        %1654 = vmatpush1.bf16.msra.mxu0 %v1116
        %1655 = vmatprep.subr.bf16.mxu0 0
        %1656 = vmatpush1.bf16.msra.mxu0 %v1117
        %1657 = vmatprep.subr.bf16.mxu0 0
        %1658 = vmatpush1.bf16.msra.mxu0 %v1118
        %1659 = vmatprep.subr.bf16.mxu0 0
        %1660 = vmatpush1.bf16.msra.mxu0 0
        %1661 = vmatprep.subr.bf16.mxu0 0
        %1662 = vmatpush1.bf16.msra.mxu0 0
        %1663 = vmatprep.subr.bf16.mxu0 0
        %1664 = vmatpush1.bf16.msra.mxu0 0
        %1665 = vmatprep.subr.bf16.mxu0 0
        %1666 = vmatpush1.bf16.msra.mxu0 0
        %1667 = vmatprep.subr.bf16.mxu0 0
        %1668 = vmatpush1.bf16.msra.mxu0 0
        %1669 = vmatprep.subr.bf16.mxu0 0
        %1670 = vmatpush1.bf16.msra.mxu0 0
        %1671 = vmatprep.subr.bf16.mxu0 0
        %1672 = vmatpush1.bf16.msra.mxu0 0
        %1673 = vmatprep.subr.bf16.mxu0 0
        %1674 = vmatpush1.bf16.msra.mxu0 0
        %1675 = vmatprep.mubr.bf16.mxu0 0
        %1676 = vmatmul.mubr.bf16.gmra.mrb[0].mxu0 %v524
        %v1677 = vpop.f32.mrb[0].mxu0
        %v1678 = vadd.f32 %v1565, %v1677
        %v1679 = vpop.f32.mrb[0].mxu0
        %v1680 = vpop.f32.mrb[0].mxu0
        %v1681 = vadd.f32 %v1568, %v1680
        %v1682 = vpop.f32.mrb[0].mxu0
        %1683 = vmatprep.mubr.bf16.mxu0 0
        %1684 = vmatmul.mubr.bf16.gmra.mrb[0].mxu0 %v527
        %v1685 = vpop.f32.mrb[0].mxu0
        %v1686 = vadd.f32 %v1573, %v1685
        %v1687 = vpop.f32.mrb[0].mxu0
        %v1688 = vpop.f32.mrb[0].mxu0
        %v1689 = vadd.f32 %v1576, %v1688
        %v1690 = vpop.f32.mrb[0].mxu0
        %1691 = vmatprep.mubr.bf16.mxu0 0
        %1692 = vmatmul.mubr.bf16.gmra.mrb[0].mxu0 %v530
        %v1693 = vpop.f32.mrb[0].mxu0
        %v1694 = vadd.f32 %v1581, %v1693
        %v1695 = vpop.f32.mrb[0].mxu0
        %v1696 = vpop.f32.mrb[0].mxu0
        %v1697 = vadd.f32 %v1584, %v1696
        %v1698 = vpop.f32.mrb[0].mxu0
        %1699 = vmatprep.mubr.bf16.mxu0 0
        %1700 = vmatmul.mubr.bf16.gmra.mrb[0].mxu0 %v533
        %v1701 = vpop.f32.mrb[0].mxu0
        %v1702 = vadd.f32 %v1589, %v1701
        %v1703 = vpop.f32.mrb[0].mxu0
        %v1704 = vpop.f32.mrb[0].mxu0
        %v1705 = vadd.f32 %v1592, %v1704
        %v1706 = vpop.f32.mrb[0].mxu0
        %1707 = vmatprep.mubr.bf16.mxu0 0
        %1708 = vmatmul.mubr.bf16.gmra.mrb[0].mxu0 %v536
        %v1709 = vpop.f32.mrb[0].mxu0
        %v1710 = vadd.f32 %v1597, %v1709
        %v1711 = vpop.f32.mrb[0].mxu0
        %v1712 = vpop.f32.mrb[0].mxu0
        %v1713 = vadd.f32 %v1600, %v1712
        %v1714 = vpop.f32.mrb[0].mxu0
        %1715 = vmatprep.mubr.bf16.mxu0 0
        %1716 = vmatmul.mubr.bf16.gmra.mrb[0].mxu0 %v539
        %v1717 = vpop.f32.mrb[0].mxu0
        %v1718 = vadd.f32 %v1605, %v1717
        %v1719 = vpop.f32.mrb[0].mxu0
        %v1720 = vpop.f32.mrb[0].mxu0
        %v1721 = vadd.f32 %v1608, %v1720
        %v1722 = vpop.f32.mrb[0].mxu0
        %1723 = vmatprep.mubr.bf16.mxu0 0
        %1724 = vmatmul.mubr.bf16.gmra.mrb[0].mxu0 %v542
        %v1725 = vpop.f32.mrb[0].mxu0
        %v1726 = vadd.f32 %v1613, %v1725
        %v1727 = vpop.f32.mrb[0].mxu0
        %v1728 = vpop.f32.mrb[0].mxu0
        %v1729 = vadd.f32 %v1616, %v1728
        %v1730 = vpop.f32.mrb[0].mxu0
        %1731 = vmatprep.mubr.bf16.mxu0 0
        %1732 = vmatmul.mubr.bf16.gmra.mrb[0].mxu0 %v545
        %v1733 = vpop.f32.mrb[0].mxu0
        %v1734 = vadd.f32 %v1621, %v1733
        %v1735 = vpop.f32.mrb[0].mxu0
        %v1736 = vpop.f32.mrb[0].mxu0
        %v1737 = vadd.f32 %v1624, %v1736
        %v1738 = vpop.f32.mrb[0].mxu0
        %1739 = vmatprep.mubr.bf16.mxu0 0
        %1740 = vmatmul.mubr.bf16.gmra.mrb[0].mxu0 %v580
        %v1741 = vpop.f32.mrb[0].mxu0
        %v1742 = vadd.f32 %v1629, %v1741
        %v1743 = vpop.f32.mrb[0].mxu0
        %v1744 = vpop.f32.mrb[0].mxu0
        %v1745 = vadd.f32 %v1632, %v1744
        %v1746 = vpop.f32.mrb[0].mxu0
        %1747 = vmatprep.mubr.bf16.mxu0 0
        %1748 = vmatmul.mubr.bf16.gmra.mrb[0].mxu0 %v606
        %v1749 = vpop.f32.mrb[0].mxu0
        %v1750 = vadd.f32 %v1637, %v1749
        %v1751 = vpop.f32.mrb[0].mxu0
        %v1752 = vpop.f32.mrb[0].mxu0
        %v1753 = vadd.f32 %v1640, %v1752
        %v1754 = vpop.f32.mrb[0].mxu0
        %1755 = vdwg.mxu0
        %v1756 = vmax.f32 %v1678, 0.0
        %v1757 = vmax.f32 %v1681, 0.0
        %v1758 = vmax.f32 %v1686, 0.0
        %v1759 = vmax.f32 %v1689, 0.0
        %v1760 = vmax.f32 %v1694, 0.0
        %v1761 = vmax.f32 %v1697, 0.0
        %v1762 = vmax.f32 %v1702, 0.0
        %v1763 = vmax.f32 %v1705, 0.0
        %v1764 = vmax.f32 %v1710, 0.0
        %v1765 = vmax.f32 %v1713, 0.0
        %v1766 = vmax.f32 %v1718, 0.0
        %v1767 = vmax.f32 %v1721, 0.0
        %v1768 = vmax.f32 %v1726, 0.0
        %v1769 = vmax.f32 %v1729, 0.0
        %v1770 = vmax.f32 %v1734, 0.0
        %v1771 = vmax.f32 %v1737, 0.0
        %v1772 = vmax.f32 %v1742, 0.0
        %v1773 = vmax.f32 %v1745, 0.0
        %v1774 = vmax.f32 %v1750, 0.0
        %v1775 = vmax.f32 %v1753, 0.0
        %s1776 = ssub.s32 %s254, 1
        %v1777 = vstv %s1776
        %v1778 = vadd.s32 %v1777, 1
        %v1779 = vadd.s32 %v1777, 2
        %v1780 = vadd.s32 %v1777, 3
        %v1781 = vadd.s32 %v1777, 4
        %v1782 = vadd.s32 %v1777, 5
        %v1783 = vadd.s32 %v1777, 6
        %v1784 = vadd.s32 %v1777, 7
        %v1785 = vadd.s32 %v1777, 8
        %v1786 = vadd.s32 %v1777, 9
        %vm1787 = vcmp.ge.s32.totalorder %v1777, 0
        %vm1788 = vcmp.ge.s32.totalorder %v1778, 0
        %vm1789 = vcmp.ge.s32.totalorder %v1779, 0
        %vm1790 = vcmp.ge.s32.totalorder %v1780, 0
        %vm1791 = vcmp.ge.s32.totalorder %v1781, 0
        %vm1792 = vcmp.ge.s32.totalorder %v1782, 0
        %vm1793 = vcmp.ge.s32.totalorder %v1783, 0
        %vm1794 = vcmp.ge.s32.totalorder %v1784, 0
        %vm1795 = vcmp.ge.s32.totalorder %v1785, 0
        %vm1796 = vcmp.ge.s32.totalorder %v1786, 0
        %vm1797 = vcmp.lt.s32.totalorder %v1777, 16
        %vm1798 = vcmp.lt.s32.totalorder %v1778, 16
        %vm1799 = vcmp.lt.s32.totalorder %v1779, 16
        %vm1800 = vcmp.lt.s32.totalorder %v1780, 16
        %vm1801 = vcmp.lt.s32.totalorder %v1781, 16
        %vm1802 = vcmp.lt.s32.totalorder %v1782, 16
        %vm1803 = vcmp.lt.s32.totalorder %v1783, 16
        %vm1804 = vcmp.lt.s32.totalorder %v1784, 16
        %vm1805 = vcmp.lt.s32.totalorder %v1785, 16
        %vm1806 = vcmp.lt.s32.totalorder %v1786, 16
        %vm1807 = vmand %vm1787, %vm1797
        %vm1808 = vmand %vm1788, %vm1798
        %vm1809 = vmand %vm1789, %vm1799
        %vm1810 = vmand %vm1790, %vm1800
        %vm1811 = vmand %vm1791, %vm1801
        %vm1812 = vmand %vm1792, %vm1802
        %vm1813 = vmand %vm1793, %vm1803
        %vm1814 = vmand %vm1794, %vm1804
        %vm1815 = vmand %vm1795, %vm1805
        %vm1816 = vmand %vm1796, %vm1806
        %v1817 = vsel %vm1807, 1, 0
        %v1818 = vsel %vm1808, 1, 0
        %v1819 = vsel %vm1809, 1, 0
        %v1820 = vsel %vm1810, 1, 0
        %v1821 = vsel %vm1811, 1, 0
        %v1822 = vsel %vm1812, 1, 0
        %v1823 = vsel %vm1813, 1, 0
        %v1824 = vsel %vm1814, 1, 0
        %v1825 = vsel %vm1815, 1, 0
        %v1826 = vsel %vm1816, 1, 0
        %vm1827 = vcmp.eq.s32.totalorder %v1817, 1
        %vm1828 = vcmp.eq.s32.totalorder %v1818, 1
        %vm1829 = vcmp.eq.s32.totalorder %v1819, 1
        %vm1830 = vcmp.eq.s32.totalorder %v1820, 1
        %vm1831 = vcmp.eq.s32.totalorder %v1821, 1
        %vm1832 = vcmp.eq.s32.totalorder %v1822, 1
        %vm1833 = vcmp.eq.s32.totalorder %v1823, 1
        %vm1834 = vcmp.eq.s32.totalorder %v1824, 1
        %vm1835 = vcmp.eq.s32.totalorder %v1825, 1
        %vm1836 = vcmp.eq.s32.totalorder %v1826, 1
        %v1837 = vsel %vm1827, %v1756, 0.0
        %v1838 = vsel %vm1827, %v1757, 0.0
        %v1839 = vsel %vm1828, %v1758, 0.0
        %v1840 = vsel %vm1828, %v1759, 0.0
        %v1841 = vsel %vm1829, %v1760, 0.0
        %v1842 = vsel %vm1829, %v1761, 0.0
        %v1843 = vsel %vm1830, %v1762, 0.0
        %v1844 = vsel %vm1830, %v1763, 0.0
        %v1845 = vsel %vm1831, %v1764, 0.0
        %v1846 = vsel %vm1831, %v1765, 0.0
        %v1847 = vsel %vm1832, %v1766, 0.0
        %v1848 = vsel %vm1832, %v1767, 0.0
        %v1849 = vsel %vm1833, %v1768, 0.0
        %v1850 = vsel %vm1833, %v1769, 0.0
        %v1851 = vsel %vm1834, %v1770, 0.0
        %v1852 = vsel %vm1834, %v1771, 0.0
        %v1853 = vsel %vm1835, %v1772, 0.0
        %v1854 = vsel %vm1835, %v1773, 0.0
        %v1855 = vsel %vm1836, %v1774, 0.0
        %v1856 = vsel %vm1836, %v1775, 0.0
        %v1857 = vpack.c.bf16 %v1838, %v1837
        %v1858 = vpack.c.bf16 %v1840, %v1839
        %v1859 = vpack.c.bf16 %v1842, %v1841
        %v1860 = vpack.c.bf16 %v1844, %v1843
        %v1861 = vpack.c.bf16 %v1846, %v1845
        %v1862 = vpack.c.bf16 %v1848, %v1847
        %v1863 = vpack.c.bf16 %v1850, %v1849
        %v1864 = vpack.c.bf16 %v1852, %v1851
        %v1865 = vpack.c.bf16 %v1854, %v1853
        %v1866 = vpack.c.bf16 %v1856, %v1855
        %v1868 = vshrl.u32 %v1857, 16
        %v1870 = vrot.slane %v1868, 7
        %v1871 = vshll.u32 %v1857, 16
        %v1873 = vor.u32 %v1870, %v1871
        %v1875 = vshrl.u32 %v1858, 16
        %v1877 = vrot.slane %v1875, 7
        %v1878 = vshll.u32 %v1858, 16
        %v1880 = vor.u32 %v1877, %v1878
        %v1882 = vshrl.u32 %v1859, 16
        %v1884 = vrot.slane %v1882, 7
        %v1885 = vshll.u32 %v1859, 16
        %v1887 = vor.u32 %v1884, %v1885
        %v1889 = vshrl.u32 %v1860, 16
        %v1891 = vrot.slane %v1889, 7
        %v1892 = vshll.u32 %v1860, 16
        %v1894 = vor.u32 %v1891, %v1892
        %v1896 = vshrl.u32 %v1861, 16
        %v1898 = vrot.slane %v1896, 7
        %v1899 = vshll.u32 %v1861, 16
        %v1901 = vor.u32 %v1898, %v1899
        %v1903 = vshrl.u32 %v1862, 16
        %v1905 = vrot.slane %v1903, 7
        %v1906 = vshll.u32 %v1862, 16
        %v1908 = vor.u32 %v1905, %v1906
        %v1910 = vshrl.u32 %v1863, 16
        %v1912 = vrot.slane %v1910, 7
        %v1913 = vshll.u32 %v1863, 16
        %v1915 = vor.u32 %v1912, %v1913
        %v1917 = vshrl.u32 %v1864, 16
        %v1919 = vrot.slane %v1917, 7
        %v1920 = vshll.u32 %v1864, 16
        %v1922 = vor.u32 %v1919, %v1920
        %v1924 = vshrl.u32 %v1865, 16
        %v1926 = vrot.slane %v1924, 7
        %v1927 = vshll.u32 %v1865, 16
        %v1929 = vor.u32 %v1926, %v1927
        %v1931 = vshrl.u32 %v1866, 16
        %v1933 = vrot.slane %v1931, 7
        %v1934 = vshll.u32 %v1866, 16
        %v1936 = vor.u32 %v1933, %v1934
        %vm1957 = vcmask 1040384
        %vm1958 = vsmask.f32 256
        %vm1959 = vmand %vm1957, %vm1958
        %v1960 = vsel %vm1959, 0, %v1873
        %v1961 = vsel %vm1959, 0, %v1880
        %v1962 = vsel %vm1959, 0, %v1887
        %v1963 = vsel %vm1959, 0, %v1894
        %v1964 = vsel %vm1959, 0, %v1901
        %v1965 = vsel %vm1959, 0, %v1908
        %v1966 = vsel %vm1959, 0, %v1915
        %v1967 = vsel %vm1959, 0, %v1922
        %v1968 = vsel %vm1959, 0, %v1929
        %v1969 = vsel %vm1959, 0, %v1936
        %v1970 = vsel %vm1959, %v1870, 0
        %v1971 = vsel %vm1959, %v1877, 0
        %v1972 = vsel %vm1959, %v1884, 0
        %v1973 = vsel %vm1959, %v1891, 0
        %v1974 = vsel %vm1959, %v1898, 0
        %v1975 = vsel %vm1959, %v1905, 0
        %v1976 = vsel %vm1959, %v1912, 0
        %v1977 = vsel %vm1959, %v1919, 0
        %v1978 = vsel %vm1959, %v1926, 0
        %v1979 = vsel %vm1959, %v1933, 0
        %v1981 = vshrl.u32 %v1960, 16
        %v1983 = vshll.u32 %v1960, 16
        %v1985 = vrot.slane %v1983, 1
        %v1986 = vor.u32 %v1981, %v1985
        %v1988 = vshll.u32 %v1970, 16
        %v1990 = vrot.slane %v1988, 1
        %v1991 = vsel %vm384, %v1986, %v1990
        %v1993 = vshrl.u32 %v1961, 16
        %v1995 = vshll.u32 %v1961, 16
        %v1997 = vrot.slane %v1995, 1
        %v1998 = vor.u32 %v1993, %v1997
        %v2000 = vshll.u32 %v1971, 16
        %v2002 = vrot.slane %v2000, 1
        %v2003 = vsel %vm384, %v1998, %v2002
        %v2005 = vshrl.u32 %v1962, 16
        %v2007 = vshll.u32 %v1962, 16
        %v2009 = vrot.slane %v2007, 1
        %v2010 = vor.u32 %v2005, %v2009
        %v2012 = vshll.u32 %v1972, 16
        %v2014 = vrot.slane %v2012, 1
        %v2015 = vsel %vm384, %v2010, %v2014
        %v2017 = vshrl.u32 %v1963, 16
        %v2019 = vshll.u32 %v1963, 16
        %v2021 = vrot.slane %v2019, 1
        %v2022 = vor.u32 %v2017, %v2021
        %v2024 = vshll.u32 %v1973, 16
        %v2026 = vrot.slane %v2024, 1
        %v2027 = vsel %vm384, %v2022, %v2026
        %v2029 = vshrl.u32 %v1964, 16
        %v2031 = vshll.u32 %v1964, 16
        %v2033 = vrot.slane %v2031, 1
        %v2034 = vor.u32 %v2029, %v2033
        %v2036 = vshll.u32 %v1974, 16
        %v2038 = vrot.slane %v2036, 1
        %v2039 = vsel %vm384, %v2034, %v2038
        %v2041 = vshrl.u32 %v1965, 16
        %v2043 = vshll.u32 %v1965, 16
        %v2045 = vrot.slane %v2043, 1
        %v2046 = vor.u32 %v2041, %v2045
        %v2048 = vshll.u32 %v1975, 16
        %v2050 = vrot.slane %v2048, 1
        %v2051 = vsel %vm384, %v2046, %v2050
        %v2053 = vshrl.u32 %v1966, 16
        %v2055 = vshll.u32 %v1966, 16
        %v2057 = vrot.slane %v2055, 1
        %v2058 = vor.u32 %v2053, %v2057
        %v2060 = vshll.u32 %v1976, 16
        %v2062 = vrot.slane %v2060, 1
        %v2063 = vsel %vm384, %v2058, %v2062
        %v2065 = vshrl.u32 %v1967, 16
        %v2067 = vshll.u32 %v1967, 16
        %v2069 = vrot.slane %v2067, 1
        %v2070 = vor.u32 %v2065, %v2069
        %v2072 = vshll.u32 %v1977, 16
        %v2074 = vrot.slane %v2072, 1
        %v2075 = vsel %vm384, %v2070, %v2074
        %v2100 = vrot.slane %v1960, 1
        %v2101 = vrot.slane %v1970, 1
        %v2102 = vsel %vm515, %v2100, %v2101
        %v2103 = vrot.slane %v1961, 1
        %v2104 = vrot.slane %v1971, 1
        %v2105 = vsel %vm515, %v2103, %v2104
        %v2106 = vrot.slane %v1962, 1
        %v2107 = vrot.slane %v1972, 1
        %v2108 = vsel %vm515, %v2106, %v2107
        %v2109 = vrot.slane %v1963, 1
        %v2110 = vrot.slane %v1973, 1
        %v2111 = vsel %vm515, %v2109, %v2110
        %v2112 = vrot.slane %v1964, 1
        %v2113 = vrot.slane %v1974, 1
        %v2114 = vsel %vm515, %v2112, %v2113
        %v2115 = vrot.slane %v1965, 1
        %v2116 = vrot.slane %v1975, 1
        %v2117 = vsel %vm515, %v2115, %v2116
        %v2118 = vrot.slane %v1966, 1
        %v2119 = vrot.slane %v1976, 1
        %v2120 = vsel %vm515, %v2118, %v2119
        %v2121 = vrot.slane %v1967, 1
        %v2122 = vrot.slane %v1977, 1
        %v2123 = vsel %vm515, %v2121, %v2122
        %v2133 = vshrl.u32 %v1968, 16
        %v2135 = vshll.u32 %v1968, 16
        %v2137 = vrot.slane %v2135, 1
        %v2138 = vor.u32 %v2133, %v2137
        %v2140 = vshll.u32 %v1978, 16
        %v2142 = vrot.slane %v2140, 1
        %v2143 = vsel %vm384, %v2138, %v2142
        %v2147 = vrot.slane %v1968, 1
        %v2148 = vrot.slane %v1978, 1
        %v2149 = vsel %vm515, %v2147, %v2148
        %v2152 = vshrl.u32 %v1969, 16
        %v2154 = vshll.u32 %v1969, 16
        %v2156 = vrot.slane %v2154, 1
        %v2157 = vor.u32 %v2152, %v2156
        %v2159 = vshll.u32 %v1979, 16
        %v2161 = vrot.slane %v2159, 1
        %v2162 = vsel %vm384, %v2157, %v2161
        %v2166 = vrot.slane %v1969, 1
        %v2167 = vrot.slane %v1979, 1
        %v2168 = vsel %vm515, %v2166, %v2167
        %v2170 = vld [vmem:[#allocation2] sm:$0xf]
        %v2171 = vld [vmem:[#allocation2 + $0x4] sm:$0xf]
        %v2172 = vld [vmem:[#allocation2 + $0x8] sm:$0xf]
        %v2173 = vld [vmem:[#allocation2 + $0xc] sm:$0xf]
        %v2174 = vld [vmem:[#allocation2 + $0x10] sm:$0xf]
        %v2175 = vld [vmem:[#allocation2 + $0x14] sm:$0xf]
        %v2176 = vld [vmem:[#allocation2 + $0x18] sm:$0xf]
        %v2177 = vld [vmem:[#allocation2 + $0x1c] sm:$0xf]
        %v2178 = vld [vmem:[#allocation2 + $0x20] sm:$0xf]
        %v2179 = vld [vmem:[#allocation2 + $0x24] sm:$0xf]
        %v2180 = vld [vmem:[#allocation2 + $0x28] sm:$0xf]
        %v2181 = vld [vmem:[#allocation2 + $0x2c] sm:$0xf]
        %v2182 = vld [vmem:[#allocation2 + $0x30] sm:$0xf]
        %v2183 = vld [vmem:[#allocation2 + $0x34] sm:$0xf]
        %v2184 = vld [vmem:[#allocation2 + $0x38] sm:$0xf]
        %v2185 = vld [vmem:[#allocation2 + $0x3c] sm:$0xf]
        %v2186 = vld [vmem:[#allocation2 + $0x40] sm:$0xf]
        %v2187 = vld [vmem:[#allocation2 + $0x44] sm:$0xf]
        %v2188 = vld [vmem:[#allocation2 + $0x48] sm:$0xf]
        %v2189 = vld [vmem:[#allocation2 + $0x4c] sm:$0xf]
        %v2190 = vld [vmem:[#allocation2 + $0x50] sm:$0xf]
        %v2191 = vld [vmem:[#allocation2 + $0x54] sm:$0xf]
        %v2192 = vld [vmem:[#allocation2 + $0x58] sm:$0xf]
        %v2193 = vld [vmem:[#allocation2 + $0x5c] sm:$0xf]
        %v2194 = vld [vmem:[#allocation2 + $0x60] sm:$0xf]
        %v2195 = vld [vmem:[#allocation2 + $0x64] sm:$0xf]
        %v2196 = vld [vmem:[#allocation2 + $0x68] sm:$0xf]
        %v2197 = vld [vmem:[#allocation2 + $0x6c] sm:$0xf]
        %v2198 = vld [vmem:[#allocation2 + $0x70] sm:$0xf]
        %v2199 = vld [vmem:[#allocation2 + $0x74] sm:$0xf]
        %v2200 = vld [vmem:[#allocation2 + $0x78] sm:$0xf]
        %v2201 = vld [vmem:[#allocation2 + $0x7c] sm:$0xf]
        %v2202 = vld [vmem:[#allocation2 + $0x80] sm:$0xf]
        %v2203 = vld [vmem:[#allocation2 + $0x84] sm:$0xf]
        %v2204 = vld [vmem:[#allocation2 + $0x88] sm:$0xf]
        %v2205 = vld [vmem:[#allocation2 + $0x8c] sm:$0xf]
        %v2206 = vld [vmem:[#allocation2 + $0x90] sm:$0xf]
        %v2207 = vld [vmem:[#allocation2 + $0x94] sm:$0xf]
        %v2208 = vld [vmem:[#allocation2 + $0x98] sm:$0xf]
        %v2209 = vld [vmem:[#allocation2 + $0x9c] sm:$0xf]
        %v2210 = vld [vmem:[#allocation2 + $0xa0] sm:$0xf]
        %v2211 = vld [vmem:[#allocation2 + $0xa4] sm:$0xf]
        %v2212 = vld [vmem:[#allocation2 + $0xa8] sm:$0xf]
        %v2213 = vld [vmem:[#allocation2 + $0xac] sm:$0xf]
        %v2214 = vld [vmem:[#allocation2 + $0xb0] sm:$0xf]
        %v2215 = vld [vmem:[#allocation2 + $0xb4] sm:$0xf]
        %v2216 = vld [vmem:[#allocation2 + $0xb8] sm:$0xf]
        %v2217 = vld [vmem:[#allocation2 + $0xbc] sm:$0xf]
        %v2218 = vld [vmem:[#allocation2 + $0xc0] sm:$0xf]
        %v2219 = vld [vmem:[#allocation2 + $0xc4] sm:$0xf]
        %v2220 = vld [vmem:[#allocation2 + $0xc8] sm:$0xf]
        %v2221 = vld [vmem:[#allocation2 + $0xcc] sm:$0xf]
        %v2222 = vld [vmem:[#allocation2 + $0xd0] sm:$0xf]
        %v2223 = vld [vmem:[#allocation2 + $0xd4] sm:$0xf]
        %v2224 = vld [vmem:[#allocation2 + $0xd8] sm:$0xf]
        %v2225 = vld [vmem:[#allocation2 + $0xdc] sm:$0xf]
        %v2226 = vld [vmem:[#allocation2 + $0xe0] sm:$0xf]
        %v2227 = vld [vmem:[#allocation2 + $0xe4] sm:$0xf]
        %v2228 = vld [vmem:[#allocation2 + $0xe8] sm:$0xf]
        %v2229 = vld [vmem:[#allocation2 + $0xec] sm:$0xf]
        %v2230 = vld [vmem:[#allocation2 + $0xf0] sm:$0xf]
        %v2231 = vld [vmem:[#allocation2 + $0xf4] sm:$0xf]
        %v2232 = vld [vmem:[#allocation2 + $0xf8] sm:$0xf]
        %v2233 = vld [vmem:[#allocation2 + $0xfc] sm:$0xf]
        %v2234 = vld [vmem:[#allocation2 + $0x100] sm:$0xf]
        %v2235 = vld [vmem:[#allocation2 + $0x104] sm:$0xf]
        %v2236 = vld [vmem:[#allocation2 + $0x108] sm:$0xf]
        %v2237 = vld [vmem:[#allocation2 + $0x10c] sm:$0xf]
        %v2238 = vld [vmem:[#allocation2 + $0x110] sm:$0xf]
        %v2239 = vld [vmem:[#allocation2 + $0x114] sm:$0xf]
        %v2240 = vld [vmem:[#allocation2 + $0x118] sm:$0xf]
        %v2241 = vld [vmem:[#allocation2 + $0x11c] sm:$0xf]
        %v2242 = vld [vmem:[#allocation2 + $0x120] sm:$0xf]
        %v2243 = vld [vmem:[#allocation2 + $0x124] sm:$0xf]
        %v2244 = vld [vmem:[#allocation2 + $0x128] sm:$0xf]
        %v2245 = vld [vmem:[#allocation2 + $0x12c] sm:$0xf]
        %v2246 = vld [vmem:[#allocation2 + $0x130] sm:$0xf]
        %v2247 = vld [vmem:[#allocation2 + $0x134] sm:$0xf]
        %v2248 = vld [vmem:[#allocation2 + $0x138] sm:$0xf]
        %v2249 = vld [vmem:[#allocation2 + $0x13c] sm:$0xf]
        %v2250 = vld [vmem:[#allocation2 + $0x140] sm:$0xf]
        %v2251 = vld [vmem:[#allocation2 + $0x144] sm:$0xf]
        %v2252 = vld [vmem:[#allocation2 + $0x148] sm:$0xf]
        %v2253 = vld [vmem:[#allocation2 + $0x14c] sm:$0xf]
        %v2254 = vld [vmem:[#allocation2 + $0x150] sm:$0xf]
        %v2255 = vld [vmem:[#allocation2 + $0x154] sm:$0xf]
        %v2256 = vld [vmem:[#allocation2 + $0x158] sm:$0xf]
        %v2257 = vld [vmem:[#allocation2 + $0x15c] sm:$0xf]
        %v2258 = vld [vmem:[#allocation2 + $0x160] sm:$0xf]
        %v2259 = vld [vmem:[#allocation2 + $0x164] sm:$0xf]
        %v2260 = vld [vmem:[#allocation2 + $0x168] sm:$0xf]
        %v2261 = vld [vmem:[#allocation2 + $0x16c] sm:$0xf]
        %v2262 = vld [vmem:[#allocation2 + $0x170] sm:$0xf]
        %v2263 = vld [vmem:[#allocation2 + $0x174] sm:$0xf]
        %v2264 = vld [vmem:[#allocation2 + $0x178] sm:$0xf]
        %v2265 = vld [vmem:[#allocation2 + $0x17c] sm:$0xf]
        %v2266 = vld [vmem:[#allocation2 + $0x180] sm:$0xf]
        %v2267 = vld [vmem:[#allocation2 + $0x184] sm:$0xf]
        %v2268 = vld [vmem:[#allocation2 + $0x188] sm:$0xf]
        %v2269 = vld [vmem:[#allocation2 + $0x18c] sm:$0xf]
        %v2270 = vld [vmem:[#allocation2 + $0x190] sm:$0xf]
        %v2271 = vld [vmem:[#allocation2 + $0x194] sm:$0xf]
        %v2272 = vld [vmem:[#allocation2 + $0x198] sm:$0xf]
        %v2273 = vld [vmem:[#allocation2 + $0x19c] sm:$0xf]
        %v2274 = vld [vmem:[#allocation2 + $0x1a0] sm:$0xf]
        %v2275 = vld [vmem:[#allocation2 + $0x1a4] sm:$0xf]
        %v2276 = vld [vmem:[#allocation2 + $0x1a8] sm:$0xf]
        %v2277 = vld [vmem:[#allocation2 + $0x1ac] sm:$0xf]
        %v2278 = vld [vmem:[#allocation2 + $0x1b0] sm:$0xf]
        %v2279 = vld [vmem:[#allocation2 + $0x1b4] sm:$0xf]
        %v2280 = vld [vmem:[#allocation2 + $0x1b8] sm:$0xf]
        %v2281 = vld [vmem:[#allocation2 + $0x1bc] sm:$0xf]
        %v2282 = vld [vmem:[#allocation2 + $0x1c0] sm:$0xf]
        %v2283 = vld [vmem:[#allocation2 + $0x1c4] sm:$0xf]
        %v2284 = vld [vmem:[#allocation2 + $0x1c8] sm:$0xf]
        %v2285 = vld [vmem:[#allocation2 + $0x1cc] sm:$0xf]
        %v2286 = vld [vmem:[#allocation2 + $0x1d0] sm:$0xf]
        %v2287 = vld [vmem:[#allocation2 + $0x1d4] sm:$0xf]
        %v2288 = vld [vmem:[#allocation2 + $0x1d8] sm:$0xf]
        %v2289 = vld [vmem:[#allocation2 + $0x1dc] sm:$0xf]
        %v2290 = vld [vmem:[#allocation2 + $0x1e0] sm:$0xf]
        %v2291 = vld [vmem:[#allocation2 + $0x1e4] sm:$0xf]
        %v2292 = vld [vmem:[#allocation2 + $0x1e8] sm:$0xf]
        %v2293 = vld [vmem:[#allocation2 + $0x1ec] sm:$0xf]
        %v2294 = vld [vmem:[#allocation2 + $0x1f0] sm:$0xf]
        %v2295 = vld [vmem:[#allocation2 + $0x1f4] sm:$0xf]
        %v2296 = vld [vmem:[#allocation2 + $0x1f8] sm:$0xf]
        %v2297 = vld [vmem:[#allocation2 + $0x1fc] sm:$0xf]
        %v2298 = vld [vmem:[#allocation2 + $0x200] sm:$0xf]
        %v2299 = vld [vmem:[#allocation2 + $0x204] sm:$0xf]
        %v2300 = vld [vmem:[#allocation2 + $0x208] sm:$0xf]
        %v2301 = vld [vmem:[#allocation2 + $0x20c] sm:$0xf]
        %v2302 = vld [vmem:[#allocation2 + $0x210] sm:$0xf]
        %v2303 = vld [vmem:[#allocation2 + $0x214] sm:$0xf]
        %v2304 = vld [vmem:[#allocation2 + $0x218] sm:$0xf]
        %v2305 = vld [vmem:[#allocation2 + $0x21c] sm:$0xf]
        %v2306 = vld [vmem:[#allocation2 + $0x220] sm:$0xf]
        %v2307 = vld [vmem:[#allocation2 + $0x224] sm:$0xf]
        %v2308 = vld [vmem:[#allocation2 + $0x228] sm:$0xf]
        %v2309 = vld [vmem:[#allocation2 + $0x22c] sm:$0xf]
        %v2310 = vld [vmem:[#allocation2 + $0x230] sm:$0xf]
        %v2311 = vld [vmem:[#allocation2 + $0x234] sm:$0xf]
        %v2312 = vld [vmem:[#allocation2 + $0x238] sm:$0xf]
        %v2313 = vld [vmem:[#allocation2 + $0x23c] sm:$0xf]
        %v2314 = vunpack.c.l.bf16 %v264
        %v2315 = vunpack.c.l.bf16 %v265
        %v2316 = vunpack.c.l.bf16 %v266
        %v2317 = vunpack.c.l.bf16 %v267
        %v2318 = vunpack.c.l.bf16 %v268
        %v2319 = vunpack.c.l.bf16 %v269
        %v2320 = vunpack.c.l.bf16 %v270
        %v2321 = vunpack.c.l.bf16 %v271
        %v2322 = vunpack.c.l.bf16 %v272
        %v2323 = vunpack.c.l.bf16 %v273
        %v2324 = vunpack.c.l.bf16 %v274
        %v2325 = vunpack.c.l.bf16 %v275
        %v2326 = vunpack.c.l.bf16 %v276
        %v2327 = vunpack.c.l.bf16 %v277
        %v2328 = vunpack.c.l.bf16 %v278
        %v2329 = vunpack.c.l.bf16 %v279
        %v2330 = vunpack.c.l.bf16 %v280
        %v2331 = vunpack.c.l.bf16 %v281
        %v2332 = vunpack.c.l.bf16 %v282
        %v2333 = vunpack.c.l.bf16 %v283
        %v2334 = vunpack.c.l.bf16 %v284
        %v2335 = vunpack.c.l.bf16 %v285
        %v2336 = vunpack.c.l.bf16 %v286
        %v2337 = vunpack.c.l.bf16 %v287
        %vm2362 = vcmask 1046528
        %v2363 = vrot.slane %v2314, 1
        %v2364 = vrot.slane %v2315, 1
        %v2365 = vsel %vm2362, %v2363, %v2364
        %v2366 = vrot.slane %v2316, 1
        %v2367 = vsel %vm2362, %v2364, %v2366
        %v2368 = vrot.slane %v2317, 1
        %v2369 = vrot.slane %v2318, 1
        %v2370 = vsel %vm2362, %v2368, %v2369
        %v2371 = vrot.slane %v2319, 1
        %v2372 = vsel %vm2362, %v2369, %v2371
        %v2373 = vrot.slane %v2320, 1
        %v2374 = vrot.slane %v2321, 1
        %v2375 = vsel %vm2362, %v2373, %v2374
        %v2376 = vrot.slane %v2322, 1
        %v2377 = vsel %vm2362, %v2374, %v2376
        %v2378 = vrot.slane %v2323, 1
        %v2379 = vrot.slane %v2324, 1
        %v2380 = vsel %vm2362, %v2378, %v2379
        %v2381 = vrot.slane %v2325, 1
        %v2382 = vsel %vm2362, %v2379, %v2381
        %v2383 = vrot.slane %v2326, 1
        %v2384 = vrot.slane %v2327, 1
        %v2385 = vsel %vm2362, %v2383, %v2384
        %v2386 = vrot.slane %v2328, 1
        %v2387 = vsel %vm2362, %v2384, %v2386
        %v2388 = vrot.slane %v2329, 1
        %v2389 = vrot.slane %v2330, 1
        %v2390 = vsel %vm2362, %v2388, %v2389
        %v2391 = vrot.slane %v2331, 1
        %v2392 = vsel %vm2362, %v2389, %v2391
        %v2393 = vrot.slane %v2332, 1
        %v2394 = vrot.slane %v2333, 1
        %v2395 = vsel %vm2362, %v2393, %v2394
        %v2396 = vrot.slane %v2334, 1
        %v2397 = vsel %vm2362, %v2394, %v2396
        %v2398 = vrot.slane %v2335, 1
        %v2399 = vrot.slane %v2336, 1
        %v2400 = vsel %vm2362, %v2398, %v2399
        %v2401 = vrot.slane %v2337, 1
        %v2402 = vsel %vm2362, %v2399, %v2401
        %v2419 = vld [vmem:[%s4] sm:$0x1]
        %v2421 = vlaneseq
        %v2422 = vshrl.u32 %v2421, 7
        %v2423 = vsub.s32 0, %v2422
        %v2424 = vrot.slane %v2419, %v2423
        %v2570 = vunpack.c.l.b16 %v2170
        %v2571 = vunpack.c.l.b16 %v2171
        %v2572 = vunpack.c.l.b16 %v2172
        %v2573 = vunpack.c.l.b16 %v2173
        %v2574 = vunpack.c.l.b16 %v2174
        %v2575 = vunpack.c.l.b16 %v2175
        %v2576 = vunpack.c.l.b16 %v2176
        %v2577 = vunpack.c.l.b16 %v2177
        %v2578 = vunpack.c.l.b16 %v2178
        %v2579 = vunpack.c.l.b16 %v2179
        %v2580 = vunpack.c.l.b16 %v2180
        %v2581 = vunpack.c.l.b16 %v2181
        %v2582 = vunpack.c.l.b16 %v2182
        %v2583 = vunpack.c.l.b16 %v2183
        %v2584 = vunpack.c.l.b16 %v2184
        %v2585 = vunpack.c.l.b16 %v2185
        %v2586 = vunpack.c.l.b16 %v2186
        %v2587 = vunpack.c.l.b16 %v2187
        %v2588 = vunpack.c.l.b16 %v2188
        %v2589 = vunpack.c.l.b16 %v2189
        %v2590 = vunpack.c.l.b16 %v2190
        %v2591 = vunpack.c.l.b16 %v2191
        %v2592 = vunpack.c.l.b16 %v2192
        %v2593 = vunpack.c.l.b16 %v2193
        %v2594 = vunpack.c.l.b16 %v2194
        %v2595 = vunpack.c.l.b16 %v2195
        %v2596 = vunpack.c.l.b16 %v2196
        %v2597 = vunpack.c.l.b16 %v2197
        %v2598 = vunpack.c.l.b16 %v2198
        %v2599 = vunpack.c.l.b16 %v2199
        %v2600 = vunpack.c.l.b16 %v2200
        %v2601 = vunpack.c.l.b16 %v2201
        %v2602 = vunpack.c.l.b16 %v2202
        %v2603 = vunpack.c.l.b16 %v2203
        %v2604 = vunpack.c.l.b16 %v2204
        %v2605 = vunpack.c.l.b16 %v2205
        %v2606 = vunpack.c.l.b16 %v2206
        %v2607 = vunpack.c.l.b16 %v2207
        %v2608 = vunpack.c.l.b16 %v2208
        %v2609 = vunpack.c.l.b16 %v2209
        %v2610 = vunpack.c.l.b16 %v2210
        %v2611 = vunpack.c.l.b16 %v2211
        %v2612 = vunpack.c.l.b16 %v2212
        %v2613 = vunpack.c.l.b16 %v2213
        %v2614 = vunpack.c.l.b16 %v2214
        %v2615 = vunpack.c.l.b16 %v2215
        %v2616 = vunpack.c.l.b16 %v2216
        %v2617 = vunpack.c.l.b16 %v2217
        %v2618 = vunpack.c.l.b16 %v2218
        %v2619 = vunpack.c.l.b16 %v2219
        %v2620 = vunpack.c.l.b16 %v2220
        %v2621 = vunpack.c.l.b16 %v2221
        %v2622 = vunpack.c.l.b16 %v2222
        %v2623 = vunpack.c.l.b16 %v2223
        %v2624 = vunpack.c.l.b16 %v2224
        %v2625 = vunpack.c.l.b16 %v2225
        %v2626 = vunpack.c.l.b16 %v2226
        %v2627 = vunpack.c.l.b16 %v2227
        %v2628 = vunpack.c.l.b16 %v2228
        %v2629 = vunpack.c.l.b16 %v2229
        %v2630 = vunpack.c.l.b16 %v2230
        %v2631 = vunpack.c.l.b16 %v2231
        %v2632 = vunpack.c.l.b16 %v2232
        %v2633 = vunpack.c.l.b16 %v2233
        %v2634 = vunpack.c.l.b16 %v2234
        %v2635 = vunpack.c.l.b16 %v2235
        %v2636 = vunpack.c.l.b16 %v2236
        %v2637 = vunpack.c.l.b16 %v2237
        %v2638 = vunpack.c.l.b16 %v2238
        %v2639 = vunpack.c.l.b16 %v2239
        %v2640 = vunpack.c.l.b16 %v2240
        %v2641 = vunpack.c.l.b16 %v2241
        %v2642 = vunpack.c.l.b16 %v2242
        %v2643 = vunpack.c.l.b16 %v2243
        %v2644 = vunpack.c.l.b16 %v2244
        %v2645 = vunpack.c.l.b16 %v2245
        %v2646 = vunpack.c.l.b16 %v2246
        %v2647 = vunpack.c.l.b16 %v2247
        %v2648 = vunpack.c.l.b16 %v2248
        %v2649 = vunpack.c.l.b16 %v2249
        %v2650 = vunpack.c.l.b16 %v2250
        %v2651 = vunpack.c.l.b16 %v2251
        %v2652 = vunpack.c.l.b16 %v2252
        %v2653 = vunpack.c.l.b16 %v2253
        %v2654 = vunpack.c.l.b16 %v2254
        %v2655 = vunpack.c.l.b16 %v2255
        %v2656 = vunpack.c.l.b16 %v2256
        %v2657 = vunpack.c.l.b16 %v2257
        %v2658 = vunpack.c.l.b16 %v2258
        %v2659 = vunpack.c.l.b16 %v2259
        %v2660 = vunpack.c.l.b16 %v2260
        %v2661 = vunpack.c.l.b16 %v2261
        %v2662 = vunpack.c.l.b16 %v2262
        %v2663 = vunpack.c.l.b16 %v2263
        %v2664 = vunpack.c.l.b16 %v2264
        %v2665 = vunpack.c.l.b16 %v2265
        %v2666 = vunpack.c.l.b16 %v2266
        %v2667 = vunpack.c.l.b16 %v2267
        %v2668 = vunpack.c.l.b16 %v2268
        %v2669 = vunpack.c.l.b16 %v2269
        %v2670 = vunpack.c.l.b16 %v2270
        %v2671 = vunpack.c.l.b16 %v2271
        %v2672 = vunpack.c.l.b16 %v2272
        %v2673 = vunpack.c.l.b16 %v2273
        %v2674 = vunpack.c.l.b16 %v2274
        %v2675 = vunpack.c.l.b16 %v2275
        %v2676 = vunpack.c.l.b16 %v2276
        %v2677 = vunpack.c.l.b16 %v2277
        %v2678 = vunpack.c.l.b16 %v2278
        %v2679 = vunpack.c.l.b16 %v2279
        %v2680 = vunpack.c.l.b16 %v2280
        %v2681 = vunpack.c.l.b16 %v2281
        %v2682 = vunpack.c.l.b16 %v2282
        %v2683 = vunpack.c.l.b16 %v2283
        %v2684 = vunpack.c.l.b16 %v2284
        %v2685 = vunpack.c.l.b16 %v2285
        %v2686 = vunpack.c.l.b16 %v2286
        %v2687 = vunpack.c.l.b16 %v2287
        %v2688 = vunpack.c.l.b16 %v2288
        %v2689 = vunpack.c.l.b16 %v2289
        %v2690 = vunpack.c.l.b16 %v2290
        %v2691 = vunpack.c.l.b16 %v2291
        %v2692 = vunpack.c.l.b16 %v2292
        %v2693 = vunpack.c.l.b16 %v2293
        %v2694 = vunpack.c.l.b16 %v2294
        %v2695 = vunpack.c.l.b16 %v2295
        %v2696 = vunpack.c.l.b16 %v2296
        %v2697 = vunpack.c.l.b16 %v2297
        %v2698 = vunpack.c.l.b16 %v2298
        %v2699 = vunpack.c.l.b16 %v2299
        %v2700 = vunpack.c.l.b16 %v2300
        %v2701 = vunpack.c.l.b16 %v2301
        %v2702 = vunpack.c.l.b16 %v2302
        %v2703 = vunpack.c.l.b16 %v2303
        %v2704 = vunpack.c.l.b16 %v2304
        %v2705 = vunpack.c.l.b16 %v2305
        %v2706 = vunpack.c.l.b16 %v2306
        %v2707 = vunpack.c.l.b16 %v2307
        %v2708 = vunpack.c.l.b16 %v2308
        %v2709 = vunpack.c.l.b16 %v2309
        %v2710 = vunpack.c.l.b16 %v2310
        %v2711 = vunpack.c.l.b16 %v2311
        %v2712 = vunpack.c.l.b16 %v2312
        %v2713 = vunpack.c.l.b16 %v2313
        %v2714 = vpack.c.b16 %v2571, %v2570
        %v2715 = vpack.c.b16 %v2573, %v2572
        %v2716 = vpack.c.b16 %v2575, %v2574
        %v2717 = vpack.c.b16 %v2577, %v2576
        %v2718 = vpack.c.b16 %v2579, %v2578
        %v2719 = vpack.c.b16 %v2581, %v2580
        %v2720 = vpack.c.b16 %v2583, %v2582
        %v2721 = vpack.c.b16 %v2585, %v2584
        %v2722 = vpack.c.b16 %v2587, %v2586
        %v2723 = vpack.c.b16 %v2589, %v2588
        %v2724 = vpack.c.b16 %v2591, %v2590
        %v2725 = vpack.c.b16 %v2593, %v2592
        %v2726 = vpack.c.b16 %v2595, %v2594
        %v2727 = vpack.c.b16 %v2597, %v2596
        %v2728 = vpack.c.b16 %v2599, %v2598
        %v2729 = vpack.c.b16 %v2601, %v2600
        %v2730 = vpack.c.b16 %v2603, %v2602
        %v2731 = vpack.c.b16 %v2605, %v2604
        %v2732 = vpack.c.b16 %v2607, %v2606
        %v2733 = vpack.c.b16 %v2609, %v2608
        %v2734 = vpack.c.b16 %v2611, %v2610
        %v2735 = vpack.c.b16 %v2613, %v2612
        %v2736 = vpack.c.b16 %v2615, %v2614
        %v2737 = vpack.c.b16 %v2617, %v2616
        %v2738 = vpack.c.b16 %v2619, %v2618
        %v2739 = vpack.c.b16 %v2621, %v2620
        %v2740 = vpack.c.b16 %v2623, %v2622
        %v2741 = vpack.c.b16 %v2625, %v2624
        %v2742 = vpack.c.b16 %v2627, %v2626
        %v2743 = vpack.c.b16 %v2629, %v2628
        %v2744 = vpack.c.b16 %v2631, %v2630
        %v2745 = vpack.c.b16 %v2633, %v2632
        %v2746 = vpack.c.b16 %v2635, %v2634
        %v2747 = vpack.c.b16 %v2637, %v2636
        %v2748 = vpack.c.b16 %v2639, %v2638
        %v2749 = vpack.c.b16 %v2641, %v2640
        %v2750 = vpack.c.b16 %v2643, %v2642
        %v2751 = vpack.c.b16 %v2645, %v2644
        %v2752 = vpack.c.b16 %v2647, %v2646
        %v2753 = vpack.c.b16 %v2649, %v2648
        %v2754 = vpack.c.b16 %v2651, %v2650
        %v2755 = vpack.c.b16 %v2653, %v2652
        %v2756 = vpack.c.b16 %v2655, %v2654
        %v2757 = vpack.c.b16 %v2657, %v2656
        %v2758 = vpack.c.b16 %v2659, %v2658
        %v2759 = vpack.c.b16 %v2661, %v2660
        %v2760 = vpack.c.b16 %v2663, %v2662
        %v2761 = vpack.c.b16 %v2665, %v2664
        %v2762 = vpack.c.b16 %v2667, %v2666
        %v2763 = vpack.c.b16 %v2669, %v2668
        %v2764 = vpack.c.b16 %v2671, %v2670
        %v2765 = vpack.c.b16 %v2673, %v2672
        %v2766 = vpack.c.b16 %v2675, %v2674
        %v2767 = vpack.c.b16 %v2677, %v2676
        %v2768 = vpack.c.b16 %v2679, %v2678
        %v2769 = vpack.c.b16 %v2681, %v2680
        %v2770 = vpack.c.b16 %v2683, %v2682
        %v2771 = vpack.c.b16 %v2685, %v2684
        %v2772 = vpack.c.b16 %v2687, %v2686
        %v2773 = vpack.c.b16 %v2689, %v2688
        %v2774 = vpack.c.b16 %v2691, %v2690
        %v2775 = vpack.c.b16 %v2693, %v2692
        %v2776 = vpack.c.b16 %v2695, %v2694
        %v2777 = vpack.c.b16 %v2697, %v2696
        %v2778 = vpack.c.b16 %v2699, %v2698
        %v2779 = vpack.c.b16 %v2701, %v2700
        %v2780 = vpack.c.b16 %v2703, %v2702
        %v2781 = vpack.c.b16 %v2705, %v2704
        %v2782 = vpack.c.b16 %v2707, %v2706
        %v2783 = vpack.c.b16 %v2709, %v2708
        %v2784 = vpack.c.b16 %v2711, %v2710
        %v2785 = vpack.c.b16 %v2713, %v2712
        %2858 = vmatprep.subr.bf16.mxu0 0
        %2859 = vmatpush1.bf16.msra.mxu0 %v2714
        %2860 = vmatprep.subr.bf16.mxu0 0
        %2861 = vmatpush1.bf16.msra.mxu0 %v2715
        %2862 = vmatprep.subr.bf16.mxu0 0
        %2863 = vmatpush1.bf16.msra.mxu0 %v2716
        %2864 = vmatprep.subr.bf16.mxu0 0
        %2865 = vmatpush1.bf16.msra.mxu0 %v2717
        %2866 = vmatprep.subr.bf16.mxu0 0
        %2867 = vmatpush1.bf16.msra.mxu0 %v2718
        %2868 = vmatprep.subr.bf16.mxu0 0
        %2869 = vmatpush1.bf16.msra.mxu0 %v2719
        %2870 = vmatprep.subr.bf16.mxu0 0
        %2871 = vmatpush1.bf16.msra.mxu0 %v2720
        %2872 = vmatprep.subr.bf16.mxu0 0
        %2873 = vmatpush1.bf16.msra.mxu0 %v2721
        %2874 = vmatprep.subr.bf16.mxu0 0
        %2875 = vmatpush1.bf16.msra.mxu0 %v2722
        %2876 = vmatprep.subr.bf16.mxu0 0
        %2877 = vmatpush1.bf16.msra.mxu0 %v2723
        %2878 = vmatprep.subr.bf16.mxu0 0
        %2879 = vmatpush1.bf16.msra.mxu0 %v2724
        %2880 = vmatprep.subr.bf16.mxu0 0
        %2881 = vmatpush1.bf16.msra.mxu0 %v2725
        %2882 = vmatprep.subr.bf16.mxu0 0
        %2883 = vmatpush1.bf16.msra.mxu0 %v2726
        %2884 = vmatprep.subr.bf16.mxu0 0
        %2885 = vmatpush1.bf16.msra.mxu0 %v2727
        %2886 = vmatprep.subr.bf16.mxu0 0
        %2887 = vmatpush1.bf16.msra.mxu0 %v2728
        %2888 = vmatprep.subr.bf16.mxu0 0
        %2889 = vmatpush1.bf16.msra.mxu0 %v2729
        %2890 = vmatprep.mubr.bf16.mxu0 %v1991
        %2891 = vmatmul.mubr.bf16.gmra.mrb[0].mxu0 %v1960
        %v2892 = vpop.f32.mrb[0].mxu0
        %v2893 = vadd.f32 %v2424, %v2892
        %v2894 = vpop.f32.mrb[0].mxu0
        %v2895 = vpop.f32.mrb[0].mxu0
        %v2896 = vadd.f32 %v2424, %v2895
        %v2897 = vpop.f32.mrb[0].mxu0
        %2898 = vmatprep.mubr.bf16.mxu0 %v2003
        %2899 = vmatmul.mubr.bf16.gmra.mrb[0].mxu0 %v1961
        %v2900 = vpop.f32.mrb[0].mxu0
        %v2901 = vadd.f32 %v2424, %v2900
        %v2902 = vpop.f32.mrb[0].mxu0
        %v2903 = vpop.f32.mrb[0].mxu0
        %v2904 = vadd.f32 %v2424, %v2903
        %v2905 = vpop.f32.mrb[0].mxu0
        %2906 = vmatprep.mubr.bf16.mxu0 %v2015
        %2907 = vmatmul.mubr.bf16.gmra.mrb[0].mxu0 %v1962
        %v2908 = vpop.f32.mrb[0].mxu0
        %v2909 = vadd.f32 %v2424, %v2908
        %v2910 = vpop.f32.mrb[0].mxu0
        %v2911 = vpop.f32.mrb[0].mxu0
        %v2912 = vadd.f32 %v2424, %v2911
        %v2913 = vpop.f32.mrb[0].mxu0
        %2914 = vmatprep.mubr.bf16.mxu0 %v2027
        %2915 = vmatmul.mubr.bf16.gmra.mrb[0].mxu0 %v1963
        %v2916 = vpop.f32.mrb[0].mxu0
        %v2917 = vadd.f32 %v2424, %v2916
        %v2918 = vpop.f32.mrb[0].mxu0
        %v2919 = vpop.f32.mrb[0].mxu0
        %v2920 = vadd.f32 %v2424, %v2919
        %v2921 = vpop.f32.mrb[0].mxu0
        %2922 = vmatprep.mubr.bf16.mxu0 %v2039
        %2923 = vmatmul.mubr.bf16.gmra.mrb[0].mxu0 %v1964
        %v2924 = vpop.f32.mrb[0].mxu0
        %v2925 = vadd.f32 %v2424, %v2924
        %v2926 = vpop.f32.mrb[0].mxu0
        %v2927 = vpop.f32.mrb[0].mxu0
        %v2928 = vadd.f32 %v2424, %v2927
        %v2929 = vpop.f32.mrb[0].mxu0
        %2930 = vmatprep.mubr.bf16.mxu0 %v2051
        %2931 = vmatmul.mubr.bf16.gmra.mrb[0].mxu0 %v1965
        %v2932 = vpop.f32.mrb[0].mxu0
        %v2933 = vadd.f32 %v2424, %v2932
        %v2934 = vpop.f32.mrb[0].mxu0
        %v2935 = vpop.f32.mrb[0].mxu0
        %v2936 = vadd.f32 %v2424, %v2935
        %v2937 = vpop.f32.mrb[0].mxu0
        %2938 = vmatprep.mubr.bf16.mxu0 %v2063
        %2939 = vmatmul.mubr.bf16.gmra.mrb[0].mxu0 %v1966
        %v2940 = vpop.f32.mrb[0].mxu0
        %v2941 = vadd.f32 %v2424, %v2940
        %v2942 = vpop.f32.mrb[0].mxu0
        %v2943 = vpop.f32.mrb[0].mxu0
        %v2944 = vadd.f32 %v2424, %v2943
        %v2945 = vpop.f32.mrb[0].mxu0
        %2946 = vmatprep.mubr.bf16.mxu0 %v2075
        %2947 = vmatmul.mubr.bf16.gmra.mrb[0].mxu0 %v1967
        %v2948 = vpop.f32.mrb[0].mxu0
        %v2949 = vadd.f32 %v2424, %v2948
        %v2950 = vpop.f32.mrb[0].mxu0
        %v2951 = vpop.f32.mrb[0].mxu0
        %v2952 = vadd.f32 %v2424, %v2951
        %v2953 = vpop.f32.mrb[0].mxu0
        %2954 = vdwg.mxu0
        %2955 = vmatprep.subr.bf16.mxu0 0
        %2956 = vmatpush1.bf16.msra.mxu0 %v2730
        %2957 = vmatprep.subr.bf16.mxu0 0
        %2958 = vmatpush1.bf16.msra.mxu0 %v2731
        %2959 = vmatprep.subr.bf16.mxu0 0
        %2960 = vmatpush1.bf16.msra.mxu0 %v2732
        %2961 = vmatprep.subr.bf16.mxu0 0
        %2962 = vmatpush1.bf16.msra.mxu0 %v2733
        %2963 = vmatprep.subr.bf16.mxu0 0
        %2964 = vmatpush1.bf16.msra.mxu0 %v2734
        %2965 = vmatprep.subr.bf16.mxu0 0
        %2966 = vmatpush1.bf16.msra.mxu0 %v2735
        %2967 = vmatprep.subr.bf16.mxu0 0
        %2968 = vmatpush1.bf16.msra.mxu0 %v2736
        %2969 = vmatprep.subr.bf16.mxu0 0
        %2970 = vmatpush1.bf16.msra.mxu0 %v2737
        %2971 = vmatprep.subr.bf16.mxu0 0
        %2972 = vmatpush1.bf16.msra.mxu0 %v2738
        %2973 = vmatprep.subr.bf16.mxu0 0
        %2974 = vmatpush1.bf16.msra.mxu0 %v2739
        %2975 = vmatprep.subr.bf16.mxu0 0
        %2976 = vmatpush1.bf16.msra.mxu0 %v2740
        %2977 = vmatprep.subr.bf16.mxu0 0
        %2978 = vmatpush1.bf16.msra.mxu0 %v2741
        %2979 = vmatprep.subr.bf16.mxu0 0
        %2980 = vmatpush1.bf16.msra.mxu0 %v2742
        %2981 = vmatprep.subr.bf16.mxu0 0
        %2982 = vmatpush1.bf16.msra.mxu0 %v2743
        %2983 = vmatprep.subr.bf16.mxu0 0
        %2984 = vmatpush1.bf16.msra.mxu0 %v2744
        %2985 = vmatprep.subr.bf16.mxu0 0
        %2986 = vmatpush1.bf16.msra.mxu0 %v2745
        %2987 = vmatprep.mubr.bf16.mxu0 %v1961
        %2988 = vmatmul.mubr.bf16.gmra.mrb[0].mxu0 %v2102
        %v2989 = vpop.f32.mrb[0].mxu0
        %v2990 = vadd.f32 %v2893, %v2989
        %v2991 = vpop.f32.mrb[0].mxu0
        %v2992 = vpop.f32.mrb[0].mxu0
        %v2993 = vadd.f32 %v2896, %v2992
        %v2994 = vpop.f32.mrb[0].mxu0
        %2995 = vmatprep.mubr.bf16.mxu0 %v1962
        %2996 = vmatmul.mubr.bf16.gmra.mrb[0].mxu0 %v2105
        %v2997 = vpop.f32.mrb[0].mxu0
        %v2998 = vadd.f32 %v2901, %v2997
        %v2999 = vpop.f32.mrb[0].mxu0
        %v3000 = vpop.f32.mrb[0].mxu0
        %v3001 = vadd.f32 %v2904, %v3000
        %v3002 = vpop.f32.mrb[0].mxu0
        %3003 = vmatprep.mubr.bf16.mxu0 %v1963
        %3004 = vmatmul.mubr.bf16.gmra.mrb[0].mxu0 %v2108
        %v3005 = vpop.f32.mrb[0].mxu0
        %v3006 = vadd.f32 %v2909, %v3005
        %v3007 = vpop.f32.mrb[0].mxu0
        %v3008 = vpop.f32.mrb[0].mxu0
        %v3009 = vadd.f32 %v2912, %v3008
        %v3010 = vpop.f32.mrb[0].mxu0
        %3011 = vmatprep.mubr.bf16.mxu0 %v1964
        %3012 = vmatmul.mubr.bf16.gmra.mrb[0].mxu0 %v2111
        %v3013 = vpop.f32.mrb[0].mxu0
        %v3014 = vadd.f32 %v2917, %v3013
        %v3015 = vpop.f32.mrb[0].mxu0
        %v3016 = vpop.f32.mrb[0].mxu0
        %v3017 = vadd.f32 %v2920, %v3016
        %v3018 = vpop.f32.mrb[0].mxu0
        %3019 = vmatprep.mubr.bf16.mxu0 %v1965
        %3020 = vmatmul.mubr.bf16.gmra.mrb[0].mxu0 %v2114
        %v3021 = vpop.f32.mrb[0].mxu0
        %v3022 = vadd.f32 %v2925, %v3021
        %v3023 = vpop.f32.mrb[0].mxu0
        %v3024 = vpop.f32.mrb[0].mxu0
        %v3025 = vadd.f32 %v2928, %v3024
        %v3026 = vpop.f32.mrb[0].mxu0
        %3027 = vmatprep.mubr.bf16.mxu0 %v1966
        %3028 = vmatmul.mubr.bf16.gmra.mrb[0].mxu0 %v2117
        %v3029 = vpop.f32.mrb[0].mxu0
        %v3030 = vadd.f32 %v2933, %v3029
        %v3031 = vpop.f32.mrb[0].mxu0
        %v3032 = vpop.f32.mrb[0].mxu0
        %v3033 = vadd.f32 %v2936, %v3032
        %v3034 = vpop.f32.mrb[0].mxu0
        %3035 = vmatprep.mubr.bf16.mxu0 %v1967
        %3036 = vmatmul.mubr.bf16.gmra.mrb[0].mxu0 %v2120
        %v3037 = vpop.f32.mrb[0].mxu0
        %v3038 = vadd.f32 %v2941, %v3037
        %v3039 = vpop.f32.mrb[0].mxu0
        %v3040 = vpop.f32.mrb[0].mxu0
        %v3041 = vadd.f32 %v2944, %v3040
        %v3042 = vpop.f32.mrb[0].mxu0
        %3043 = vmatprep.mubr.bf16.mxu0 %v1968
        %3044 = vmatmul.mubr.bf16.gmra.mrb[0].mxu0 %v2123
        %v3045 = vpop.f32.mrb[0].mxu0
        %v3046 = vadd.f32 %v2949, %v3045
        %v3047 = vpop.f32.mrb[0].mxu0
        %v3048 = vpop.f32.mrb[0].mxu0
        %v3049 = vadd.f32 %v2952, %v3048
        %v3050 = vpop.f32.mrb[0].mxu0
        %3051 = vdwg.mxu0
        %3052 = vmatprep.subr.bf16.mxu0 0
        %3053 = vmatpush1.bf16.msra.mxu0 %v2746
        %3054 = vmatprep.subr.bf16.mxu0 0
        %3055 = vmatpush1.bf16.msra.mxu0 %v2747
        %3056 = vmatprep.subr.bf16.mxu0 0
        %3057 = vmatpush1.bf16.msra.mxu0 %v2748
        %3058 = vmatprep.subr.bf16.mxu0 0
        %3059 = vmatpush1.bf16.msra.mxu0 %v2749
        %3060 = vmatprep.subr.bf16.mxu0 0
        %3061 = vmatpush1.bf16.msra.mxu0 %v2750
        %3062 = vmatprep.subr.bf16.mxu0 0
        %3063 = vmatpush1.bf16.msra.mxu0 %v2751
        %3064 = vmatprep.subr.bf16.mxu0 0
        %3065 = vmatpush1.bf16.msra.mxu0 %v2752
        %3066 = vmatprep.subr.bf16.mxu0 0
        %3067 = vmatpush1.bf16.msra.mxu0 %v2753
        %3068 = vmatprep.subr.bf16.mxu0 0
        %3069 = vmatpush1.bf16.msra.mxu0 %v2754
        %3070 = vmatprep.subr.bf16.mxu0 0
        %3071 = vmatpush1.bf16.msra.mxu0 %v2755
        %3072 = vmatprep.subr.bf16.mxu0 0
        %3073 = vmatpush1.bf16.msra.mxu0 %v2756
        %3074 = vmatprep.subr.bf16.mxu0 0
        %3075 = vmatpush1.bf16.msra.mxu0 %v2757
        %3076 = vmatprep.subr.bf16.mxu0 0
        %3077 = vmatpush1.bf16.msra.mxu0 %v2758
        %3078 = vmatprep.subr.bf16.mxu0 0
        %3079 = vmatpush1.bf16.msra.mxu0 %v2759
        %3080 = vmatprep.subr.bf16.mxu0 0
        %3081 = vmatpush1.bf16.msra.mxu0 %v2760
        %3082 = vmatprep.subr.bf16.mxu0 0
        %3083 = vmatpush1.bf16.msra.mxu0 %v2761
        %3084 = vmatprep.mubr.bf16.mxu0 %v2105
        %3085 = vmatmul.mubr.bf16.gmra.mrb[0].mxu0 %v2003
        %v3086 = vpop.f32.mrb[0].mxu0
        %v3087 = vadd.f32 %v2990, %v3086
        %v3088 = vpop.f32.mrb[0].mxu0
        %v3089 = vpop.f32.mrb[0].mxu0
        %v3090 = vadd.f32 %v2993, %v3089
        %v3091 = vpop.f32.mrb[0].mxu0
        %3092 = vmatprep.mubr.bf16.mxu0 %v2108
        %3093 = vmatmul.mubr.bf16.gmra.mrb[0].mxu0 %v2015
        %v3094 = vpop.f32.mrb[0].mxu0
        %v3095 = vadd.f32 %v2998, %v3094
        %v3096 = vpop.f32.mrb[0].mxu0
        %v3097 = vpop.f32.mrb[0].mxu0
        %v3098 = vadd.f32 %v3001, %v3097
        %v3099 = vpop.f32.mrb[0].mxu0
        %3100 = vmatprep.mubr.bf16.mxu0 %v2111
        %3101 = vmatmul.mubr.bf16.gmra.mrb[0].mxu0 %v2027
        %v3102 = vpop.f32.mrb[0].mxu0
        %v3103 = vadd.f32 %v3006, %v3102
        %v3104 = vpop.f32.mrb[0].mxu0
        %v3105 = vpop.f32.mrb[0].mxu0
        %v3106 = vadd.f32 %v3009, %v3105
        %v3107 = vpop.f32.mrb[0].mxu0
        %3108 = vmatprep.mubr.bf16.mxu0 %v2114
        %3109 = vmatmul.mubr.bf16.gmra.mrb[0].mxu0 %v2039
        %v3110 = vpop.f32.mrb[0].mxu0
        %v3111 = vadd.f32 %v3014, %v3110
        %v3112 = vpop.f32.mrb[0].mxu0
        %v3113 = vpop.f32.mrb[0].mxu0
        %v3114 = vadd.f32 %v3017, %v3113
        %v3115 = vpop.f32.mrb[0].mxu0
        %3116 = vmatprep.mubr.bf16.mxu0 %v2117
        %3117 = vmatmul.mubr.bf16.gmra.mrb[0].mxu0 %v2051
        %v3118 = vpop.f32.mrb[0].mxu0
        %v3119 = vadd.f32 %v3022, %v3118
        %v3120 = vpop.f32.mrb[0].mxu0
        %v3121 = vpop.f32.mrb[0].mxu0
        %v3122 = vadd.f32 %v3025, %v3121
        %v3123 = vpop.f32.mrb[0].mxu0
        %3124 = vmatprep.mubr.bf16.mxu0 %v2120
        %3125 = vmatmul.mubr.bf16.gmra.mrb[0].mxu0 %v2063
        %v3126 = vpop.f32.mrb[0].mxu0
        %v3127 = vadd.f32 %v3030, %v3126
        %v3128 = vpop.f32.mrb[0].mxu0
        %v3129 = vpop.f32.mrb[0].mxu0
        %v3130 = vadd.f32 %v3033, %v3129
        %v3131 = vpop.f32.mrb[0].mxu0
        %3132 = vmatprep.mubr.bf16.mxu0 %v2123
        %3133 = vmatmul.mubr.bf16.gmra.mrb[0].mxu0 %v2075
        %v3134 = vpop.f32.mrb[0].mxu0
        %v3135 = vadd.f32 %v3038, %v3134
        %v3136 = vpop.f32.mrb[0].mxu0
        %v3137 = vpop.f32.mrb[0].mxu0
        %v3138 = vadd.f32 %v3041, %v3137
        %v3139 = vpop.f32.mrb[0].mxu0
        %3140 = vmatprep.mubr.bf16.mxu0 %v2149
        %3141 = vmatmul.mubr.bf16.gmra.mrb[0].mxu0 %v2143
        %v3142 = vpop.f32.mrb[0].mxu0
        %v3143 = vadd.f32 %v3046, %v3142
        %v3144 = vpop.f32.mrb[0].mxu0
        %v3145 = vpop.f32.mrb[0].mxu0
        %v3146 = vadd.f32 %v3049, %v3145
        %v3147 = vpop.f32.mrb[0].mxu0
        %3148 = vdwg.mxu0
        %3149 = vmatprep.subr.bf16.mxu0 0
        %3150 = vmatpush1.bf16.msra.mxu0 %v2762
        %3151 = vmatprep.subr.bf16.mxu0 0
        %3152 = vmatpush1.bf16.msra.mxu0 %v2763
        %3153 = vmatprep.subr.bf16.mxu0 0
        %3154 = vmatpush1.bf16.msra.mxu0 %v2764
        %3155 = vmatprep.subr.bf16.mxu0 0
        %3156 = vmatpush1.bf16.msra.mxu0 %v2765
        %3157 = vmatprep.subr.bf16.mxu0 0
        %3158 = vmatpush1.bf16.msra.mxu0 %v2766
        %3159 = vmatprep.subr.bf16.mxu0 0
        %3160 = vmatpush1.bf16.msra.mxu0 %v2767
        %3161 = vmatprep.subr.bf16.mxu0 0
        %3162 = vmatpush1.bf16.msra.mxu0 %v2768
        %3163 = vmatprep.subr.bf16.mxu0 0
        %3164 = vmatpush1.bf16.msra.mxu0 %v2769
        %3165 = vmatprep.subr.bf16.mxu0 0
        %3166 = vmatpush1.bf16.msra.mxu0 %v2770
        %3167 = vmatprep.subr.bf16.mxu0 0
        %3168 = vmatpush1.bf16.msra.mxu0 %v2771
        %3169 = vmatprep.subr.bf16.mxu0 0
        %3170 = vmatpush1.bf16.msra.mxu0 %v2772
        %3171 = vmatprep.subr.bf16.mxu0 0
        %3172 = vmatpush1.bf16.msra.mxu0 %v2773
        %3173 = vmatprep.subr.bf16.mxu0 0
        %3174 = vmatpush1.bf16.msra.mxu0 %v2774
        %3175 = vmatprep.subr.bf16.mxu0 0
        %3176 = vmatpush1.bf16.msra.mxu0 %v2775
        %3177 = vmatprep.subr.bf16.mxu0 0
        %3178 = vmatpush1.bf16.msra.mxu0 %v2776
        %3179 = vmatprep.subr.bf16.mxu0 0
        %3180 = vmatpush1.bf16.msra.mxu0 %v2777
        %3181 = vmatprep.mubr.bf16.mxu0 %v2015
        %3182 = vmatmul.mubr.bf16.gmra.mrb[0].mxu0 %v1962
        %v3183 = vpop.f32.mrb[0].mxu0
        %v3184 = vadd.f32 %v3087, %v3183
        %v3185 = vpop.f32.mrb[0].mxu0
        %v3186 = vpop.f32.mrb[0].mxu0
        %v3187 = vadd.f32 %v3090, %v3186
        %v3188 = vpop.f32.mrb[0].mxu0
        %3189 = vmatprep.mubr.bf16.mxu0 %v2027
        %3190 = vmatmul.mubr.bf16.gmra.mrb[0].mxu0 %v1963
        %v3191 = vpop.f32.mrb[0].mxu0
        %v3192 = vadd.f32 %v3095, %v3191
        %v3193 = vpop.f32.mrb[0].mxu0
        %v3194 = vpop.f32.mrb[0].mxu0
        %v3195 = vadd.f32 %v3098, %v3194
        %v3196 = vpop.f32.mrb[0].mxu0
        %3197 = vmatprep.mubr.bf16.mxu0 %v2039
        %3198 = vmatmul.mubr.bf16.gmra.mrb[0].mxu0 %v1964
        %v3199 = vpop.f32.mrb[0].mxu0
        %v3200 = vadd.f32 %v3103, %v3199
        %v3201 = vpop.f32.mrb[0].mxu0
        %v3202 = vpop.f32.mrb[0].mxu0
        %v3203 = vadd.f32 %v3106, %v3202
        %v3204 = vpop.f32.mrb[0].mxu0
        %3205 = vmatprep.mubr.bf16.mxu0 %v2051
        %3206 = vmatmul.mubr.bf16.gmra.mrb[0].mxu0 %v1965
        %v3207 = vpop.f32.mrb[0].mxu0
        %v3208 = vadd.f32 %v3111, %v3207
        %v3209 = vpop.f32.mrb[0].mxu0
        %v3210 = vpop.f32.mrb[0].mxu0
        %v3211 = vadd.f32 %v3114, %v3210
        %v3212 = vpop.f32.mrb[0].mxu0
        %3213 = vmatprep.mubr.bf16.mxu0 %v2063
        %3214 = vmatmul.mubr.bf16.gmra.mrb[0].mxu0 %v1966
        %v3215 = vpop.f32.mrb[0].mxu0
        %v3216 = vadd.f32 %v3119, %v3215
        %v3217 = vpop.f32.mrb[0].mxu0
        %v3218 = vpop.f32.mrb[0].mxu0
        %v3219 = vadd.f32 %v3122, %v3218
        %v3220 = vpop.f32.mrb[0].mxu0
        %3221 = vmatprep.mubr.bf16.mxu0 %v2075
        %3222 = vmatmul.mubr.bf16.gmra.mrb[0].mxu0 %v1967
        %v3223 = vpop.f32.mrb[0].mxu0
        %v3224 = vadd.f32 %v3127, %v3223
        %v3225 = vpop.f32.mrb[0].mxu0
        %v3226 = vpop.f32.mrb[0].mxu0
        %v3227 = vadd.f32 %v3130, %v3226
        %v3228 = vpop.f32.mrb[0].mxu0
        %3229 = vmatprep.mubr.bf16.mxu0 %v2143
        %3230 = vmatmul.mubr.bf16.gmra.mrb[0].mxu0 %v1968
        %v3231 = vpop.f32.mrb[0].mxu0
        %v3232 = vadd.f32 %v3135, %v3231
        %v3233 = vpop.f32.mrb[0].mxu0
        %v3234 = vpop.f32.mrb[0].mxu0
        %v3235 = vadd.f32 %v3138, %v3234
        %v3236 = vpop.f32.mrb[0].mxu0
        %3237 = vmatprep.mubr.bf16.mxu0 %v2162
        %3238 = vmatmul.mubr.bf16.gmra.mrb[0].mxu0 %v1969
        %v3239 = vpop.f32.mrb[0].mxu0
        %v3240 = vadd.f32 %v3143, %v3239
        %v3241 = vpop.f32.mrb[0].mxu0
        %v3242 = vpop.f32.mrb[0].mxu0
        %v3243 = vadd.f32 %v3146, %v3242
        %v3244 = vpop.f32.mrb[0].mxu0
        %3245 = vdwg.mxu0
        %3246 = vmatprep.subr.bf16.mxu0 0
        %3247 = vmatpush1.bf16.msra.mxu0 %v2778
        %3248 = vmatprep.subr.bf16.mxu0 0
        %3249 = vmatpush1.bf16.msra.mxu0 %v2779
        %3250 = vmatprep.subr.bf16.mxu0 0
        %3251 = vmatpush1.bf16.msra.mxu0 %v2780
        %3252 = vmatprep.subr.bf16.mxu0 0
        %3253 = vmatpush1.bf16.msra.mxu0 %v2781
        %3254 = vmatprep.subr.bf16.mxu0 0
        %3255 = vmatpush1.bf16.msra.mxu0 %v2782
        %3256 = vmatprep.subr.bf16.mxu0 0
        %3257 = vmatpush1.bf16.msra.mxu0 %v2783
        %3258 = vmatprep.subr.bf16.mxu0 0
        %3259 = vmatpush1.bf16.msra.mxu0 %v2784
        %3260 = vmatprep.subr.bf16.mxu0 0
        %3261 = vmatpush1.bf16.msra.mxu0 %v2785
        %3262 = vmatprep.subr.bf16.mxu0 0
        %3263 = vmatpush1.bf16.msra.mxu0 0
        %3264 = vmatprep.subr.bf16.mxu0 0
        %3265 = vmatpush1.bf16.msra.mxu0 0
        %3266 = vmatprep.subr.bf16.mxu0 0
        %3267 = vmatpush1.bf16.msra.mxu0 0
        %3268 = vmatprep.subr.bf16.mxu0 0
        %3269 = vmatpush1.bf16.msra.mxu0 0
        %3270 = vmatprep.subr.bf16.mxu0 0
        %3271 = vmatpush1.bf16.msra.mxu0 0
        %3272 = vmatprep.subr.bf16.mxu0 0
        %3273 = vmatpush1.bf16.msra.mxu0 0
        %3274 = vmatprep.subr.bf16.mxu0 0
        %3275 = vmatpush1.bf16.msra.mxu0 0
        %3276 = vmatprep.subr.bf16.mxu0 0
        %3277 = vmatpush1.bf16.msra.mxu0 0
        %3278 = vmatprep.mubr.bf16.mxu0 0
        %3279 = vmatmul.mubr.bf16.gmra.mrb[0].mxu0 %v2108
        %v3280 = vpop.f32.mrb[0].mxu0
        %v3281 = vadd.f32 %v3184, %v3280
        %v3282 = vpop.f32.mrb[0].mxu0
        %v3283 = vpop.f32.mrb[0].mxu0
        %v3284 = vadd.f32 %v3187, %v3283
        %v3285 = vpop.f32.mrb[0].mxu0
        %3286 = vmatprep.mubr.bf16.mxu0 0
        %3287 = vmatmul.mubr.bf16.gmra.mrb[0].mxu0 %v2111
        %v3288 = vpop.f32.mrb[0].mxu0
        %v3289 = vadd.f32 %v3192, %v3288
        %v3290 = vpop.f32.mrb[0].mxu0
        %v3291 = vpop.f32.mrb[0].mxu0
        %v3292 = vadd.f32 %v3195, %v3291
        %v3293 = vpop.f32.mrb[0].mxu0
        %3294 = vmatprep.mubr.bf16.mxu0 0
        %3295 = vmatmul.mubr.bf16.gmra.mrb[0].mxu0 %v2114
        %v3296 = vpop.f32.mrb[0].mxu0
        %v3297 = vadd.f32 %v3200, %v3296
        %v3298 = vpop.f32.mrb[0].mxu0
        %v3299 = vpop.f32.mrb[0].mxu0
        %v3300 = vadd.f32 %v3203, %v3299
        %v3301 = vpop.f32.mrb[0].mxu0
        %3302 = vmatprep.mubr.bf16.mxu0 0
        %3303 = vmatmul.mubr.bf16.gmra.mrb[0].mxu0 %v2117
        %v3304 = vpop.f32.mrb[0].mxu0
        %v3305 = vadd.f32 %v3208, %v3304
        %v3306 = vpop.f32.mrb[0].mxu0
        %v3307 = vpop.f32.mrb[0].mxu0
        %v3308 = vadd.f32 %v3211, %v3307
        %v3309 = vpop.f32.mrb[0].mxu0
        %3310 = vmatprep.mubr.bf16.mxu0 0
        %3311 = vmatmul.mubr.bf16.gmra.mrb[0].mxu0 %v2120
        %v3312 = vpop.f32.mrb[0].mxu0
        %v3313 = vadd.f32 %v3216, %v3312
        %v3314 = vpop.f32.mrb[0].mxu0
        %v3315 = vpop.f32.mrb[0].mxu0
        %v3316 = vadd.f32 %v3219, %v3315
        %v3317 = vpop.f32.mrb[0].mxu0
        %3318 = vmatprep.mubr.bf16.mxu0 0
        %3319 = vmatmul.mubr.bf16.gmra.mrb[0].mxu0 %v2123
        %v3320 = vpop.f32.mrb[0].mxu0
        %v3321 = vadd.f32 %v3224, %v3320
        %v3322 = vpop.f32.mrb[0].mxu0
        %v3323 = vpop.f32.mrb[0].mxu0
        %v3324 = vadd.f32 %v3227, %v3323
        %v3325 = vpop.f32.mrb[0].mxu0
        %3326 = vmatprep.mubr.bf16.mxu0 0
        %3327 = vmatmul.mubr.bf16.gmra.mrb[0].mxu0 %v2149
        %v3328 = vpop.f32.mrb[0].mxu0
        %v3329 = vadd.f32 %v3232, %v3328
        %v3330 = vpop.f32.mrb[0].mxu0
        %v3331 = vpop.f32.mrb[0].mxu0
        %v3332 = vadd.f32 %v3235, %v3331
        %v3333 = vpop.f32.mrb[0].mxu0
        %3334 = vmatprep.mubr.bf16.mxu0 0
        %3335 = vmatmul.mubr.bf16.gmra.mrb[0].mxu0 %v2168
        %v3336 = vpop.f32.mrb[0].mxu0
        %v3337 = vadd.f32 %v3240, %v3336
        %v3338 = vpop.f32.mrb[0].mxu0
        %v3339 = vpop.f32.mrb[0].mxu0
        %v3340 = vadd.f32 %v3243, %v3339
        %v3341 = vpop.f32.mrb[0].mxu0
        %3342 = vdwg.mxu0
        %v3343 = vadd.f32 %v3281, %v2365
        %v3344 = vadd.f32 %v3284, %v2367
        %v3345 = vadd.f32 %v3289, %v2370
        %v3346 = vadd.f32 %v3292, %v2372
        %v3347 = vadd.f32 %v3297, %v2375
        %v3348 = vadd.f32 %v3300, %v2377
        %v3349 = vadd.f32 %v3305, %v2380
        %v3350 = vadd.f32 %v3308, %v2382
        %v3351 = vadd.f32 %v3313, %v2385
        %v3352 = vadd.f32 %v3316, %v2387
        %v3353 = vadd.f32 %v3321, %v2390
        %v3354 = vadd.f32 %v3324, %v2392
        %v3355 = vadd.f32 %v3329, %v2395
        %v3356 = vadd.f32 %v3332, %v2397
        %v3357 = vadd.f32 %v3337, %v2400
        %v3358 = vadd.f32 %v3340, %v2402
        %v3359 = vmax.f32 %v3343, 0.0
        %v3360 = vmax.f32 %v3344, 0.0
        %v3361 = vmax.f32 %v3345, 0.0
        %v3362 = vmax.f32 %v3346, 0.0
        %v3363 = vmax.f32 %v3347, 0.0
        %v3364 = vmax.f32 %v3348, 0.0
        %v3365 = vmax.f32 %v3349, 0.0
        %v3366 = vmax.f32 %v3350, 0.0
        %v3367 = vmax.f32 %v3351, 0.0
        %v3368 = vmax.f32 %v3352, 0.0
        %v3369 = vmax.f32 %v3353, 0.0
        %v3370 = vmax.f32 %v3354, 0.0
        %v3371 = vmax.f32 %v3355, 0.0
        %v3372 = vmax.f32 %v3356, 0.0
        %v3373 = vmax.f32 %v3357, 0.0
        %v3374 = vmax.f32 %v3358, 0.0
        %v3375 = vpack.c.bf16 %v3360, %v3359
        %v3376 = vpack.c.bf16 %v3362, %v3361
        %v3377 = vpack.c.bf16 %v3364, %v3363
        %v3378 = vpack.c.bf16 %v3366, %v3365
        %v3379 = vpack.c.bf16 %v3368, %v3367
        %v3380 = vpack.c.bf16 %v3370, %v3369
        %v3381 = vpack.c.bf16 %v3372, %v3371
        %v3382 = vpack.c.bf16 %v3374, %v3373
        %v3391 = vunpack.c.l.b16 %v3375
        %v3392 = vunpack.c.h.b16 %v3375
        %v3393 = vunpack.c.l.b16 %v3376
        %v3394 = vunpack.c.h.b16 %v3376
        %v3395 = vunpack.c.l.b16 %v3377
        %v3396 = vunpack.c.h.b16 %v3377
        %v3397 = vunpack.c.l.b16 %v3378
        %v3398 = vunpack.c.h.b16 %v3378
        %v3399 = vunpack.c.l.b16 %v3379
        %v3400 = vunpack.c.h.b16 %v3379
        %v3401 = vunpack.c.l.b16 %v3380
        %v3402 = vunpack.c.h.b16 %v3380
        %v3403 = vunpack.c.l.b16 %v3381
        %v3404 = vunpack.c.h.b16 %v3381
        %v3405 = vunpack.c.l.b16 %v3382
        %v3406 = vunpack.c.h.b16 %v3382
        %v3407 = vpack.c.b16 %v3391, %v3391
        %v3408 = vpack.c.b16 %v3392, %v3392
        %v3409 = vpack.c.b16 %v3393, %v3393
        %v3410 = vpack.c.b16 %v3394, %v3394
        %v3411 = vpack.c.b16 %v3395, %v3395
        %v3412 = vpack.c.b16 %v3396, %v3396
        %v3413 = vpack.c.b16 %v3397, %v3397
        %v3414 = vpack.c.b16 %v3398, %v3398
        %v3415 = vpack.c.b16 %v3399, %v3399
        %v3416 = vpack.c.b16 %v3400, %v3400
        %v3417 = vpack.c.b16 %v3401, %v3401
        %v3418 = vpack.c.b16 %v3402, %v3402
        %v3419 = vpack.c.b16 %v3403, %v3403
        %v3420 = vpack.c.b16 %v3404, %v3404
        %v3421 = vpack.c.b16 %v3405, %v3405
        %v3422 = vpack.c.b16 %v3406, %v3406
        %3439 = vst [vmem:[%s246] sm:$0xf] %v3407
        %3440 = vst [vmem:[%s246 + $0x4] sm:$0xf] %v3408
        %3441 = vst [vmem:[%s246 + $0x8] sm:$0xf] %v3409
        %3442 = vst [vmem:[%s246 + $0xc] sm:$0xf] %v3410
        %3443 = vst [vmem:[%s246 + $0x10] sm:$0xf] %v3411
        %3444 = vst [vmem:[%s246 + $0x14] sm:$0xf] %v3412
        %3445 = vst [vmem:[%s246 + $0x18] sm:$0xf] %v3413
        %3446 = vst [vmem:[%s246 + $0x1c] sm:$0xf] %v3414
        %3447 = vst [vmem:[%s246 + $0x20] sm:$0xf] %v3415
        %3448 = vst [vmem:[%s246 + $0x24] sm:$0xf] %v3416
        %3449 = vst [vmem:[%s246 + $0x28] sm:$0xf] %v3417
        %3450 = vst [vmem:[%s246 + $0x2c] sm:$0xf] %v3418
        %3451 = vst [vmem:[%s246 + $0x30] sm:$0xf] %v3419
        %3452 = vst [vmem:[%s246 + $0x34] sm:$0xf] %v3420
        %3453 = vst [vmem:[%s246 + $0x38] sm:$0xf] %v3421
        %3454 = vst [vmem:[%s246 + $0x3c] sm:$0xf] %v3422
        %s3455 = sand.u32 %s152, 1
        %s3456 = scalar_lea.sflag [#allocation4], %s3455
        %s3457 = sand.u32 %s152, 1
        %s3458 = smul.addr %s3457, 64
        %s3459 = scalar_lea.vmem [#allocation5], %s3458
        // Predicated region
        $region45: #{tpu_custom_call.1} parent=39 // pred_check
          %p3460 = pneg %p162
        $region46: #{tpu_custom_call.1} parent=39 // pred_check_branch
          %3462 = sbr.rel (%p3460) target = $region48
        $region47: #{tpu_custom_call.1} parent=39 // pred_region
          %s3463 = smul.u32 8, %s25
          %s3465 = ssub.s32 1024, 1024
          %3466 = vsyncadd %s3456, %s3465
          %s3467 = smul.addr %s3463, 2
          %s3468 = smul.addr %s24, 32
          %s3469 = sadd.s32 %s3467, %s3468
          %s3470 = smul.addr %s3469, 64
          %s3471 = scalar_lea.hbm %s5, %s3470
          %s3472 = sshll.u32 %s3459, 4
          %s3473 = int_to_ptr.vmem [resolvable:$true] %s3472
          %3478 = dma.vmem_to_hbm [thread:$0]  %s3473, 1024, %s3471, %s3456, 64, 64, 4
        $region48: #{tpu_custom_call.1} parent=39 // pred_fallthru
          _
      $region40: #{tpu_custom_call.1} parent=5 // pred_fallthru
        _
      %p3479 = scmp.le.s32.totalorder 2, %s15
      // Predicated region
      $region49: #{tpu_custom_call.1} parent=5 // pred_check
        %p3480 = pneg %p3479
      $region50: #{tpu_custom_call.1} parent=5 // pred_check_branch
        %3482 = sbr.rel (%p3480) target = $region52
      $region51: #{tpu_custom_call.1} parent=5 // pred_region
        %s3483 = ssub.s32 %s15, 2
        // Predicated region
        $region53: #{tpu_custom_call.1} parent=51 // pred_check
          %p3484 = pneg %p168
        $region54: #{tpu_custom_call.1} parent=51 // pred_check_branch
          %3486 = sbr.rel (%p3484) target = $region56
        $region55: #{tpu_custom_call.1} parent=51 // pred_region
          %s3487 = sand.u32 %s153, 1
          %s3488 = scalar_lea.sflag [#allocation4], %s3487
          %s3489 = sand.u32 %s153, 1
          %s3490 = smul.addr %s3489, 64
          %s3491 = scalar_lea.vmem [#allocation5], %s3490
          %3492 = dma.done %s3488, 1024
        $region56: #{tpu_custom_call.1} parent=51 // pred_fallthru
          _
      $region52: #{tpu_custom_call.1} parent=5 // pred_fallthru
        _
    $region6: #{tpu_custom_call.1} parent=1 // loop_footer
      %s19 = sadd.s32 1, %s15
    $region7: #{tpu_custom_call.1} parent=1 // loop_footer_branch
      %14 = sbr.rel target = $region3
    $region8: #{tpu_custom_call.1} parent=1 // loop_exit
      _
    %3493 = vsyncpa [#allocation3], 1
    %s3494 = scalar_lea.sflag [#allocation3], 1
    %3495 = vsyncpa %s3494, 1
    %3496 = vsyncpa [#allocation4], 1
    %s3497 = scalar_lea.sflag [#allocation4], 1
    %3498 = vsyncpa %s3497, 1

</llo_original>
